<compile_context>
chip_gen: v7x
topology: tpu7x:2x2x1
jax: 0.10.0
libtpu: 0.0.40
codegen_flags: <defaults>
</compile_context>

<pallas_src>
import jax
import jax.numpy as jnp
from jax.experimental import pallas as pl
from jax.experimental.pallas import tpu as pltpu

EPS = 1e-5
LANE = 128


def conv_stats_kernel(xt_ref, w_ref, y_ref, stats_ref):
    """One (batch, row-tile) grid step.

    xt_ref:    (th+2, W+2, Cin)    bf16  input row-tile with 1-row/col halo
    w_ref:     (9, Cin, Cout_pad)  bf16  3x3 taps, flattened as kh*3+kw
    y_ref:     (th, W, Cout_pad)   f32   conv output tile
    stats_ref: (2, Cout_pad)       f32   per-tile [sum ; sum-of-squares]
    """
    th, w, cpad = y_ref.shape
    cin = xt_ref.shape[-1]

    x = xt_ref[...]
    wt = w_ref[...]

    # Implicit im2col: 9 shifted matmuls accumulated in f32 on the MXU.
    acc = jnp.zeros((th * w, cpad), jnp.float32)
    for di in range(3):
        for dj in range(3):
            xs = x[di:di + th, dj:dj + w, :].reshape(th * w, cin)
            acc = acc + jnp.dot(xs, wt[di * 3 + dj],
                                preferred_element_type=jnp.float32)

    y_ref[...] = acc.reshape(th, w, cpad)

    # Streaming BN statistics: per-channel sum and sum of squares (f32).
    s = jnp.sum(acc, axis=0, keepdims=True)
    ss = jnp.sum(acc * acc, axis=0, keepdims=True)
    stats_ref[...] = jnp.concatenate([s, ss], axis=0)


def bn_relu_kernel(y_ref, scale_ref, shift_ref, o_ref):
    """Fused per-channel affine (folded BN) + ReLU over one conv-output tile."""
    y = y_ref[...]
    o_ref[...] = jnp.maximum(y * scale_ref[...] + shift_ref[...],
                             0.0).astype(o_ref.dtype)


def _row_tile(h, w, target_rows=1024):
    """Largest divisor of H such that th*W ~ target flattened rows per tile."""
    cap = max(1, target_rows // max(w, 1))
    th = 1
    for d in range(1, h + 1):
        if h % d == 0 and d <= cap:
            th = d
    return th


@jax.jit
def conv_batch_norm(x, conv_w, conv_b, bn_gamma, bn_beta):
    """x: (N, Cin, H, W) NCHW, conv_w: (Cout, Cin, 3, 3), others: (Cout,)."""
    n, c_in, h, w = x.shape
    c_out = conv_w.shape[0]
    c_pad = ((c_out + LANE - 1) // LANE) * LANE

    # Conv bias is a per-channel constant and is exactly cancelled by the
    # train-mode BN mean subtraction -> drop it (no extra DMA, no extra add).
    del conv_b

    th = _row_tile(h, w)
    num_r = h // th

    # ---- layout prep (one pass of XLA glue, fused under jit) ----------------
    x_nhwc = jnp.transpose(x, (0, 2, 3, 1))                       # NCHW -> NHWC
    x_pad = jnp.pad(x_nhwc, ((0, 0), (1, 1), (1, 1), (0, 0))).astype(jnp.bfloat16)
    # Row tiles with halo: (N, num_r, th+2, W+2, Cin); only 2 rows per tile
    # are duplicated, so kernel HBM reads are ~(th+2)/th of the input.
    row_idx = jnp.arange(num_r)[:, None] * th + jnp.arange(th + 2)[None, :]
    x_tiles = x_pad[:, row_idx]

    # Weights: (Cout, Cin, 3, 3) -> (9, Cin, Cout_pad), lane-dense output dim.
    w_r = jnp.transpose(conv_w, (2, 3, 1, 0)).reshape(9, c_in, c_out)
    w_r = jnp.pad(w_r, ((0, 0), (0, 0), (0, c_pad - c_out))).astype(jnp.bfloat16)

    # ---- pass 1: conv + per-tile partial statistics -------------------------
    y, stats = pl.pallas_call(
        conv_stats_kernel,
        out_shape=(
            jax.ShapeDtypeStruct((n, h, w, c_pad), jnp.float32),
            jax.ShapeDtypeStruct((n, num_r, 2, c_pad), jnp.float32),
        ),
        grid=(n, num_r),
        in_specs=[
            pl.BlockSpec((None, None, th + 2, w + 2, c_in),
                         lambda i, r: (i, r, 0, 0, 0)),
            pl.BlockSpec((9, c_in, c_pad), lambda i, r: (0, 0, 0)),
        ],
        out_specs=(
            pl.BlockSpec((None, th, w, c_pad), lambda i, r: (i, r, 0, 0)),
            pl.BlockSpec((None, None, 2, c_pad), lambda i, r: (i, r, 0, 0)),
        ),
        compiler_params=pltpu.CompilerParams(
            dimension_semantics=("parallel", "parallel")),
    )(x_tiles, w_r)

    # ---- global BN statistics (tiny reduction) + folded scale/shift ---------
    # TODO(synk): BatchNorm2d running_mean/running_var buffer updates are a
    # training-time side effect, not part of the returned activation.
    m = float(n * h * w)
    tot = jnp.sum(stats, axis=(0, 1))                         # (2, Cout_pad)
    mean = tot[0] / m
    var = jnp.maximum(tot[1] / m - mean * mean, 0.0)          # biased (PyTorch)
    inv_std = jax.lax.rsqrt(var + EPS)
    gamma = jnp.pad(bn_gamma.astype(jnp.float32), (0, c_pad - c_out))
    beta = jnp.pad(bn_beta.astype(jnp.float32), (0, c_pad - c_out))
    scale = (gamma * inv_std).reshape(1, 1, c_pad)
    shift = (beta - mean * gamma * inv_std).reshape(1, 1, c_pad)

    # ---- pass 2: scale/shift + ReLU, in place over y (aliased) --------------
    out_pad = pl.pallas_call(
        bn_relu_kernel,
        out_shape=jax.ShapeDtypeStruct((n, h, w, c_pad), jnp.float32),
        grid=(n, num_r),
        in_specs=[
            pl.BlockSpec((None, th, w, c_pad), lambda i, r: (i, r, 0, 0)),
            pl.BlockSpec((1, 1, c_pad), lambda i, r: (0, 0, 0)),
            pl.BlockSpec((1, 1, c_pad), lambda i, r: (0, 0, 0)),
        ],
        out_specs=pl.BlockSpec((None, th, w, c_pad), lambda i, r: (i, r, 0, 0)),
        input_output_aliases={0: 0},
        compiler_params=pltpu.CompilerParams(
            dimension_semantics=("parallel", "parallel")),
    )(y, scale, shift)

    # Strip channel padding, return NCHW to match the PyTorch module interface.
    out = out_pad[..., :c_out]
    return jnp.transpose(out, (0, 3, 1, 2))


def reference(x, conv_w, conv_b, bn_gamma, bn_beta):
    """Pure-JAX reference (conv -> train-mode BN -> ReLU). Inputs/weights are
    bf16-quantized (then f32) so the check isolates kernel correctness from the
    intentional bf16-MXU quantization; the conv bias is kept here to verify it
    is indeed cancelled by train-mode BN."""
    xq = x.astype(jnp.bfloat16).astype(jnp.float32)
    wq = conv_w.astype(jnp.bfloat16).astype(jnp.float32)
    y = jax.lax.conv_general_dilated(
        xq, wq, window_strides=(1, 1), padding=((1, 1), (1, 1)),
        dimension_numbers=("NCHW", "OIHW", "NCHW"))
    y = y + conv_b.reshape(1, -1, 1, 1)
    mean = jnp.mean(y, axis=(0, 2, 3), keepdims=True)
    var = jnp.mean((y - mean) ** 2, axis=(0, 2, 3), keepdims=True)
    y_hat = (y - mean) * jax.lax.rsqrt(var + EPS)
    out = y_hat * bn_gamma.reshape(1, -1, 1, 1) + bn_beta.reshape(1, -1, 1, 1)
    return jnp.maximum(out, 0.0)


if __name__ == "__main__":
    key = jax.random.PRNGKey(0)
    k_x, k_w, k_b, k_g, k_be = jax.random.split(key, 5)

    N, Cin, H, W = 2, 4, 16, 16
    Cout = 8

    x = jax.random.normal(k_x, (N, Cin, H, W), dtype=jnp.float32)
    conv_w = jax.random.normal(k_w, (Cout, Cin, 3, 3), dtype=jnp.float32) * 0.1
    conv_b = jax.random.normal(k_b, (Cout,), dtype=jnp.float32) * 0.1
    bn_gamma = 1.0 + 0.1 * jax.random.normal(k_g, (Cout,), dtype=jnp.float32)
    bn_beta = 0.1 * jax.random.normal(k_be, (Cout,), dtype=jnp.float32)

    out = conv_batch_norm(x, conv_w, conv_b, bn_gamma, bn_beta)
    out = jax.block_until_ready(out)

    ref = reference(x, conv_w, conv_b, bn_gamma, bn_beta)
    assert out.shape == (N, Cout, H, W)
    assert jnp.allclose(out, ref, atol=1e-3, rtol=1e-3), \
        float(jnp.max(jnp.abs(out - ref)))

    print("KERNEL_OK")
</pallas_src>

<mosaic_0001>
module attributes {stable_mosaic.version = 11 : i64} {
  func.func @conv_stats_kernel(%arg0: i32, %arg1: i32, %arg2: memref<1x1x18x18x4xbf16, #tpu.memory_space<vmem>>, %arg3: memref<9x4x128xbf16, #tpu.memory_space<vmem>>, %arg4: memref<1x16x16x128xf32, #tpu.memory_space<vmem>>, %arg5: memref<1x1x2x128xf32, #tpu.memory_space<vmem>>) attributes {dimension_semantics = [#tpu.dimension_semantics<parallel>, #tpu.dimension_semantics<parallel>], iteration_bounds = array<i64: 2, 1>, scalar_prefetch = 0 : i64, scratch_operands = 0 : i64, tpu.core_type = #tpu.core_type<tc>, window_params = [{transform_indices = @transform_0, window_bounds = array<i64: 1, 1, 18, 18, 4>}, {pipeline_mode = #tpu.pipeline_mode<synchronous>, transform_indices = @transform_1, window_bounds = array<i64: 9, 4, 128>}, {transform_indices = @transform_2, window_bounds = array<i64: 1, 16, 16, 128>}, {transform_indices = @transform_3, window_bounds = array<i64: 1, 1, 2, 128>}]} {
    %c0 = arith.constant 0 : index
    %c0_0 = arith.constant 0 : index
    %c0_1 = arith.constant 0 : index
    %c0_2 = arith.constant 0 : index
    %c0_3 = arith.constant 0 : index
    %0 = vector.load %arg2[%c0, %c0_0, %c0_1, %c0_2, %c0_3] : memref<1x1x18x18x4xbf16, #tpu.memory_space<vmem>>, vector<1x1x18x18x4xbf16>
    %1 = vector.shape_cast %0 : vector<1x1x18x18x4xbf16> to vector<18x18x4xbf16>
    %c0_4 = arith.constant 0 : index
    %c0_5 = arith.constant 0 : index
    %c0_6 = arith.constant 0 : index
    %2 = vector.load %arg3[%c0_4, %c0_5, %c0_6] : memref<9x4x128xbf16, #tpu.memory_space<vmem>>, vector<9x4x128xbf16>
    %cst = arith.constant 0.000000e+00 : f32
    %3 = vector.broadcast %cst : f32 to vector<256x128xf32>
    %4 = vector.extract_strided_slice %1 {offsets = [0, 0, 0], sizes = [16, 16, 4], strides = [1, 1, 1]} : vector<18x18x4xbf16> to vector<16x16x4xbf16>
    %5 = vector.shape_cast %4 : vector<16x16x4xbf16> to vector<256x4xbf16>
    %6 = vector.extract_strided_slice %2 {offsets = [0, 0, 0], sizes = [1, 4, 128], strides = [1, 1, 1]} : vector<9x4x128xbf16> to vector<1x4x128xbf16>
    %7 = vector.shape_cast %6 : vector<1x4x128xbf16> to vector<4x128xbf16>
    %cst_7 = arith.constant dense<0.000000e+00> : vector<256x128xf32>
    %8 = tpu.matmul %5, %7, %cst_7 {dimension_numbers = #tpu.dot_dimension_numbers<[1], [0], [0], [1], [0, 0, 1, 1], [], []>} : vector<256x4xbf16>, vector<4x128xbf16>, vector<256x128xf32> -> vector<256x128xf32>
    %9 = arith.addf %3, %8 : vector<256x128xf32>
    %10 = vector.extract_strided_slice %1 {offsets = [0, 1, 0], sizes = [16, 16, 4], strides = [1, 1, 1]} : vector<18x18x4xbf16> to vector<16x16x4xbf16>
    %11 = vector.shape_cast %10 : vector<16x16x4xbf16> to vector<256x4xbf16>
    %12 = vector.extract_strided_slice %2 {offsets = [1, 0, 0], sizes = [1, 4, 128], strides = [1, 1, 1]} : vector<9x4x128xbf16> to vector<1x4x128xbf16>
    %13 = vector.shape_cast %12 : vector<1x4x128xbf16> to vector<4x128xbf16>
    %cst_8 = arith.constant dense<0.000000e+00> : vector<256x128xf32>
    %14 = tpu.matmul %11, %13, %cst_8 {dimension_numbers = #tpu.dot_dimension_numbers<[1], [0], [0], [1], [0, 0, 1, 1], [], []>} : vector<256x4xbf16>, vector<4x128xbf16>, vector<256x128xf32> -> vector<256x128xf32>
    %15 = arith.addf %9, %14 : vector<256x128xf32>
    %16 = vector.extract_strided_slice %1 {offsets = [0, 2, 0], sizes = [16, 16, 4], strides = [1, 1, 1]} : vector<18x18x4xbf16> to vector<16x16x4xbf16>
    %17 = vector.shape_cast %16 : vector<16x16x4xbf16> to vector<256x4xbf16>
    %18 = vector.extract_strided_slice %2 {offsets = [2, 0, 0], sizes = [1, 4, 128], strides = [1, 1, 1]} : vector<9x4x128xbf16> to vector<1x4x128xbf16>
    %19 = vector.shape_cast %18 : vector<1x4x128xbf16> to vector<4x128xbf16>
    %cst_9 = arith.constant dense<0.000000e+00> : vector<256x128xf32>
    %20 = tpu.matmul %17, %19, %cst_9 {dimension_numbers = #tpu.dot_dimension_numbers<[1], [0], [0], [1], [0, 0, 1, 1], [], []>} : vector<256x4xbf16>, vector<4x128xbf16>, vector<256x128xf32> -> vector<256x128xf32>
    %21 = arith.addf %15, %20 : vector<256x128xf32>
    %22 = vector.extract_strided_slice %1 {offsets = [1, 0, 0], sizes = [16, 16, 4], strides = [1, 1, 1]} : vector<18x18x4xbf16> to vector<16x16x4xbf16>
    %23 = vector.shape_cast %22 : vector<16x16x4xbf16> to vector<256x4xbf16>
    %24 = vector.extract_strided_slice %2 {offsets = [3, 0, 0], sizes = [1, 4, 128], strides = [1, 1, 1]} : vector<9x4x128xbf16> to vector<1x4x128xbf16>
    %25 = vector.shape_cast %24 : vector<1x4x128xbf16> to vector<4x128xbf16>
    %cst_10 = arith.constant dense<0.000000e+00> : vector<256x128xf32>
    %26 = tpu.matmul %23, %25, %cst_10 {dimension_numbers = #tpu.dot_dimension_numbers<[1], [0], [0], [1], [0, 0, 1, 1], [], []>} : vector<256x4xbf16>, vector<4x128xbf16>, vector<256x128xf32> -> vector<256x128xf32>
    %27 = arith.addf %21, %26 : vector<256x128xf32>
    %28 = vector.extract_strided_slice %1 {offsets = [1, 1, 0], sizes = [16, 16, 4], strides = [1, 1, 1]} : vector<18x18x4xbf16> to vector<16x16x4xbf16>
    %29 = vector.shape_cast %28 : vector<16x16x4xbf16> to vector<256x4xbf16>
    %30 = vector.extract_strided_slice %2 {offsets = [4, 0, 0], sizes = [1, 4, 128], strides = [1, 1, 1]} : vector<9x4x128xbf16> to vector<1x4x128xbf16>
    %31 = vector.shape_cast %30 : vector<1x4x128xbf16> to vector<4x128xbf16>
    %cst_11 = arith.constant dense<0.000000e+00> : vector<256x128xf32>
    %32 = tpu.matmul %29, %31, %cst_11 {dimension_numbers = #tpu.dot_dimension_numbers<[1], [0], [0], [1], [0, 0, 1, 1], [], []>} : vector<256x4xbf16>, vector<4x128xbf16>, vector<256x128xf32> -> vector<256x128xf32>
    %33 = arith.addf %27, %32 : vector<256x128xf32>
    %34 = vector.extract_strided_slice %1 {offsets = [1, 2, 0], sizes = [16, 16, 4], strides = [1, 1, 1]} : vector<18x18x4xbf16> to vector<16x16x4xbf16>
    %35 = vector.shape_cast %34 : vector<16x16x4xbf16> to vector<256x4xbf16>
    %36 = vector.extract_strided_slice %2 {offsets = [5, 0, 0], sizes = [1, 4, 128], strides = [1, 1, 1]} : vector<9x4x128xbf16> to vector<1x4x128xbf16>
    %37 = vector.shape_cast %36 : vector<1x4x128xbf16> to vector<4x128xbf16>
    %cst_12 = arith.constant dense<0.000000e+00> : vector<256x128xf32>
    %38 = tpu.matmul %35, %37, %cst_12 {dimension_numbers = #tpu.dot_dimension_numbers<[1], [0], [0], [1], [0, 0, 1, 1], [], []>} : vector<256x4xbf16>, vector<4x128xbf16>, vector<256x128xf32> -> vector<256x128xf32>
    %39 = arith.addf %33, %38 : vector<256x128xf32>
    %40 = vector.extract_strided_slice %1 {offsets = [2, 0, 0], sizes = [16, 16, 4], strides = [1, 1, 1]} : vector<18x18x4xbf16> to vector<16x16x4xbf16>
    %41 = vector.shape_cast %40 : vector<16x16x4xbf16> to vector<256x4xbf16>
    %42 = vector.extract_strided_slice %2 {offsets = [6, 0, 0], sizes = [1, 4, 128], strides = [1, 1, 1]} : vector<9x4x128xbf16> to vector<1x4x128xbf16>
    %43 = vector.shape_cast %42 : vector<1x4x128xbf16> to vector<4x128xbf16>
    %cst_13 = arith.constant dense<0.000000e+00> : vector<256x128xf32>
    %44 = tpu.matmul %41, %43, %cst_13 {dimension_numbers = #tpu.dot_dimension_numbers<[1], [0], [0], [1], [0, 0, 1, 1], [], []>} : vector<256x4xbf16>, vector<4x128xbf16>, vector<256x128xf32> -> vector<256x128xf32>
    %45 = arith.addf %39, %44 : vector<256x128xf32>
    %46 = vector.extract_strided_slice %1 {offsets = [2, 1, 0], sizes = [16, 16, 4], strides = [1, 1, 1]} : vector<18x18x4xbf16> to vector<16x16x4xbf16>
    %47 = vector.shape_cast %46 : vector<16x16x4xbf16> to vector<256x4xbf16>
    %48 = vector.extract_strided_slice %2 {offsets = [7, 0, 0], sizes = [1, 4, 128], strides = [1, 1, 1]} : vector<9x4x128xbf16> to vector<1x4x128xbf16>
    %49 = vector.shape_cast %48 : vector<1x4x128xbf16> to vector<4x128xbf16>
    %cst_14 = arith.constant dense<0.000000e+00> : vector<256x128xf32>
    %50 = tpu.matmul %47, %49, %cst_14 {dimension_numbers = #tpu.dot_dimension_numbers<[1], [0], [0], [1], [0, 0, 1, 1], [], []>} : vector<256x4xbf16>, vector<4x128xbf16>, vector<256x128xf32> -> vector<256x128xf32>
    %51 = arith.addf %45, %50 : vector<256x128xf32>
    %52 = vector.extract_strided_slice %1 {offsets = [2, 2, 0], sizes = [16, 16, 4], strides = [1, 1, 1]} : vector<18x18x4xbf16> to vector<16x16x4xbf16>
    %53 = vector.shape_cast %52 : vector<16x16x4xbf16> to vector<256x4xbf16>
    %54 = vector.extract_strided_slice %2 {offsets = [8, 0, 0], sizes = [1, 4, 128], strides = [1, 1, 1]} : vector<9x4x128xbf16> to vector<1x4x128xbf16>
    %55 = vector.shape_cast %54 : vector<1x4x128xbf16> to vector<4x128xbf16>
    %cst_15 = arith.constant dense<0.000000e+00> : vector<256x128xf32>
    %56 = tpu.matmul %53, %55, %cst_15 {dimension_numbers = #tpu.dot_dimension_numbers<[1], [0], [0], [1], [0, 0, 1, 1], [], []>} : vector<256x4xbf16>, vector<4x128xbf16>, vector<256x128xf32> -> vector<256x128xf32>
    %57 = arith.addf %51, %56 : vector<256x128xf32>
    %58 = vector.shape_cast %57 : vector<256x128xf32> to vector<16x16x128xf32>
    %c0_16 = arith.constant 0 : index
    %c0_17 = arith.constant 0 : index
    %c0_18 = arith.constant 0 : index
    %c0_19 = arith.constant 0 : index
    %59 = vector.load %arg4[%c0_16, %c0_17, %c0_18, %c0_19] : memref<1x16x16x128xf32, #tpu.memory_space<vmem>>, vector<1x16x16x128xf32>
    %60 = vector.shape_cast %59 : vector<1x16x16x128xf32> to vector<16x16x128xf32>
    %61 = vector.shape_cast %58 : vector<16x16x128xf32> to vector<1x16x16x128xf32>
    tpu.vector_store %arg4[%c0_16, %c0_17, %c0_18, %c0_19], %61 {strides = array<i32>} : memref<1x16x16x128xf32, #tpu.memory_space<vmem>>, vector<1x16x16x128xf32>,
    %cst_20 = arith.constant dense<0.000000e+00> : vector<128xf32>
    %62 = vector.multi_reduction <add>, %57, %cst_20 [0] : vector<256x128xf32> to vector<128xf32>
    %63 = vector.shape_cast %62 : vector<128xf32> to vector<1x128xf32>
    %64 = arith.mulf %57, %57 : vector<256x128xf32>
    %cst_21 = arith.constant dense<0.000000e+00> : vector<128xf32>
    %65 = vector.multi_reduction <add>, %64, %cst_21 [0] : vector<256x128xf32> to vector<128xf32>
    %66 = vector.shape_cast %65 : vector<128xf32> to vector<1x128xf32>
    %67 = tpu.concatenate %63, %66 in 0 : vector<1x128xf32>, vector<1x128xf32> -> vector<2x128xf32>
    %c0_22 = arith.constant 0 : index
    %c0_23 = arith.constant 0 : index
    %c0_24 = arith.constant 0 : index
    %c0_25 = arith.constant 0 : index
    %68 = vector.load %arg5[%c0_22, %c0_23, %c0_24, %c0_25] : memref<1x1x2x128xf32, #tpu.memory_space<vmem>>, vector<1x1x2x128xf32>
    %69 = vector.shape_cast %68 : vector<1x1x2x128xf32> to vector<2x128xf32>
    %70 = vector.shape_cast %67 : vector<2x128xf32> to vector<1x1x2x128xf32>
    tpu.vector_store %arg5[%c0_22, %c0_23, %c0_24, %c0_25], %70 {strides = array<i32>} : memref<1x1x2x128xf32, #tpu.memory_space<vmem>>, vector<1x1x2x128xf32>,
    return
  }
  func.func @transform_0(%arg0: i32, %arg1: i32) -> (i32, i32, i32, i32, i32) {
    %c0_i32 = arith.constant 0 : i32
    %c0_i32_0 = arith.constant 0 : i32
    %c0_i32_1 = arith.constant 0 : i32
    %c0_i32_2 = arith.constant 0 : i32
    return %arg0, %arg1, %c0_i32, %c0_i32_0, %c0_i32_1 : i32, i32, i32, i32, i32
  }
  func.func @transform_1(%arg0: i32, %arg1: i32) -> (i32, i32, i32) {
    %c0_i32 = arith.constant 0 : i32
    %c0_i32_0 = arith.constant 0 : i32
    %c0_i32_1 = arith.constant 0 : i32
    %c0_i32_2 = arith.constant 0 : i32
    return %c0_i32, %c0_i32_0, %c0_i32_1 : i32, i32, i32
  }
  func.func @transform_2(%arg0: i32, %arg1: i32) -> (i32, i32, i32, i32) {
    %c0_i32 = arith.constant 0 : i32
    %c0_i32_0 = arith.constant 0 : i32
    %c0_i32_1 = arith.constant 0 : i32
    return %arg0, %arg1, %c0_i32, %c0_i32_0 : i32, i32, i32, i32
  }
  func.func @transform_3(%arg0: i32, %arg1: i32) -> (i32, i32, i32, i32) {
    %c0_i32 = arith.constant 0 : i32
    %c0_i32_0 = arith.constant 0 : i32
    %c0_i32_1 = arith.constant 0 : i32
    return %arg0, %arg1, %c0_i32, %c0_i32_0 : i32, i32, i32, i32
  }
}

module attributes {stable_mosaic.version = 11 : i64} {
  func.func @bn_relu_kernel(%arg0: i32, %arg1: i32, %arg2: memref<1x16x16x128xf32, #tpu.memory_space<vmem>>, %arg3: memref<1x1x128xf32, #tpu.memory_space<vmem>>, %arg4: memref<1x1x128xf32, #tpu.memory_space<vmem>>, %arg5: memref<1x16x16x128xf32, #tpu.memory_space<vmem>>) attributes {dimension_semantics = [#tpu.dimension_semantics<parallel>, #tpu.dimension_semantics<parallel>], iteration_bounds = array<i64: 2, 1>, scalar_prefetch = 0 : i64, scratch_operands = 0 : i64, tpu.core_type = #tpu.core_type<tc>, window_params = [{transform_indices = @transform_0, window_bounds = array<i64: 1, 16, 16, 128>}, {pipeline_mode = #tpu.pipeline_mode<synchronous>, transform_indices = @transform_1, window_bounds = array<i64: 1, 1, 128>}, {pipeline_mode = #tpu.pipeline_mode<synchronous>, transform_indices = @transform_2, window_bounds = array<i64: 1, 1, 128>}, {transform_indices = @transform_3, window_bounds = array<i64: 1, 16, 16, 128>}]} {
    %c0 = arith.constant 0 : index
    %c0_0 = arith.constant 0 : index
    %c0_1 = arith.constant 0 : index
    %c0_2 = arith.constant 0 : index
    %0 = vector.load %arg2[%c0, %c0_0, %c0_1, %c0_2] : memref<1x16x16x128xf32, #tpu.memory_space<vmem>>, vector<1x16x16x128xf32>
    %1 = vector.shape_cast %0 : vector<1x16x16x128xf32> to vector<16x16x128xf32>
    %c0_3 = arith.constant 0 : index
    %c0_4 = arith.constant 0 : index
    %c0_5 = arith.constant 0 : index
    %2 = vector.load %arg3[%c0_3, %c0_4, %c0_5] : memref<1x1x128xf32, #tpu.memory_space<vmem>>, vector<1x1x128xf32>
    %3 = vector.broadcast %2 : vector<1x1x128xf32> to vector<16x16x128xf32>
    %4 = arith.mulf %1, %3 : vector<16x16x128xf32>
    %c0_6 = arith.constant 0 : index
    %c0_7 = arith.constant 0 : index
    %c0_8 = arith.constant 0 : index
    %5 = vector.load %arg4[%c0_6, %c0_7, %c0_8] : memref<1x1x128xf32, #tpu.memory_space<vmem>>, vector<1x1x128xf32>
    %6 = vector.broadcast %5 : vector<1x1x128xf32> to vector<16x16x128xf32>
    %7 = arith.addf %4, %6 : vector<16x16x128xf32>
    %cst = arith.constant 0.000000e+00 : f32
    %8 = vector.broadcast %cst : f32 to vector<16x16x128xf32>
    %9 = arith.maximumf %7, %8 : vector<16x16x128xf32>
    %c0_9 = arith.constant 0 : index
    %c0_10 = arith.constant 0 : index
    %c0_11 = arith.constant 0 : index
    %c0_12 = arith.constant 0 : index
    %10 = vector.load %arg5[%c0_9, %c0_10, %c0_11, %c0_12] : memref<1x16x16x128xf32, #tpu.memory_space<vmem>>, vector<1x16x16x128xf32>
    %11 = vector.shape_cast %10 : vector<1x16x16x128xf32> to vector<16x16x128xf32>
    %12 = vector.shape_cast %9 : vector<16x16x128xf32> to vector<1x16x16x128xf32>
    tpu.vector_store %arg5[%c0_9, %c0_10, %c0_11, %c0_12], %12 {strides = array<i32>} : memref<1x16x16x128xf32, #tpu.memory_space<vmem>>, vector<1x16x16x128xf32>,
    return
  }
  func.func @transform_0(%arg0: i32, %arg1: i32) -> (i32, i32, i32, i32) {
    %c0_i32 = arith.constant 0 : i32
    %c0_i32_0 = arith.constant 0 : i32
    %c0_i32_1 = arith.constant 0 : i32
    return %arg0, %arg1, %c0_i32, %c0_i32_0 : i32, i32, i32, i32
  }
  func.func @transform_1(%arg0: i32, %arg1: i32) -> (i32, i32, i32) {
    %c0_i32 = arith.constant 0 : i32
    %c0_i32_0 = arith.constant 0 : i32
    %c0_i32_1 = arith.constant 0 : i32
    %c0_i32_2 = arith.constant 0 : i32
    return %c0_i32, %c0_i32_0, %c0_i32_1 : i32, i32, i32
  }
  func.func @transform_2(%arg0: i32, %arg1: i32) -> (i32, i32, i32) {
    %c0_i32 = arith.constant 0 : i32
    %c0_i32_0 = arith.constant 0 : i32
    %c0_i32_1 = arith.constant 0 : i32
    %c0_i32_2 = arith.constant 0 : i32
    return %c0_i32, %c0_i32_0, %c0_i32_1 : i32, i32, i32
  }
  func.func @transform_3(%arg0: i32, %arg1: i32) -> (i32, i32, i32, i32) {
    %c0_i32 = arith.constant 0 : i32
    %c0_i32_0 = arith.constant 0 : i32
    %c0_i32_1 = arith.constant 0 : i32
    return %arg0, %arg1, %c0_i32, %c0_i32_0 : i32, i32, i32, i32
  }
}

</mosaic_0001>

<llo_original>
// kernel: conv_batch_norm.3
$region0: #{conv_batch_norm.3}
  #allocation0 [shape = 'u32[]', space=smem, size = 0x4, offset = 0x4, fixed_abs, tag = 'smem constant byte address 0x4 - core index']
  #allocation1 [shape = 'u32[144,128]{1,0:T(1,128)}', space=vmem, size = 0x12000, scoped, tag = 'internal scratch']
  %s0 = inlined_call_operand.vmem [shape: f32[2,16,16,128], index: 0, kind: input, shape index: {}, may-alias: {0,3}]
  %s1 = inlined_call_operand.vmem [shape: f32[1,1,128], index: 1, kind: input, shape index: {}]
  %s2 = inlined_call_operand.vmem [shape: f32[1,1,128], index: 2, kind: input, shape index: {}]
  %s3 = inlined_call_operand.vmem [shape: f32[2,16,16,128], index: 3, kind: output, shape index: {}, may-alias: {0,3}]
  %s4 = sld [smem:[#allocation0]]
  $region45: #{conv_batch_norm.3} parent=0
    _
  %s6 = ssub.s32 1, %s4
  %s7 = scalar_select 0, %s6, %s4
  loop: start=0, step=1, limit=4
  $region2: #{conv_batch_norm.3} parent=0 // loop_pre_header
    _
  $region3: #{conv_batch_norm.3} parent=0 // loop_header
    %s9 = sphi 0, %s13
    %p10 = scmp.ge.s32.totalorder %s9, 4
    %s16 = sphi 0, %s28
    %s17 = sphi 0, %s24
    %s18 = sphi 0, %s16
    %s19 = sphi 0, %s17
    %s20 = sphi 0, %s18
    %s21 = sphi 0, %s19
    %s33 = sphi 0, %s35
    %s36 = sphi 0, %s33
    %s37 = sphi 0, %s36
    %s53 = sphi 0, %s37
    %s57 = sphi 0, %s57
    %s59 = sphi 0, %s57
    %s60 = sphi 0, %s59
    %s74 = sphi 0, %s60
    %s78 = sphi 0, %s78
    %s80 = sphi 0, %s78
    %s81 = sphi 0, %s80
    %s95 = sphi 0, %s81
    %s103 = sphi 0, %s105
    %s106 = sphi 0, %s103
    %s107 = sphi 0, %s106
    %s123 = sphi 0, %s107
  $region4: #{conv_batch_norm.3} parent=0 // loop_header_branch
    %12 = sbr.rel (%p10) target = $region8
  $region5: #{conv_batch_norm.3} parent=0 // loop_body
    %s14 = ssub.s32 %s9, 1
    %s15 = ssub.s32 %s9, 2
    %s22 = sadd.s32 1, %s17
    %p23 = scmp.ge.s32.totalorder %s22, 1
    %s24 = scalar_select %p23, 0, %s22
    %s25 = sadd.s32 1, %s16
    %s26 = scalar_select %p23, %s25, %s16
    %p27 = scmp.ge.s32.totalorder %s26, 2
    %s28 = scalar_select %p27, 0, %s26
    %s29 = ssub.s32 %s16, %s28
    %s30 = ssub.s32 %s17, %s24
    %s31 = sor.u32 %s29, %s30
    %p32 = scmp.eq.s32.totalorder %s31, 0
    %s34 = sadd.s32 %s33, 1
    %s35 = scalar_select %p32, %s33, %s34
    %p38 = pneg %p32
    %p39 = scmp.eq.s32.totalorder %s9, 1
    %p40 = por %p38, %p39
    %p41 = scmp.ne.s32.totalorder %s33, %s36
    %p42 = scmp.eq.s32.totalorder %s9, 0
    %p43 = por %p41, %p42
    %p44 = scmp.ne.s32.totalorder %s33, %s36
    %p45 = scmp.eq.s32.totalorder %s14, 1
    %p46 = por %p44, %p45
    %p47 = scmp.ne.s32.totalorder %s36, %s37
    %p48 = scmp.eq.s32.totalorder %s14, 0
    %p49 = por %p47, %p48
    %p50 = scmp.ne.s32.totalorder %s36, %s37
    %p51 = scmp.eq.s32.totalorder %s15, 1
    %p52 = por %p50, %p51
    %p54 = scmp.ne.s32.totalorder %s37, %s53
    %p55 = scmp.eq.s32.totalorder %s15, 0
    %p56 = por %p54, %p55
    %s58 = sadd.s32 %s57, 1
    %p61 = scmp.eq.s32.totalorder %s9, 1
    %p62 = scmp.ne.s32.totalorder %s57, %s59
    %p63 = scmp.eq.s32.totalorder %s9, 0
    %p64 = por %p62, %p63
    %p65 = scmp.ne.s32.totalorder %s57, %s59
    %p66 = scmp.eq.s32.totalorder %s14, 1
    %p67 = por %p65, %p66
    %p68 = scmp.ne.s32.totalorder %s59, %s60
    %p69 = scmp.eq.s32.totalorder %s14, 0
    %p70 = por %p68, %p69
    %p71 = scmp.ne.s32.totalorder %s59, %s60
    %p72 = scmp.eq.s32.totalorder %s15, 1
    %p73 = por %p71, %p72
    %p75 = scmp.ne.s32.totalorder %s60, %s74
    %p76 = scmp.eq.s32.totalorder %s15, 0
    %p77 = por %p75, %p76
    %s79 = sadd.s32 %s78, 1
    %p82 = scmp.eq.s32.totalorder %s9, 1
    %p83 = scmp.ne.s32.totalorder %s78, %s80
    %p84 = scmp.eq.s32.totalorder %s9, 0
    %p85 = por %p83, %p84
    %p86 = scmp.ne.s32.totalorder %s78, %s80
    %p87 = scmp.eq.s32.totalorder %s14, 1
    %p88 = por %p86, %p87
    %p89 = scmp.ne.s32.totalorder %s80, %s81
    %p90 = scmp.eq.s32.totalorder %s14, 0
    %p91 = por %p89, %p90
    %p92 = scmp.ne.s32.totalorder %s80, %s81
    %p93 = scmp.eq.s32.totalorder %s15, 1
    %p94 = por %p92, %p93
    %p96 = scmp.ne.s32.totalorder %s81, %s95
    %p97 = scmp.eq.s32.totalorder %s15, 0
    %p98 = por %p96, %p97
    %s99 = ssub.s32 %s16, %s28
    %s100 = ssub.s32 %s17, %s24
    %s101 = sor.u32 %s99, %s100
    %p102 = scmp.eq.s32.totalorder %s101, 0
    %s104 = sadd.s32 %s103, 1
    %s105 = scalar_select %p102, %s103, %s104
    %p108 = pneg %p102
    %p109 = scmp.eq.s32.totalorder %s9, 1
    %p110 = por %p108, %p109
    %p111 = scmp.ne.s32.totalorder %s103, %s106
    %p112 = scmp.eq.s32.totalorder %s9, 0
    %p113 = por %p111, %p112
    %p114 = scmp.ne.s32.totalorder %s103, %s106
    %p115 = scmp.eq.s32.totalorder %s14, 1
    %p116 = por %p114, %p115
    %p117 = scmp.ne.s32.totalorder %s106, %s107
    %p118 = scmp.eq.s32.totalorder %s14, 0
    %p119 = por %p117, %p118
    %p120 = scmp.ne.s32.totalorder %s106, %s107
    %p121 = scmp.eq.s32.totalorder %s15, 1
    %p122 = por %p120, %p121
    %p124 = scmp.ne.s32.totalorder %s107, %s123
    %p125 = scmp.eq.s32.totalorder %s15, 0
    %p126 = por %p124, %p125
    %p127 = scmp.le.s32.totalorder 1, %s9
    %p128 = scmp.lt.s32.totalorder %s9, 3
    %p129 = pnand %p127, %p128
    %p130 = pneg %p129
    // Predicated region
    $region9: #{conv_batch_norm.3} parent=5 // pred_check
      _
    $region10: #{conv_batch_norm.3} parent=5 // pred_check_branch
      %132 = sbr.rel (%p129) target = $region12
    $region11: #{conv_batch_norm.3} parent=5 // pred_region
      %s133 = ssub.s32 %s9, 1
      // Predicated region
      $region13: #{conv_batch_norm.3} parent=11 // pred_check
        %p134 = pneg %p70
      $region14: #{conv_batch_norm.3} parent=11 // pred_check_branch
        %136 = sbr.rel (%p134) target = $region16
      $region15: #{conv_batch_norm.3} parent=11 // pred_region
        _
      $region16: #{conv_batch_norm.3} parent=11 // pred_fallthru
        _
      // Predicated region
      $region17: #{conv_batch_norm.3} parent=11 // pred_check
        %p137 = pneg %p91
      $region18: #{conv_batch_norm.3} parent=11 // pred_check_branch
        %139 = sbr.rel (%p137) target = $region20
      $region19: #{conv_batch_norm.3} parent=11 // pred_region
        _
      $region20: #{conv_batch_norm.3} parent=11 // pred_fallthru
        _
    $region12: #{conv_batch_norm.3} parent=5 // pred_fallthru
      _
    %p140 = scmp.lt.s32.totalorder %s9, 2
    // Predicated region
    $region21: #{conv_batch_norm.3} parent=5 // pred_check
      %p141 = pneg %p140
    $region22: #{conv_batch_norm.3} parent=5 // pred_check_branch
      %143 = sbr.rel (%p141) target = $region24
    $region23: #{conv_batch_norm.3} parent=5 // pred_region
      // Predicated region
      $region25: #{conv_batch_norm.3} parent=23 // pred_check
        %p144 = pneg %p43
      $region26: #{conv_batch_norm.3} parent=23 // pred_check_branch
        %146 = sbr.rel (%p144) target = $region28
      $region27: #{conv_batch_norm.3} parent=23 // pred_region
        %s147 = smul.u32 16, %s17
        %p148 = scmp.lt.s32.totalorder %s16, 1
        %s149 = scalar_select %p148, %s16, 1
        %p150 = scmp.lt.s32.totalorder %s147, 15
        %s151 = scalar_select %p150, %s147, 15
        %s152 = smul.addr %s151, 2
        %s153 = smul.addr %s149, 32
        %s154 = sadd.s32 %s152, %s153
        %s155 = smul.addr %s154, 8
        %s156 = scalar_lea.vmem %s0, %s155
        %s157 = smul.u32 16, %s17
      $region28: #{conv_batch_norm.3} parent=23 // pred_fallthru
        _
    $region24: #{conv_batch_norm.3} parent=5 // pred_fallthru
      _
    %p158 = scmp.le.s32.totalorder 1, %s9
    %p159 = scmp.lt.s32.totalorder %s9, 3
    %p160 = pnand %p158, %p159
    %p161 = pneg %p160
    // Predicated region
    $region29: #{conv_batch_norm.3} parent=5 // pred_check
      _
    $region30: #{conv_batch_norm.3} parent=5 // pred_check_branch
      %163 = sbr.rel (%p160) target = $region32
    $region31: #{conv_batch_norm.3} parent=5 // pred_region
      %s164 = ssub.s32 %s9, 1
      %s165 = smul.u32 16, %s19
      %p166 = scmp.lt.s32.totalorder %s18, 1
      %s167 = scalar_select %p166, %s18, 1
      %p168 = scmp.lt.s32.totalorder %s165, 15
      %s169 = scalar_select %p168, %s165, 15
      %s170 = smul.addr %s169, 2
      %s171 = smul.addr %s167, 32
      %s172 = sadd.s32 %s170, %s171
      %s173 = smul.addr %s172, 8
      %s174 = scalar_lea.vmem %s0, %s173
      %p175 = pneg %p49
      %p176 = pneg %p46
      %p177 = pneg %p70
      %p178 = pneg %p67
      %p179 = pneg %p91
      %p180 = pneg %p88
      %p181 = pneg %p119
      %p182 = pneg %p116
      %s183 = smul.u32 16, %s19
      %p184 = scmp.lt.s32.totalorder %s18, 1
      %s185 = scalar_select %p184, %s18, 1
      %p186 = scmp.lt.s32.totalorder %s183, 15
      %s187 = scalar_select %p186, %s183, 15
      %s188 = smul.addr %s187, 2
      %s189 = smul.addr %s185, 32
      %s190 = sadd.s32 %s188, %s189
      %s191 = smul.addr %s190, 8
      %s192 = scalar_lea.vmem %s3, %s191
      %s193 = smul.u32 16, %s19
      %p194 = scmp.lt.s32.totalorder %s18, 1
      %s195 = scalar_select %p194, %s18, 1
      %p196 = scmp.lt.s32.totalorder %s193, 15
      %s197 = scalar_select %p196, %s193, 15
      %s198 = smul.addr %s197, 2
      %s199 = smul.addr %s195, 32
      %s200 = sadd.s32 %s198, %s199
      %s201 = smul.addr %s200, 8
      %s202 = scalar_lea.vmem %s0, %s201
      %s203 = smul.u32 16, %s19
      %s204 = smul.u32 16, %s19
      %p205 = scmp.lt.s32.totalorder %s18, 1
      %s206 = scalar_select %p205, %s18, 1
      %p207 = scmp.lt.s32.totalorder %s204, 15
      %s208 = scalar_select %p207, %s204, 15
      %s209 = smul.addr %s208, 2
      %s210 = smul.addr %s206, 32
      %s211 = sadd.s32 %s209, %s210
      %s212 = smul.addr %s211, 8
      %s213 = scalar_lea.vmem %s3, %s212
      %s214 = smul.u32 16, %s19
      %v215 = vld [vmem:[%s202] sm:$0xff]
      %v216 = vld [vmem:[%s202 + $0x8] sm:$0xff]
      %v217 = vld [vmem:[%s202 + $0x10] sm:$0xff]
      %v218 = vld [vmem:[%s202 + $0x18] sm:$0xff]
      %v219 = vld [vmem:[%s202 + $0x20] sm:$0xff]
      %v220 = vld [vmem:[%s202 + $0x28] sm:$0xff]
      %v221 = vld [vmem:[%s202 + $0x30] sm:$0xff]
      %v222 = vld [vmem:[%s202 + $0x38] sm:$0xff]
      %v223 = vld [vmem:[%s202 + $0x40] sm:$0xff]
      %v224 = vld [vmem:[%s202 + $0x48] sm:$0xff]
      %v225 = vld [vmem:[%s202 + $0x50] sm:$0xff]
      %v226 = vld [vmem:[%s202 + $0x58] sm:$0xff]
      %v227 = vld [vmem:[%s202 + $0x60] sm:$0xff]
      %v228 = vld [vmem:[%s202 + $0x68] sm:$0xff]
      %v229 = vld [vmem:[%s202 + $0x70] sm:$0xff]
      %v230 = vld [vmem:[%s202 + $0x78] sm:$0xff]
      %v231 = vld [vmem:[%s202 + $0x80] sm:$0xff]
      %v232 = vld [vmem:[%s202 + $0x88] sm:$0xff]
      %v233 = vld [vmem:[%s202 + $0x90] sm:$0xff]
      %v234 = vld [vmem:[%s202 + $0x98] sm:$0xff]
      %v235 = vld [vmem:[%s202 + $0xa0] sm:$0xff]
      %v236 = vld [vmem:[%s202 + $0xa8] sm:$0xff]
      %v237 = vld [vmem:[%s202 + $0xb0] sm:$0xff]
      %v238 = vld [vmem:[%s202 + $0xb8] sm:$0xff]
      %v239 = vld [vmem:[%s202 + $0xc0] sm:$0xff]
      %v240 = vld [vmem:[%s202 + $0xc8] sm:$0xff]
      %v241 = vld [vmem:[%s202 + $0xd0] sm:$0xff]
      %v242 = vld [vmem:[%s202 + $0xd8] sm:$0xff]
      %v243 = vld [vmem:[%s202 + $0xe0] sm:$0xff]
      %v244 = vld [vmem:[%s202 + $0xe8] sm:$0xff]
      %v245 = vld [vmem:[%s202 + $0xf0] sm:$0xff]
      %v246 = vld [vmem:[%s202 + $0xf8] sm:$0xff]
      %v247 = vld [vmem:[%s1] sm:$0x1]
      %v249 = vlaneseq
      %v250 = vshrl.u32 %v249, 7
      %v251 = vsub.s32 0, %v250
      %v252 = vrot.slane %v247, %v251
      %v254 = vmul.f32 %v215, %v252
      %v255 = vmul.f32 %v216, %v252
      %v256 = vmul.f32 %v217, %v252
      %v257 = vmul.f32 %v218, %v252
      %v258 = vmul.f32 %v219, %v252
      %v259 = vmul.f32 %v220, %v252
      %v260 = vmul.f32 %v221, %v252
      %v261 = vmul.f32 %v222, %v252
      %v262 = vmul.f32 %v223, %v252
      %v263 = vmul.f32 %v224, %v252
      %v264 = vmul.f32 %v225, %v252
      %v265 = vmul.f32 %v226, %v252
      %v266 = vmul.f32 %v227, %v252
      %v267 = vmul.f32 %v228, %v252
      %v268 = vmul.f32 %v229, %v252
      %v269 = vmul.f32 %v230, %v252
      %v270 = vmul.f32 %v231, %v252
      %v271 = vmul.f32 %v232, %v252
      %v272 = vmul.f32 %v233, %v252
      %v273 = vmul.f32 %v234, %v252
      %v274 = vmul.f32 %v235, %v252
      %v275 = vmul.f32 %v236, %v252
      %v276 = vmul.f32 %v237, %v252
      %v277 = vmul.f32 %v238, %v252
      %v278 = vmul.f32 %v239, %v252
      %v279 = vmul.f32 %v240, %v252
      %v280 = vmul.f32 %v241, %v252
      %v281 = vmul.f32 %v242, %v252
      %v282 = vmul.f32 %v243, %v252
      %v283 = vmul.f32 %v244, %v252
      %v284 = vmul.f32 %v245, %v252
      %v285 = vmul.f32 %v246, %v252
      %v286 = vld [vmem:[%s2] sm:$0x1]
      %v288 = vlaneseq
      %v289 = vshrl.u32 %v288, 7
      %v290 = vsub.s32 0, %v289
      %v291 = vrot.slane %v286, %v290
      %v293 = vadd.f32 %v254, %v291
      %v294 = vadd.f32 %v255, %v291
      %v295 = vadd.f32 %v256, %v291
      %v296 = vadd.f32 %v257, %v291
      %v297 = vadd.f32 %v258, %v291
      %v298 = vadd.f32 %v259, %v291
      %v299 = vadd.f32 %v260, %v291
      %v300 = vadd.f32 %v261, %v291
      %v301 = vadd.f32 %v262, %v291
      %v302 = vadd.f32 %v263, %v291
      %v303 = vadd.f32 %v264, %v291
      %v304 = vadd.f32 %v265, %v291
      %v305 = vadd.f32 %v266, %v291
      %v306 = vadd.f32 %v267, %v291
      %v307 = vadd.f32 %v268, %v291
      %v308 = vadd.f32 %v269, %v291
      %v309 = vadd.f32 %v270, %v291
      %v310 = vadd.f32 %v271, %v291
      %v311 = vadd.f32 %v272, %v291
      %v312 = vadd.f32 %v273, %v291
      %v313 = vadd.f32 %v274, %v291
      %v314 = vadd.f32 %v275, %v291
      %v315 = vadd.f32 %v276, %v291
      %v316 = vadd.f32 %v277, %v291
      %v317 = vadd.f32 %v278, %v291
      %v318 = vadd.f32 %v279, %v291
      %v319 = vadd.f32 %v280, %v291
      %v320 = vadd.f32 %v281, %v291
      %v321 = vadd.f32 %v282, %v291
      %v322 = vadd.f32 %v283, %v291
      %v323 = vadd.f32 %v284, %v291
      %v324 = vadd.f32 %v285, %v291
      %v325 = vmax.f32 %v293, 0.0
      %v326 = vmax.f32 %v294, 0.0
      %v327 = vmax.f32 %v295, 0.0
      %v328 = vmax.f32 %v296, 0.0
      %v329 = vmax.f32 %v297, 0.0
      %v330 = vmax.f32 %v298, 0.0
      %v331 = vmax.f32 %v299, 0.0
      %v332 = vmax.f32 %v300, 0.0
      %v333 = vmax.f32 %v301, 0.0
      %v334 = vmax.f32 %v302, 0.0
      %v335 = vmax.f32 %v303, 0.0
      %v336 = vmax.f32 %v304, 0.0
      %v337 = vmax.f32 %v305, 0.0
      %v338 = vmax.f32 %v306, 0.0
      %v339 = vmax.f32 %v307, 0.0
      %v340 = vmax.f32 %v308, 0.0
      %v341 = vmax.f32 %v309, 0.0
      %v342 = vmax.f32 %v310, 0.0
      %v343 = vmax.f32 %v311, 0.0
      %v344 = vmax.f32 %v312, 0.0
      %v345 = vmax.f32 %v313, 0.0
      %v346 = vmax.f32 %v314, 0.0
      %v347 = vmax.f32 %v315, 0.0
      %v348 = vmax.f32 %v316, 0.0
      %v349 = vmax.f32 %v317, 0.0
      %v350 = vmax.f32 %v318, 0.0
      %v351 = vmax.f32 %v319, 0.0
      %v352 = vmax.f32 %v320, 0.0
      %v353 = vmax.f32 %v321, 0.0
      %v354 = vmax.f32 %v322, 0.0
      %v355 = vmax.f32 %v323, 0.0
      %v356 = vmax.f32 %v324, 0.0
      %357 = vst [vmem:[%s213] sm:$0xff] %v325
      %358 = vst [vmem:[%s213 + $0x8] sm:$0xff] %v326
      %359 = vst [vmem:[%s213 + $0x10] sm:$0xff] %v327
      %360 = vst [vmem:[%s213 + $0x18] sm:$0xff] %v328
      %361 = vst [vmem:[%s213 + $0x20] sm:$0xff] %v329
      %362 = vst [vmem:[%s213 + $0x28] sm:$0xff] %v330
      %363 = vst [vmem:[%s213 + $0x30] sm:$0xff] %v331
      %364 = vst [vmem:[%s213 + $0x38] sm:$0xff] %v332
      %365 = vst [vmem:[%s213 + $0x40] sm:$0xff] %v333
      %366 = vst [vmem:[%s213 + $0x48] sm:$0xff] %v334
      %367 = vst [vmem:[%s213 + $0x50] sm:$0xff] %v335
      %368 = vst [vmem:[%s213 + $0x58] sm:$0xff] %v336
      %369 = vst [vmem:[%s213 + $0x60] sm:$0xff] %v337
      %370 = vst [vmem:[%s213 + $0x68] sm:$0xff] %v338
      %371 = vst [vmem:[%s213 + $0x70] sm:$0xff] %v339
      %372 = vst [vmem:[%s213 + $0x78] sm:$0xff] %v340
      %373 = vst [vmem:[%s213 + $0x80] sm:$0xff] %v341
      %374 = vst [vmem:[%s213 + $0x88] sm:$0xff] %v342
      %375 = vst [vmem:[%s213 + $0x90] sm:$0xff] %v343
      %376 = vst [vmem:[%s213 + $0x98] sm:$0xff] %v344
      %377 = vst [vmem:[%s213 + $0xa0] sm:$0xff] %v345
      %378 = vst [vmem:[%s213 + $0xa8] sm:$0xff] %v346
      %379 = vst [vmem:[%s213 + $0xb0] sm:$0xff] %v347
      %380 = vst [vmem:[%s213 + $0xb8] sm:$0xff] %v348
      %381 = vst [vmem:[%s213 + $0xc0] sm:$0xff] %v349
      %382 = vst [vmem:[%s213 + $0xc8] sm:$0xff] %v350
      %383 = vst [vmem:[%s213 + $0xd0] sm:$0xff] %v351
      %384 = vst [vmem:[%s213 + $0xd8] sm:$0xff] %v352
      %385 = vst [vmem:[%s213 + $0xe0] sm:$0xff] %v353
      %386 = vst [vmem:[%s213 + $0xe8] sm:$0xff] %v354
      %387 = vst [vmem:[%s213 + $0xf0] sm:$0xff] %v355
      %388 = vst [vmem:[%s213 + $0xf8] sm:$0xff] %v356
      %s389 = smul.u32 16, %s19
      %p390 = scmp.lt.s32.totalorder %s18, 1
      %s391 = scalar_select %p390, %s18, 1
      %p392 = scmp.lt.s32.totalorder %s389, 15
      %s393 = scalar_select %p392, %s389, 15
      %s394 = smul.addr %s393, 2
      %s395 = smul.addr %s391, 32
      %s396 = sadd.s32 %s394, %s395
      %s397 = smul.addr %s396, 8
      %s398 = scalar_lea.vmem %s3, %s397
      // Predicated region
      $region33: #{conv_batch_norm.3} parent=31 // pred_check
        %p399 = pneg %p116
      $region34: #{conv_batch_norm.3} parent=31 // pred_check_branch
        %401 = sbr.rel (%p399) target = $region36
      $region35: #{conv_batch_norm.3} parent=31 // pred_region
        %s402 = smul.u32 16, %s19
      $region36: #{conv_batch_norm.3} parent=31 // pred_fallthru
        _
    $region32: #{conv_batch_norm.3} parent=5 // pred_fallthru
      _
    %p403 = scmp.le.s32.totalorder 2, %s9
    // Predicated region
    $region37: #{conv_batch_norm.3} parent=5 // pred_check
      %p404 = pneg %p403
    $region38: #{conv_batch_norm.3} parent=5 // pred_check_branch
      %406 = sbr.rel (%p404) target = $region40
    $region39: #{conv_batch_norm.3} parent=5 // pred_region
      %s407 = ssub.s32 %s9, 2
      // Predicated region
      $region41: #{conv_batch_norm.3} parent=39 // pred_check
        %p408 = pneg %p122
      $region42: #{conv_batch_norm.3} parent=39 // pred_check_branch
        %410 = sbr.rel (%p408) target = $region44
      $region43: #{conv_batch_norm.3} parent=39 // pred_region
        %s411 = smul.u32 16, %s21
        %p412 = scmp.lt.s32.totalorder %s20, 1
        %s413 = scalar_select %p412, %s20, 1
        %p414 = scmp.lt.s32.totalorder %s411, 15
        %s415 = scalar_select %p414, %s411, 15
        %s416 = smul.addr %s415, 2
        %s417 = smul.addr %s413, 32
        %s418 = sadd.s32 %s416, %s417
        %s419 = smul.addr %s418, 8
        %s420 = scalar_lea.vmem %s3, %s419
      $region44: #{conv_batch_norm.3} parent=39 // pred_fallthru
        _
    $region40: #{conv_batch_norm.3} parent=5 // pred_fallthru
      _
  $region6: #{conv_batch_norm.3} parent=0 // loop_footer
    %s13 = sadd.s32 1, %s9
  $region7: #{conv_batch_norm.3} parent=0 // loop_footer_branch
    %8 = sbr.rel target = $region3
  $region8: #{conv_batch_norm.3} parent=0 // loop_exit
    _

// kernel: conv_batch_norm.2
$region0: #{conv_batch_norm.2}
  #allocation0 [shape = 'u32[]', space=smem, size = 0x4, offset = 0x4, fixed_abs, tag = 'smem constant byte address 0x4 - core index']
  #allocation1 [shape = 'u32[144,128]{1,0:T(1,128)}', space=vmem, size = 0x12000, scoped, tag = 'internal scratch']
  %s0 = inlined_call_operand.vmem [shape: bf16[2,1,18,18,4], index: 0, kind: input, shape index: {}]
  %s1 = inlined_call_operand.vmem [shape: bf16[9,4,128], index: 1, kind: input, shape index: {}]
  %s2 = inlined_call_operand.vmem [shape: f32[2,16,16,128], index: 2, kind: output, shape index: {0}]
  %s3 = inlined_call_operand.vmem [shape: f32[2,1,2,128], index: 3, kind: output, shape index: {1}]
  %4 = xla_tuple %s2, %s3
  %s5 = sld [smem:[#allocation0]]
  $region49: #{conv_batch_norm.2} parent=0
    _
  %s7 = ssub.s32 1, %s5
  %s8 = scalar_select 0, %s7, %s5
  loop: start=0, step=1, limit=4
  $region2: #{conv_batch_norm.2} parent=0 // loop_pre_header
    _
  $region3: #{conv_batch_norm.2} parent=0 // loop_header
    %s10 = sphi 0, %s14
    %p11 = scmp.ge.s32.totalorder %s10, 4
    %s17 = sphi 0, %s29
    %s18 = sphi 0, %s25
    %s19 = sphi 0, %s17
    %s20 = sphi 0, %s18
    %s21 = sphi 0, %s19
    %s22 = sphi 0, %s20
    %s34 = sphi 0, %s36
    %s37 = sphi 0, %s34
    %s38 = sphi 0, %s37
    %s54 = sphi 0, %s38
    %s58 = sphi 0, %s58
    %s60 = sphi 0, %s58
    %s61 = sphi 0, %s60
    %s75 = sphi 0, %s61
    %s83 = sphi 0, %s85
    %s86 = sphi 0, %s83
    %s87 = sphi 0, %s86
    %s103 = sphi 0, %s87
    %s111 = sphi 0, %s113
    %s114 = sphi 0, %s111
    %s115 = sphi 0, %s114
    %s131 = sphi 0, %s115
  $region4: #{conv_batch_norm.2} parent=0 // loop_header_branch
    %13 = sbr.rel (%p11) target = $region8
  $region5: #{conv_batch_norm.2} parent=0 // loop_body
    %s15 = ssub.s32 %s10, 1
    %s16 = ssub.s32 %s10, 2
    %s23 = sadd.s32 1, %s18
    %p24 = scmp.ge.s32.totalorder %s23, 1
    %s25 = scalar_select %p24, 0, %s23
    %s26 = sadd.s32 1, %s17
    %s27 = scalar_select %p24, %s26, %s17
    %p28 = scmp.ge.s32.totalorder %s27, 2
    %s29 = scalar_select %p28, 0, %s27
    %s30 = ssub.s32 %s17, %s29
    %s31 = ssub.s32 %s18, %s25
    %s32 = sor.u32 %s30, %s31
    %p33 = scmp.eq.s32.totalorder %s32, 0
    %s35 = sadd.s32 %s34, 1
    %s36 = scalar_select %p33, %s34, %s35
    %p39 = pneg %p33
    %p40 = scmp.eq.s32.totalorder %s10, 1
    %p41 = por %p39, %p40
    %p42 = scmp.ne.s32.totalorder %s34, %s37
    %p43 = scmp.eq.s32.totalorder %s10, 0
    %p44 = por %p42, %p43
    %p45 = scmp.ne.s32.totalorder %s34, %s37
    %p46 = scmp.eq.s32.totalorder %s15, 1
    %p47 = por %p45, %p46
    %p48 = scmp.ne.s32.totalorder %s37, %s38
    %p49 = scmp.eq.s32.totalorder %s15, 0
    %p50 = por %p48, %p49
    %p51 = scmp.ne.s32.totalorder %s37, %s38
    %p52 = scmp.eq.s32.totalorder %s16, 1
    %p53 = por %p51, %p52
    %p55 = scmp.ne.s32.totalorder %s38, %s54
    %p56 = scmp.eq.s32.totalorder %s16, 0
    %p57 = por %p55, %p56
    %s59 = sadd.s32 %s58, 1
    %p62 = scmp.eq.s32.totalorder %s10, 1
    %p63 = scmp.ne.s32.totalorder %s58, %s60
    %p64 = scmp.eq.s32.totalorder %s10, 0
    %p65 = por %p63, %p64
    %p66 = scmp.ne.s32.totalorder %s58, %s60
    %p67 = scmp.eq.s32.totalorder %s15, 1
    %p68 = por %p66, %p67
    %p69 = scmp.ne.s32.totalorder %s60, %s61
    %p70 = scmp.eq.s32.totalorder %s15, 0
    %p71 = por %p69, %p70
    %p72 = scmp.ne.s32.totalorder %s60, %s61
    %p73 = scmp.eq.s32.totalorder %s16, 1
    %p74 = por %p72, %p73
    %p76 = scmp.ne.s32.totalorder %s61, %s75
    %p77 = scmp.eq.s32.totalorder %s16, 0
    %p78 = por %p76, %p77
    %s79 = ssub.s32 %s17, %s29
    %s80 = ssub.s32 %s18, %s25
    %s81 = sor.u32 %s79, %s80
    %p82 = scmp.eq.s32.totalorder %s81, 0
    %s84 = sadd.s32 %s83, 1
    %s85 = scalar_select %p82, %s83, %s84
    %p88 = pneg %p82
    %p89 = scmp.eq.s32.totalorder %s10, 1
    %p90 = por %p88, %p89
    %p91 = scmp.ne.s32.totalorder %s83, %s86
    %p92 = scmp.eq.s32.totalorder %s10, 0
    %p93 = por %p91, %p92
    %p94 = scmp.ne.s32.totalorder %s83, %s86
    %p95 = scmp.eq.s32.totalorder %s15, 1
    %p96 = por %p94, %p95
    %p97 = scmp.ne.s32.totalorder %s86, %s87
    %p98 = scmp.eq.s32.totalorder %s15, 0
    %p99 = por %p97, %p98
    %p100 = scmp.ne.s32.totalorder %s86, %s87
    %p101 = scmp.eq.s32.totalorder %s16, 1
    %p102 = por %p100, %p101
    %p104 = scmp.ne.s32.totalorder %s87, %s103
    %p105 = scmp.eq.s32.totalorder %s16, 0
    %p106 = por %p104, %p105
    %s107 = ssub.s32 %s17, %s29
    %s108 = ssub.s32 %s18, %s25
    %s109 = sor.u32 %s107, %s108
    %p110 = scmp.eq.s32.totalorder %s109, 0
    %s112 = sadd.s32 %s111, 1
    %s113 = scalar_select %p110, %s111, %s112
    %p116 = pneg %p110
    %p117 = scmp.eq.s32.totalorder %s10, 1
    %p118 = por %p116, %p117
    %p119 = scmp.ne.s32.totalorder %s111, %s114
    %p120 = scmp.eq.s32.totalorder %s10, 0
    %p121 = por %p119, %p120
    %p122 = scmp.ne.s32.totalorder %s111, %s114
    %p123 = scmp.eq.s32.totalorder %s15, 1
    %p124 = por %p122, %p123
    %p125 = scmp.ne.s32.totalorder %s114, %s115
    %p126 = scmp.eq.s32.totalorder %s15, 0
    %p127 = por %p125, %p126
    %p128 = scmp.ne.s32.totalorder %s114, %s115
    %p129 = scmp.eq.s32.totalorder %s16, 1
    %p130 = por %p128, %p129
    %p132 = scmp.ne.s32.totalorder %s115, %s131
    %p133 = scmp.eq.s32.totalorder %s16, 0
    %p134 = por %p132, %p133
    %p135 = scmp.le.s32.totalorder 1, %s10
    %p136 = scmp.lt.s32.totalorder %s10, 3
    %p137 = pnand %p135, %p136
    %p138 = pneg %p137
    // Predicated region
    $region9: #{conv_batch_norm.2} parent=5 // pred_check
      _
    $region10: #{conv_batch_norm.2} parent=5 // pred_check_branch
      %140 = sbr.rel (%p137) target = $region12
    $region11: #{conv_batch_norm.2} parent=5 // pred_region
      %s141 = ssub.s32 %s10, 1
      // Predicated region
      $region13: #{conv_batch_norm.2} parent=11 // pred_check
        %p142 = pneg %p71
      $region14: #{conv_batch_norm.2} parent=11 // pred_check_branch
        %144 = sbr.rel (%p142) target = $region16
      $region15: #{conv_batch_norm.2} parent=11 // pred_region
        _
      $region16: #{conv_batch_norm.2} parent=11 // pred_fallthru
        _
    $region12: #{conv_batch_norm.2} parent=5 // pred_fallthru
      _
    %p145 = scmp.lt.s32.totalorder %s10, 2
    // Predicated region
    $region17: #{conv_batch_norm.2} parent=5 // pred_check
      %p146 = pneg %p145
    $region18: #{conv_batch_norm.2} parent=5 // pred_check_branch
      %148 = sbr.rel (%p146) target = $region20
    $region19: #{conv_batch_norm.2} parent=5 // pred_region
      // Predicated region
      $region21: #{conv_batch_norm.2} parent=19 // pred_check
        %p149 = pneg %p44
      $region22: #{conv_batch_norm.2} parent=19 // pred_check_branch
        %151 = sbr.rel (%p149) target = $region24
      $region23: #{conv_batch_norm.2} parent=19 // pred_region
        %p152 = scmp.lt.s32.totalorder %s17, 1
        %s153 = scalar_select %p152, %s17, 1
        %p154 = scmp.lt.s32.totalorder %s18, 0
        %s155 = scalar_select %p154, %s18, 0
        %s156 = smul.addr %s155, 54
        %s157 = smul.addr %s153, 54
        %s158 = sadd.s32 %s156, %s157
        %s159 = smul.addr %s158, 4
        %s160 = scalar_lea.vmem %s0, %s159
      $region24: #{conv_batch_norm.2} parent=19 // pred_fallthru
        _
    $region20: #{conv_batch_norm.2} parent=5 // pred_fallthru
      _
    %p161 = scmp.le.s32.totalorder 1, %s10
    %p162 = scmp.lt.s32.totalorder %s10, 3
    %p163 = pnand %p161, %p162
    %p164 = pneg %p163
    // Predicated region
    $region25: #{conv_batch_norm.2} parent=5 // pred_check
      _
    $region26: #{conv_batch_norm.2} parent=5 // pred_check_branch
      %166 = sbr.rel (%p163) target = $region28
    $region27: #{conv_batch_norm.2} parent=5 // pred_region
      %s167 = ssub.s32 %s10, 1
      %p168 = scmp.lt.s32.totalorder %s19, 1
      %s169 = scalar_select %p168, %s19, 1
      %p170 = scmp.lt.s32.totalorder %s20, 0
      %s171 = scalar_select %p170, %s20, 0
      %s172 = smul.addr %s171, 54
      %s173 = smul.addr %s169, 54
      %s174 = sadd.s32 %s172, %s173
      %s175 = smul.addr %s174, 4
      %s176 = scalar_lea.vmem %s0, %s175
      %p177 = pneg %p50
      %p178 = pneg %p47
      %p179 = pneg %p71
      %p180 = pneg %p68
      %p181 = pneg %p99
      %p182 = pneg %p96
      %s183 = smul.u32 16, %s20
      %p184 = scmp.lt.s32.totalorder %s19, 1
      %s185 = scalar_select %p184, %s19, 1
      %p186 = scmp.lt.s32.totalorder %s183, 15
      %s187 = scalar_select %p186, %s183, 15
      %s188 = smul.addr %s187, 2
      %s189 = smul.addr %s185, 32
      %s190 = sadd.s32 %s188, %s189
      %s191 = smul.addr %s190, 8
      %s192 = scalar_lea.vmem %s2, %s191
      %p193 = pneg %p127
      %p194 = pneg %p124
      %p195 = scmp.lt.s32.totalorder %s19, 1
      %s196 = scalar_select %p195, %s19, 1
      %p197 = scmp.lt.s32.totalorder %s20, 0
      %s198 = scalar_select %p197, %s20, 0
      %s199 = sadd.s32 %s198, %s196
      %s200 = smul.addr %s199, 2
      %s201 = scalar_lea.vmem %s3, %s200
      %p202 = scmp.lt.s32.totalorder %s19, 1
      %s203 = scalar_select %p202, %s19, 1
      %p204 = scmp.lt.s32.totalorder %s20, 0
      %s205 = scalar_select %p204, %s20, 0
      %s206 = smul.addr %s205, 54
      %s207 = smul.addr %s203, 54
      %s208 = sadd.s32 %s206, %s207
      %s209 = smul.addr %s208, 4
      %s210 = scalar_lea.vmem %s0, %s209
      %s211 = smul.u32 16, %s20
      %p212 = scmp.lt.s32.totalorder %s19, 1
      %s213 = scalar_select %p212, %s19, 1
      %p214 = scmp.lt.s32.totalorder %s211, 15
      %s215 = scalar_select %p214, %s211, 15
      %s216 = smul.addr %s215, 2
      %s217 = smul.addr %s213, 32
      %s218 = sadd.s32 %s216, %s217
      %s219 = smul.addr %s218, 8
      %s220 = scalar_lea.vmem %s2, %s219
      %s221 = smul.u32 16, %s20
      %p222 = scmp.lt.s32.totalorder %s19, 1
      %s223 = scalar_select %p222, %s19, 1
      %p224 = scmp.lt.s32.totalorder %s20, 0
      %s225 = scalar_select %p224, %s20, 0
      %s226 = sadd.s32 %s225, %s223
      %s227 = smul.addr %s226, 2
      %s228 = scalar_lea.vmem %s3, %s227
      %v230 = vld [vmem:[%s210] sm:$0xf]
      %v231 = vld [vmem:[%s210 + $0x4] sm:$0xf]
      %v232 = vld [vmem:[%s210 + $0x8] sm:$0x1]
      %v233 = vld [vmem:[%s210 + $0xc] sm:$0xf]
      %v234 = vld [vmem:[%s210 + $0x10] sm:$0xf]
      %v235 = vld [vmem:[%s210 + $0x14] sm:$0x1]
      %v236 = vld [vmem:[%s210 + $0x18] sm:$0xf]
      %v237 = vld [vmem:[%s210 + $0x1c] sm:$0xf]
      %v238 = vld [vmem:[%s210 + $0x20] sm:$0x1]
      %v239 = vld [vmem:[%s210 + $0x24] sm:$0xf]
      %v240 = vld [vmem:[%s210 + $0x28] sm:$0xf]
      %v241 = vld [vmem:[%s210 + $0x2c] sm:$0x1]
      %v242 = vld [vmem:[%s210 + $0x30] sm:$0xf]
      %v243 = vld [vmem:[%s210 + $0x34] sm:$0xf]
      %v244 = vld [vmem:[%s210 + $0x38] sm:$0x1]
      %v245 = vld [vmem:[%s210 + $0x3c] sm:$0xf]
      %v246 = vld [vmem:[%s210 + $0x40] sm:$0xf]
      %v247 = vld [vmem:[%s210 + $0x44] sm:$0x1]
      %v248 = vld [vmem:[%s210 + $0x48] sm:$0xf]
      %v249 = vld [vmem:[%s210 + $0x4c] sm:$0xf]
      %v250 = vld [vmem:[%s210 + $0x50] sm:$0x1]
      %v251 = vld [vmem:[%s210 + $0x54] sm:$0xf]
      %v252 = vld [vmem:[%s210 + $0x58] sm:$0xf]
      %v253 = vld [vmem:[%s210 + $0x5c] sm:$0x1]
      %v254 = vld [vmem:[%s210 + $0x60] sm:$0xf]
      %v255 = vld [vmem:[%s210 + $0x64] sm:$0xf]
      %v256 = vld [vmem:[%s210 + $0x68] sm:$0x1]
      %v257 = vld [vmem:[%s210 + $0x6c] sm:$0xf]
      %v258 = vld [vmem:[%s210 + $0x70] sm:$0xf]
      %v259 = vld [vmem:[%s210 + $0x74] sm:$0x1]
      %v260 = vld [vmem:[%s210 + $0x78] sm:$0xf]
      %v261 = vld [vmem:[%s210 + $0x7c] sm:$0xf]
      %v262 = vld [vmem:[%s210 + $0x80] sm:$0x1]
      %v263 = vld [vmem:[%s210 + $0x84] sm:$0xf]
      %v264 = vld [vmem:[%s210 + $0x88] sm:$0xf]
      %v265 = vld [vmem:[%s210 + $0x8c] sm:$0x1]
      %v266 = vld [vmem:[%s210 + $0x90] sm:$0xf]
      %v267 = vld [vmem:[%s210 + $0x94] sm:$0xf]
      %v268 = vld [vmem:[%s210 + $0x98] sm:$0x1]
      %v269 = vld [vmem:[%s210 + $0x9c] sm:$0xf]
      %v270 = vld [vmem:[%s210 + $0xa0] sm:$0xf]
      %v271 = vld [vmem:[%s210 + $0xa4] sm:$0x1]
      %v272 = vld [vmem:[%s210 + $0xa8] sm:$0xf]
      %v273 = vld [vmem:[%s210 + $0xac] sm:$0xf]
      %v274 = vld [vmem:[%s210 + $0xb0] sm:$0x1]
      %v275 = vld [vmem:[%s210 + $0xb4] sm:$0xf]
      %v276 = vld [vmem:[%s210 + $0xb8] sm:$0xf]
      %v277 = vld [vmem:[%s210 + $0xbc] sm:$0x1]
      %v278 = vld [vmem:[%s210 + $0xc0] sm:$0xf]
      %v279 = vld [vmem:[%s210 + $0xc4] sm:$0xf]
      %v280 = vld [vmem:[%s210 + $0xc8] sm:$0x1]
      %v281 = vld [vmem:[%s210 + $0xcc] sm:$0xf]
      %v282 = vld [vmem:[%s210 + $0xd0] sm:$0xf]
      %v283 = vld [vmem:[%s210 + $0xd4] sm:$0x1]
      %v284 = vld [vmem:[%s1] sm:$0x3]
      %v285 = vld [vmem:[%s1 + $0x2] sm:$0x3]
      %v286 = vld [vmem:[%s1 + $0x4] sm:$0x3]
      %v287 = vld [vmem:[%s1 + $0x6] sm:$0x3]
      %v288 = vld [vmem:[%s1 + $0x8] sm:$0x3]
      %v289 = vld [vmem:[%s1 + $0xa] sm:$0x3]
      %v290 = vld [vmem:[%s1 + $0xc] sm:$0x3]
      %v291 = vld [vmem:[%s1 + $0xe] sm:$0x3]
      %v292 = vld [vmem:[%s1 + $0x10] sm:$0x3]
      %vm293 = vsmask.f32 3328
      %vm294 = vsmask.f32 7440
      %vm295 = vmor %vm293, %vm294
      %v297 = vshrl.u32 %v230, 16
      %v299 = vrot.slane %v297, 4
      %v300 = vshll.u32 %v230, 16
      %v302 = vrot.slane %v300, 5
      %v303 = vor.u32 %v299, %v302
      %v304 = vrot.slane %v303, 4
      %v306 = vshll.u32 %v231, 16
      %v308 = vrot.slane %v306, 5
      %v309 = vsel %vm295, %v304, %v308
      %v310 = vshrl.u32 %v231, 16
      %v312 = vrot.slane %v310, 4
      %v313 = vor.u32 %v312, %v308
      %v314 = vrot.slane %v313, 4
      %v316 = vshll.u32 %v232, 16
      %v318 = vrot.slane %v316, 5
      %v319 = vsel %vm295, %v314, %v318
      %v321 = vshrl.u32 %v233, 16
      %v323 = vrot.slane %v321, 4
      %v324 = vshll.u32 %v233, 16
      %v326 = vrot.slane %v324, 5
      %v327 = vor.u32 %v323, %v326
      %v328 = vrot.slane %v327, 4
      %v330 = vshll.u32 %v234, 16
      %v332 = vrot.slane %v330, 5
      %v333 = vsel %vm295, %v328, %v332
      %v334 = vshrl.u32 %v234, 16
      %v336 = vrot.slane %v334, 4
      %v337 = vor.u32 %v336, %v332
      %v338 = vrot.slane %v337, 4
      %v340 = vshll.u32 %v235, 16
      %v342 = vrot.slane %v340, 5
      %v343 = vsel %vm295, %v338, %v342
      %v345 = vshrl.u32 %v236, 16
      %v347 = vrot.slane %v345, 4
      %v348 = vshll.u32 %v236, 16
      %v350 = vrot.slane %v348, 5
      %v351 = vor.u32 %v347, %v350
      %v352 = vrot.slane %v351, 4
      %v354 = vshll.u32 %v237, 16
      %v356 = vrot.slane %v354, 5
      %v357 = vsel %vm295, %v352, %v356
      %v358 = vshrl.u32 %v237, 16
      %v360 = vrot.slane %v358, 4
      %v361 = vor.u32 %v360, %v356
      %v362 = vrot.slane %v361, 4
      %v364 = vshll.u32 %v238, 16
      %v366 = vrot.slane %v364, 5
      %v367 = vsel %vm295, %v362, %v366
      %v369 = vshrl.u32 %v239, 16
      %v371 = vrot.slane %v369, 4
      %v372 = vshll.u32 %v239, 16
      %v374 = vrot.slane %v372, 5
      %v375 = vor.u32 %v371, %v374
      %v376 = vrot.slane %v375, 4
      %v378 = vshll.u32 %v240, 16
      %v380 = vrot.slane %v378, 5
      %v381 = vsel %vm295, %v376, %v380
      %v382 = vshrl.u32 %v240, 16
      %v384 = vrot.slane %v382, 4
      %v385 = vor.u32 %v384, %v380
      %v386 = vrot.slane %v385, 4
      %v388 = vshll.u32 %v241, 16
      %v390 = vrot.slane %v388, 5
      %v391 = vsel %vm295, %v386, %v390
      %v393 = vshrl.u32 %v242, 16
      %v395 = vrot.slane %v393, 4
      %v396 = vshll.u32 %v242, 16
      %v398 = vrot.slane %v396, 5
      %v399 = vor.u32 %v395, %v398
      %v400 = vrot.slane %v399, 4
      %v402 = vshll.u32 %v243, 16
      %v404 = vrot.slane %v402, 5
      %v405 = vsel %vm295, %v400, %v404
      %v406 = vshrl.u32 %v243, 16
      %v408 = vrot.slane %v406, 4
      %v409 = vor.u32 %v408, %v404
      %v410 = vrot.slane %v409, 4
      %v412 = vshll.u32 %v244, 16
      %v414 = vrot.slane %v412, 5
      %v415 = vsel %vm295, %v410, %v414
      %v417 = vshrl.u32 %v245, 16
      %v419 = vrot.slane %v417, 4
      %v420 = vshll.u32 %v245, 16
      %v422 = vrot.slane %v420, 5
      %v423 = vor.u32 %v419, %v422
      %v424 = vrot.slane %v423, 4
      %v426 = vshll.u32 %v246, 16
      %v428 = vrot.slane %v426, 5
      %v429 = vsel %vm295, %v424, %v428
      %v430 = vshrl.u32 %v246, 16
      %v432 = vrot.slane %v430, 4
      %v433 = vor.u32 %v432, %v428
      %v434 = vrot.slane %v433, 4
      %v436 = vshll.u32 %v247, 16
      %v438 = vrot.slane %v436, 5
      %v439 = vsel %vm295, %v434, %v438
      %v441 = vshrl.u32 %v248, 16
      %v443 = vrot.slane %v441, 4
      %v444 = vshll.u32 %v248, 16
      %v446 = vrot.slane %v444, 5
      %v447 = vor.u32 %v443, %v446
      %v448 = vrot.slane %v447, 4
      %v450 = vshll.u32 %v249, 16
      %v452 = vrot.slane %v450, 5
      %v453 = vsel %vm295, %v448, %v452
      %v454 = vshrl.u32 %v249, 16
      %v456 = vrot.slane %v454, 4
      %v457 = vor.u32 %v456, %v452
      %v458 = vrot.slane %v457, 4
      %v460 = vshll.u32 %v250, 16
      %v462 = vrot.slane %v460, 5
      %v463 = vsel %vm295, %v458, %v462
      %v465 = vshrl.u32 %v251, 16
      %v467 = vrot.slane %v465, 4
      %v468 = vshll.u32 %v251, 16
      %v470 = vrot.slane %v468, 5
      %v471 = vor.u32 %v467, %v470
      %v472 = vrot.slane %v471, 4
      %v474 = vshll.u32 %v252, 16
      %v476 = vrot.slane %v474, 5
      %v477 = vsel %vm295, %v472, %v476
      %v478 = vshrl.u32 %v252, 16
      %v480 = vrot.slane %v478, 4
      %v481 = vor.u32 %v480, %v476
      %v482 = vrot.slane %v481, 4
      %v484 = vshll.u32 %v253, 16
      %v486 = vrot.slane %v484, 5
      %v487 = vsel %vm295, %v482, %v486
      %v489 = vshrl.u32 %v254, 16
      %v491 = vrot.slane %v489, 4
      %v492 = vshll.u32 %v254, 16
      %v494 = vrot.slane %v492, 5
      %v495 = vor.u32 %v491, %v494
      %v496 = vrot.slane %v495, 4
      %v498 = vshll.u32 %v255, 16
      %v500 = vrot.slane %v498, 5
      %v501 = vsel %vm295, %v496, %v500
      %v502 = vshrl.u32 %v255, 16
      %v504 = vrot.slane %v502, 4
      %v505 = vor.u32 %v504, %v500
      %v506 = vrot.slane %v505, 4
      %v508 = vshll.u32 %v256, 16
      %v510 = vrot.slane %v508, 5
      %v511 = vsel %vm295, %v506, %v510
      %v513 = vshrl.u32 %v257, 16
      %v515 = vrot.slane %v513, 4
      %v516 = vshll.u32 %v257, 16
      %v518 = vrot.slane %v516, 5
      %v519 = vor.u32 %v515, %v518
      %v520 = vrot.slane %v519, 4
      %v522 = vshll.u32 %v258, 16
      %v524 = vrot.slane %v522, 5
      %v525 = vsel %vm295, %v520, %v524
      %v526 = vshrl.u32 %v258, 16
      %v528 = vrot.slane %v526, 4
      %v529 = vor.u32 %v528, %v524
      %v530 = vrot.slane %v529, 4
      %v532 = vshll.u32 %v259, 16
      %v534 = vrot.slane %v532, 5
      %v535 = vsel %vm295, %v530, %v534
      %v537 = vshrl.u32 %v260, 16
      %v539 = vrot.slane %v537, 4
      %v540 = vshll.u32 %v260, 16
      %v542 = vrot.slane %v540, 5
      %v543 = vor.u32 %v539, %v542
      %v544 = vrot.slane %v543, 4
      %v546 = vshll.u32 %v261, 16
      %v548 = vrot.slane %v546, 5
      %v549 = vsel %vm295, %v544, %v548
      %v550 = vshrl.u32 %v261, 16
      %v552 = vrot.slane %v550, 4
      %v553 = vor.u32 %v552, %v548
      %v554 = vrot.slane %v553, 4
      %v556 = vshll.u32 %v262, 16
      %v558 = vrot.slane %v556, 5
      %v559 = vsel %vm295, %v554, %v558
      %v561 = vshrl.u32 %v263, 16
      %v563 = vrot.slane %v561, 4
      %v564 = vshll.u32 %v263, 16
      %v566 = vrot.slane %v564, 5
      %v567 = vor.u32 %v563, %v566
      %v568 = vrot.slane %v567, 4
      %v570 = vshll.u32 %v264, 16
      %v572 = vrot.slane %v570, 5
      %v573 = vsel %vm295, %v568, %v572
      %v574 = vshrl.u32 %v264, 16
      %v576 = vrot.slane %v574, 4
      %v577 = vor.u32 %v576, %v572
      %v578 = vrot.slane %v577, 4
      %v580 = vshll.u32 %v265, 16
      %v582 = vrot.slane %v580, 5
      %v583 = vsel %vm295, %v578, %v582
      %v585 = vshrl.u32 %v266, 16
      %v587 = vrot.slane %v585, 4
      %v588 = vshll.u32 %v266, 16
      %v590 = vrot.slane %v588, 5
      %v591 = vor.u32 %v587, %v590
      %v592 = vrot.slane %v591, 4
      %v594 = vshll.u32 %v267, 16
      %v596 = vrot.slane %v594, 5
      %v597 = vsel %vm295, %v592, %v596
      %v598 = vshrl.u32 %v267, 16
      %v600 = vrot.slane %v598, 4
      %v601 = vor.u32 %v600, %v596
      %v602 = vrot.slane %v601, 4
      %v604 = vshll.u32 %v268, 16
      %v606 = vrot.slane %v604, 5
      %v607 = vsel %vm295, %v602, %v606
      %v609 = vshrl.u32 %v269, 16
      %v611 = vrot.slane %v609, 4
      %v612 = vshll.u32 %v269, 16
      %v614 = vrot.slane %v612, 5
      %v615 = vor.u32 %v611, %v614
      %v616 = vrot.slane %v615, 4
      %v618 = vshll.u32 %v270, 16
      %v620 = vrot.slane %v618, 5
      %v621 = vsel %vm295, %v616, %v620
      %v622 = vshrl.u32 %v270, 16
      %v624 = vrot.slane %v622, 4
      %v625 = vor.u32 %v624, %v620
      %v626 = vrot.slane %v625, 4
      %v628 = vshll.u32 %v271, 16
      %v630 = vrot.slane %v628, 5
      %v631 = vsel %vm295, %v626, %v630
      %v633 = vshrl.u32 %v272, 16
      %v635 = vrot.slane %v633, 4
      %v636 = vshll.u32 %v272, 16
      %v638 = vrot.slane %v636, 5
      %v639 = vor.u32 %v635, %v638
      %v640 = vrot.slane %v639, 4
      %v642 = vshll.u32 %v273, 16
      %v644 = vrot.slane %v642, 5
      %v645 = vsel %vm295, %v640, %v644
      %v646 = vshrl.u32 %v273, 16
      %v648 = vrot.slane %v646, 4
      %v649 = vor.u32 %v648, %v644
      %v650 = vrot.slane %v649, 4
      %v652 = vshll.u32 %v274, 16
      %v654 = vrot.slane %v652, 5
      %v655 = vsel %vm295, %v650, %v654
      %v657 = vshrl.u32 %v275, 16
      %v659 = vrot.slane %v657, 4
      %v660 = vshll.u32 %v275, 16
      %v662 = vrot.slane %v660, 5
      %v663 = vor.u32 %v659, %v662
      %v664 = vrot.slane %v663, 4
      %v666 = vshll.u32 %v276, 16
      %v668 = vrot.slane %v666, 5
      %v669 = vsel %vm295, %v664, %v668
      %v670 = vshrl.u32 %v276, 16
      %v672 = vrot.slane %v670, 4
      %v673 = vor.u32 %v672, %v668
      %v674 = vrot.slane %v673, 4
      %v676 = vshll.u32 %v277, 16
      %v678 = vrot.slane %v676, 5
      %v679 = vsel %vm295, %v674, %v678
      %v680 = vunpack.c.l.b16 %v309
      %v681 = vunpack.c.l.b16 %v319
      %v682 = vunpack.c.l.b16 %v333
      %v683 = vunpack.c.l.b16 %v343
      %v684 = vunpack.c.l.b16 %v357
      %v685 = vunpack.c.l.b16 %v367
      %v686 = vunpack.c.l.b16 %v381
      %v687 = vunpack.c.l.b16 %v391
      %v688 = vunpack.c.l.b16 %v405
      %v689 = vunpack.c.l.b16 %v415
      %v690 = vunpack.c.l.b16 %v429
      %v691 = vunpack.c.l.b16 %v439
      %v692 = vunpack.c.l.b16 %v453
      %v693 = vunpack.c.l.b16 %v463
      %v694 = vunpack.c.l.b16 %v477
      %v695 = vunpack.c.l.b16 %v487
      %v696 = vunpack.c.l.b16 %v501
      %v697 = vunpack.c.l.b16 %v511
      %v698 = vunpack.c.l.b16 %v525
      %v699 = vunpack.c.l.b16 %v535
      %v700 = vunpack.c.l.b16 %v549
      %v701 = vunpack.c.l.b16 %v559
      %v702 = vunpack.c.l.b16 %v573
      %v703 = vunpack.c.l.b16 %v583
      %v704 = vunpack.c.l.b16 %v597
      %v705 = vunpack.c.l.b16 %v607
      %v706 = vunpack.c.l.b16 %v621
      %v707 = vunpack.c.l.b16 %v631
      %v708 = vunpack.c.l.b16 %v645
      %v709 = vunpack.c.l.b16 %v655
      %v710 = vunpack.c.l.b16 %v669
      %v711 = vunpack.c.l.b16 %v679
      %v712 = vpack.c.b16 %v681, %v680
      %v713 = vpack.c.b16 %v683, %v682
      %v714 = vpack.c.b16 %v685, %v684
      %v715 = vpack.c.b16 %v687, %v686
      %v716 = vpack.c.b16 %v689, %v688
      %v717 = vpack.c.b16 %v691, %v690
      %v718 = vpack.c.b16 %v693, %v692
      %v719 = vpack.c.b16 %v695, %v694
      %v720 = vpack.c.b16 %v697, %v696
      %v721 = vpack.c.b16 %v699, %v698
      %v722 = vpack.c.b16 %v701, %v700
      %v723 = vpack.c.b16 %v703, %v702
      %v724 = vpack.c.b16 %v705, %v704
      %v725 = vpack.c.b16 %v707, %v706
      %v726 = vpack.c.b16 %v709, %v708
      %v727 = vpack.c.b16 %v711, %v710
      %vm728 = vcmask 31744
      %v730 = vsel %vm728, %v712, 0
      %v733 = vsel %vm728, %v713, 0
      %v736 = vsel %vm728, %v714, 0
      %v739 = vsel %vm728, %v715, 0
      %v742 = vsel %vm728, %v716, 0
      %v745 = vsel %vm728, %v717, 0
      %v748 = vsel %vm728, %v718, 0
      %v751 = vsel %vm728, %v719, 0
      %v754 = vsel %vm728, %v720, 0
      %v757 = vsel %vm728, %v721, 0
      %v760 = vsel %vm728, %v722, 0
      %v763 = vsel %vm728, %v723, 0
      %v766 = vsel %vm728, %v724, 0
      %v769 = vsel %vm728, %v725, 0
      %v772 = vsel %vm728, %v726, 0
      %v775 = vsel %vm728, %v727, 0
      %vm777 = vcmask 1041408
      %v779 = vsel %vm777, %v285, 0
      %781 = vmatprep.subr.bf16.mxu0 0
      %782 = vmatpush1.bf16.msra.mxu0 %v779
      %783 = vmatprep.subr.bf16.mxu0 0
      %784 = vmatpush1.bf16.msra.mxu0 0
      %785 = vmatprep.subr.bf16.mxu0 0
      %786 = vmatpush1.bf16.msra.mxu0 0
      %787 = vmatprep.subr.bf16.mxu0 0
      %788 = vmatpush1.bf16.msra.mxu0 0
      %789 = vmatprep.subr.bf16.mxu0 0
      %790 = vmatpush1.bf16.msra.mxu0 0
      %791 = vmatprep.subr.bf16.mxu0 0
      %792 = vmatpush1.bf16.msra.mxu0 0
      %793 = vmatprep.subr.bf16.mxu0 0
      %794 = vmatpush1.bf16.msra.mxu0 0
      %795 = vmatprep.subr.bf16.mxu0 0
      %796 = vmatpush1.bf16.msra.mxu0 0
      %797 = vmatprep.subr.bf16.mxu0 0
      %798 = vmatpush1.bf16.msra.mxu0 0
      %799 = vmatprep.subr.bf16.mxu0 0
      %800 = vmatpush1.bf16.msra.mxu0 0
      %801 = vmatprep.subr.bf16.mxu0 0
      %802 = vmatpush1.bf16.msra.mxu0 0
      %803 = vmatprep.subr.bf16.mxu0 0
      %804 = vmatpush1.bf16.msra.mxu0 0
      %805 = vmatprep.subr.bf16.mxu0 0
      %806 = vmatpush1.bf16.msra.mxu0 0
      %807 = vmatprep.subr.bf16.mxu0 0
      %808 = vmatpush1.bf16.msra.mxu0 0
      %809 = vmatprep.subr.bf16.mxu0 0
      %810 = vmatpush1.bf16.msra.mxu0 0
      %811 = vmatprep.subr.bf16.mxu0 0
      %812 = vmatpush1.bf16.msra.mxu0 0
      %813 = vmatprep.mubr.bf16.mxu0 0
      %814 = vmatmul.mubr.bf16.gmra.mrb[0].mxu0 %v730
      %v815 = vpop.f32.mrb[0].mxu0
      %v816 = vadd.f32 0.0, %v815
      %v817 = vpop.f32.mrb[0].mxu0
      %v818 = vpop.f32.mrb[0].mxu0
      %v819 = vadd.f32 0.0, %v818
      %v820 = vpop.f32.mrb[0].mxu0
      %821 = vmatprep.mubr.bf16.mxu0 0
      %822 = vmatmul.mubr.bf16.gmra.mrb[0].mxu0 %v733
      %v823 = vpop.f32.mrb[0].mxu0
      %v824 = vadd.f32 0.0, %v823
      %v825 = vpop.f32.mrb[0].mxu0
      %v826 = vpop.f32.mrb[0].mxu0
      %v827 = vadd.f32 0.0, %v826
      %v828 = vpop.f32.mrb[0].mxu0
      %829 = vmatprep.mubr.bf16.mxu0 0
      %830 = vmatmul.mubr.bf16.gmra.mrb[0].mxu0 %v736
      %v831 = vpop.f32.mrb[0].mxu0
      %v832 = vadd.f32 0.0, %v831
      %v833 = vpop.f32.mrb[0].mxu0
      %v834 = vpop.f32.mrb[0].mxu0
      %v835 = vadd.f32 0.0, %v834
      %v836 = vpop.f32.mrb[0].mxu0
      %837 = vmatprep.mubr.bf16.mxu0 0
      %838 = vmatmul.mubr.bf16.gmra.mrb[0].mxu0 %v739
      %v839 = vpop.f32.mrb[0].mxu0
      %v840 = vadd.f32 0.0, %v839
      %v841 = vpop.f32.mrb[0].mxu0
      %v842 = vpop.f32.mrb[0].mxu0
      %v843 = vadd.f32 0.0, %v842
      %v844 = vpop.f32.mrb[0].mxu0
      %845 = vmatprep.mubr.bf16.mxu0 0
      %846 = vmatmul.mubr.bf16.gmra.mrb[0].mxu0 %v742
      %v847 = vpop.f32.mrb[0].mxu0
      %v848 = vadd.f32 0.0, %v847
      %v849 = vpop.f32.mrb[0].mxu0
      %v850 = vpop.f32.mrb[0].mxu0
      %v851 = vadd.f32 0.0, %v850
      %v852 = vpop.f32.mrb[0].mxu0
      %853 = vmatprep.mubr.bf16.mxu0 0
      %854 = vmatmul.mubr.bf16.gmra.mrb[0].mxu0 %v745
      %v855 = vpop.f32.mrb[0].mxu0
      %v856 = vadd.f32 0.0, %v855
      %v857 = vpop.f32.mrb[0].mxu0
      %v858 = vpop.f32.mrb[0].mxu0
      %v859 = vadd.f32 0.0, %v858
      %v860 = vpop.f32.mrb[0].mxu0
      %861 = vmatprep.mubr.bf16.mxu0 0
      %862 = vmatmul.mubr.bf16.gmra.mrb[0].mxu0 %v748
      %v863 = vpop.f32.mrb[0].mxu0
      %v864 = vadd.f32 0.0, %v863
      %v865 = vpop.f32.mrb[0].mxu0
      %v866 = vpop.f32.mrb[0].mxu0
      %v867 = vadd.f32 0.0, %v866
      %v868 = vpop.f32.mrb[0].mxu0
      %869 = vmatprep.mubr.bf16.mxu0 0
      %870 = vmatmul.mubr.bf16.gmra.mrb[0].mxu0 %v751
      %v871 = vpop.f32.mrb[0].mxu0
      %v872 = vadd.f32 0.0, %v871
      %v873 = vpop.f32.mrb[0].mxu0
      %v874 = vpop.f32.mrb[0].mxu0
      %v875 = vadd.f32 0.0, %v874
      %v876 = vpop.f32.mrb[0].mxu0
      %877 = vmatprep.mubr.bf16.mxu0 0
      %878 = vmatmul.mubr.bf16.gmra.mrb[0].mxu0 %v754
      %v879 = vpop.f32.mrb[0].mxu0
      %v880 = vadd.f32 0.0, %v879
      %v881 = vpop.f32.mrb[0].mxu0
      %v882 = vpop.f32.mrb[0].mxu0
      %v883 = vadd.f32 0.0, %v882
      %v884 = vpop.f32.mrb[0].mxu0
      %885 = vmatprep.mubr.bf16.mxu0 0
      %886 = vmatmul.mubr.bf16.gmra.mrb[0].mxu0 %v757
      %v887 = vpop.f32.mrb[0].mxu0
      %v888 = vadd.f32 0.0, %v887
      %v889 = vpop.f32.mrb[0].mxu0
      %v890 = vpop.f32.mrb[0].mxu0
      %v891 = vadd.f32 0.0, %v890
      %v892 = vpop.f32.mrb[0].mxu0
      %893 = vmatprep.mubr.bf16.mxu0 0
      %894 = vmatmul.mubr.bf16.gmra.mrb[0].mxu0 %v760
      %v895 = vpop.f32.mrb[0].mxu0
      %v896 = vadd.f32 0.0, %v895
      %v897 = vpop.f32.mrb[0].mxu0
      %v898 = vpop.f32.mrb[0].mxu0
      %v899 = vadd.f32 0.0, %v898
      %v900 = vpop.f32.mrb[0].mxu0
      %901 = vmatprep.mubr.bf16.mxu0 0
      %902 = vmatmul.mubr.bf16.gmra.mrb[0].mxu0 %v763
      %v903 = vpop.f32.mrb[0].mxu0
      %v904 = vadd.f32 0.0, %v903
      %v905 = vpop.f32.mrb[0].mxu0
      %v906 = vpop.f32.mrb[0].mxu0
      %v907 = vadd.f32 0.0, %v906
      %v908 = vpop.f32.mrb[0].mxu0
      %909 = vmatprep.mubr.bf16.mxu0 0
      %910 = vmatmul.mubr.bf16.gmra.mrb[0].mxu0 %v766
      %v911 = vpop.f32.mrb[0].mxu0
      %v912 = vadd.f32 0.0, %v911
      %v913 = vpop.f32.mrb[0].mxu0
      %v914 = vpop.f32.mrb[0].mxu0
      %v915 = vadd.f32 0.0, %v914
      %v916 = vpop.f32.mrb[0].mxu0
      %917 = vmatprep.mubr.bf16.mxu0 0
      %918 = vmatmul.mubr.bf16.gmra.mrb[0].mxu0 %v769
      %v919 = vpop.f32.mrb[0].mxu0
      %v920 = vadd.f32 0.0, %v919
      %v921 = vpop.f32.mrb[0].mxu0
      %v922 = vpop.f32.mrb[0].mxu0
      %v923 = vadd.f32 0.0, %v922
      %v924 = vpop.f32.mrb[0].mxu0
      %925 = vmatprep.mubr.bf16.mxu0 0
      %926 = vmatmul.mubr.bf16.gmra.mrb[0].mxu0 %v772
      %v927 = vpop.f32.mrb[0].mxu0
      %v928 = vadd.f32 0.0, %v927
      %v929 = vpop.f32.mrb[0].mxu0
      %v930 = vpop.f32.mrb[0].mxu0
      %v931 = vadd.f32 0.0, %v930
      %v932 = vpop.f32.mrb[0].mxu0
      %933 = vmatprep.mubr.bf16.mxu0 0
      %934 = vmatmul.mubr.bf16.gmra.mrb[0].mxu0 %v775
      %v935 = vpop.f32.mrb[0].mxu0
      %v936 = vadd.f32 0.0, %v935
      %v937 = vpop.f32.mrb[0].mxu0
      %v938 = vpop.f32.mrb[0].mxu0
      %v939 = vadd.f32 0.0, %v938
      %v940 = vpop.f32.mrb[0].mxu0
      %941 = vdwg.mxu0
      %v974 = vunpack.c.l.b16 %v230
      %v975 = vunpack.c.l.b16 %v231
      %v976 = vunpack.c.l.b16 %v233
      %v977 = vunpack.c.l.b16 %v234
      %v978 = vunpack.c.l.b16 %v236
      %v979 = vunpack.c.l.b16 %v237
      %v980 = vunpack.c.l.b16 %v239
      %v981 = vunpack.c.l.b16 %v240
      %v982 = vunpack.c.l.b16 %v242
      %v983 = vunpack.c.l.b16 %v243
      %v984 = vunpack.c.l.b16 %v245
      %v985 = vunpack.c.l.b16 %v246
      %v986 = vunpack.c.l.b16 %v248
      %v987 = vunpack.c.l.b16 %v249
      %v988 = vunpack.c.l.b16 %v251
      %v989 = vunpack.c.l.b16 %v252
      %v990 = vunpack.c.l.b16 %v254
      %v991 = vunpack.c.l.b16 %v255
      %v992 = vunpack.c.l.b16 %v257
      %v993 = vunpack.c.l.b16 %v258
      %v994 = vunpack.c.l.b16 %v260
      %v995 = vunpack.c.l.b16 %v261
      %v996 = vunpack.c.l.b16 %v263
      %v997 = vunpack.c.l.b16 %v264
      %v998 = vunpack.c.l.b16 %v266
      %v999 = vunpack.c.l.b16 %v267
      %v1000 = vunpack.c.l.b16 %v269
      %v1001 = vunpack.c.l.b16 %v270
      %v1002 = vunpack.c.l.b16 %v272
      %v1003 = vunpack.c.l.b16 %v273
      %v1004 = vunpack.c.l.b16 %v275
      %v1005 = vunpack.c.l.b16 %v276
      %v1006 = vpack.c.b16 %v975, %v974
      %v1007 = vpack.c.b16 %v977, %v976
      %v1008 = vpack.c.b16 %v979, %v978
      %v1009 = vpack.c.b16 %v981, %v980
      %v1010 = vpack.c.b16 %v983, %v982
      %v1011 = vpack.c.b16 %v985, %v984
      %v1012 = vpack.c.b16 %v987, %v986
      %v1013 = vpack.c.b16 %v989, %v988
      %v1014 = vpack.c.b16 %v991, %v990
      %v1015 = vpack.c.b16 %v993, %v992
      %v1016 = vpack.c.b16 %v995, %v994
      %v1017 = vpack.c.b16 %v997, %v996
      %v1018 = vpack.c.b16 %v999, %v998
      %v1019 = vpack.c.b16 %v1001, %v1000
      %v1020 = vpack.c.b16 %v1003, %v1002
      %v1021 = vpack.c.b16 %v1005, %v1004
      %v1023 = vsel %vm728, %v1006, 0
      %v1026 = vsel %vm728, %v1007, 0
      %v1029 = vsel %vm728, %v1008, 0
      %v1032 = vsel %vm728, %v1009, 0
      %v1035 = vsel %vm728, %v1010, 0
      %v1038 = vsel %vm728, %v1011, 0
      %v1041 = vsel %vm728, %v1012, 0
      %v1044 = vsel %vm728, %v1013, 0
      %v1047 = vsel %vm728, %v1014, 0
      %v1050 = vsel %vm728, %v1015, 0
      %v1053 = vsel %vm728, %v1016, 0
      %v1056 = vsel %vm728, %v1017, 0
      %v1059 = vsel %vm728, %v1018, 0
      %v1062 = vsel %vm728, %v1019, 0
      %v1065 = vsel %vm728, %v1020, 0
      %v1068 = vsel %vm728, %v1021, 0
      %v1071 = vsel %vm777, %v284, 0
      %1073 = vmatprep.subr.bf16.mxu0 0
      %1074 = vmatpush1.bf16.msra.mxu0 %v1071
      %1075 = vmatprep.subr.bf16.mxu0 0
      %1076 = vmatpush1.bf16.msra.mxu0 0
      %1077 = vmatprep.subr.bf16.mxu0 0
      %1078 = vmatpush1.bf16.msra.mxu0 0
      %1079 = vmatprep.subr.bf16.mxu0 0
      %1080 = vmatpush1.bf16.msra.mxu0 0
      %1081 = vmatprep.subr.bf16.mxu0 0
      %1082 = vmatpush1.bf16.msra.mxu0 0
      %1083 = vmatprep.subr.bf16.mxu0 0
      %1084 = vmatpush1.bf16.msra.mxu0 0
      %1085 = vmatprep.subr.bf16.mxu0 0
      %1086 = vmatpush1.bf16.msra.mxu0 0
      %1087 = vmatprep.subr.bf16.mxu0 0
      %1088 = vmatpush1.bf16.msra.mxu0 0
      %1089 = vmatprep.subr.bf16.mxu0 0
      %1090 = vmatpush1.bf16.msra.mxu0 0
      %1091 = vmatprep.subr.bf16.mxu0 0
      %1092 = vmatpush1.bf16.msra.mxu0 0
      %1093 = vmatprep.subr.bf16.mxu0 0
      %1094 = vmatpush1.bf16.msra.mxu0 0
      %1095 = vmatprep.subr.bf16.mxu0 0
      %1096 = vmatpush1.bf16.msra.mxu0 0
      %1097 = vmatprep.subr.bf16.mxu0 0
      %1098 = vmatpush1.bf16.msra.mxu0 0
      %1099 = vmatprep.subr.bf16.mxu0 0
      %1100 = vmatpush1.bf16.msra.mxu0 0
      %1101 = vmatprep.subr.bf16.mxu0 0
      %1102 = vmatpush1.bf16.msra.mxu0 0
      %1103 = vmatprep.subr.bf16.mxu0 0
      %1104 = vmatpush1.bf16.msra.mxu0 0
      %1105 = vmatprep.mubr.bf16.mxu0 0
      %1106 = vmatmul.mubr.bf16.gmra.mrb[0].mxu0 %v1023
      %v1107 = vpop.f32.mrb[0].mxu0
      %v1108 = vadd.f32 %v816, %v1107
      %v1109 = vpop.f32.mrb[0].mxu0
      %v1110 = vpop.f32.mrb[0].mxu0
      %v1111 = vadd.f32 %v819, %v1110
      %v1112 = vpop.f32.mrb[0].mxu0
      %1113 = vmatprep.mubr.bf16.mxu0 0
      %1114 = vmatmul.mubr.bf16.gmra.mrb[0].mxu0 %v1026
      %v1115 = vpop.f32.mrb[0].mxu0
      %v1116 = vadd.f32 %v824, %v1115
      %v1117 = vpop.f32.mrb[0].mxu0
      %v1118 = vpop.f32.mrb[0].mxu0
      %v1119 = vadd.f32 %v827, %v1118
      %v1120 = vpop.f32.mrb[0].mxu0
      %1121 = vmatprep.mubr.bf16.mxu0 0
      %1122 = vmatmul.mubr.bf16.gmra.mrb[0].mxu0 %v1029
      %v1123 = vpop.f32.mrb[0].mxu0
      %v1124 = vadd.f32 %v832, %v1123
      %v1125 = vpop.f32.mrb[0].mxu0
      %v1126 = vpop.f32.mrb[0].mxu0
      %v1127 = vadd.f32 %v835, %v1126
      %v1128 = vpop.f32.mrb[0].mxu0
      %1129 = vmatprep.mubr.bf16.mxu0 0
      %1130 = vmatmul.mubr.bf16.gmra.mrb[0].mxu0 %v1032
      %v1131 = vpop.f32.mrb[0].mxu0
      %v1132 = vadd.f32 %v840, %v1131
      %v1133 = vpop.f32.mrb[0].mxu0
      %v1134 = vpop.f32.mrb[0].mxu0
      %v1135 = vadd.f32 %v843, %v1134
      %v1136 = vpop.f32.mrb[0].mxu0
      %1137 = vmatprep.mubr.bf16.mxu0 0
      %1138 = vmatmul.mubr.bf16.gmra.mrb[0].mxu0 %v1035
      %v1139 = vpop.f32.mrb[0].mxu0
      %v1140 = vadd.f32 %v848, %v1139
      %v1141 = vpop.f32.mrb[0].mxu0
      %v1142 = vpop.f32.mrb[0].mxu0
      %v1143 = vadd.f32 %v851, %v1142
      %v1144 = vpop.f32.mrb[0].mxu0
      %1145 = vmatprep.mubr.bf16.mxu0 0
      %1146 = vmatmul.mubr.bf16.gmra.mrb[0].mxu0 %v1038
      %v1147 = vpop.f32.mrb[0].mxu0
      %v1148 = vadd.f32 %v856, %v1147
      %v1149 = vpop.f32.mrb[0].mxu0
      %v1150 = vpop.f32.mrb[0].mxu0
      %v1151 = vadd.f32 %v859, %v1150
      %v1152 = vpop.f32.mrb[0].mxu0
      %1153 = vmatprep.mubr.bf16.mxu0 0
      %1154 = vmatmul.mubr.bf16.gmra.mrb[0].mxu0 %v1041
      %v1155 = vpop.f32.mrb[0].mxu0
      %v1156 = vadd.f32 %v864, %v1155
      %v1157 = vpop.f32.mrb[0].mxu0
      %v1158 = vpop.f32.mrb[0].mxu0
      %v1159 = vadd.f32 %v867, %v1158
      %v1160 = vpop.f32.mrb[0].mxu0
      %1161 = vmatprep.mubr.bf16.mxu0 0
      %1162 = vmatmul.mubr.bf16.gmra.mrb[0].mxu0 %v1044
      %v1163 = vpop.f32.mrb[0].mxu0
      %v1164 = vadd.f32 %v872, %v1163
      %v1165 = vpop.f32.mrb[0].mxu0
      %v1166 = vpop.f32.mrb[0].mxu0
      %v1167 = vadd.f32 %v875, %v1166
      %v1168 = vpop.f32.mrb[0].mxu0
      %1169 = vmatprep.mubr.bf16.mxu0 0
      %1170 = vmatmul.mubr.bf16.gmra.mrb[0].mxu0 %v1047
      %v1171 = vpop.f32.mrb[0].mxu0
      %v1172 = vadd.f32 %v880, %v1171
      %v1173 = vpop.f32.mrb[0].mxu0
      %v1174 = vpop.f32.mrb[0].mxu0
      %v1175 = vadd.f32 %v883, %v1174
      %v1176 = vpop.f32.mrb[0].mxu0
      %1177 = vmatprep.mubr.bf16.mxu0 0
      %1178 = vmatmul.mubr.bf16.gmra.mrb[0].mxu0 %v1050
      %v1179 = vpop.f32.mrb[0].mxu0
      %v1180 = vadd.f32 %v888, %v1179
      %v1181 = vpop.f32.mrb[0].mxu0
      %v1182 = vpop.f32.mrb[0].mxu0
      %v1183 = vadd.f32 %v891, %v1182
      %v1184 = vpop.f32.mrb[0].mxu0
      %1185 = vmatprep.mubr.bf16.mxu0 0
      %1186 = vmatmul.mubr.bf16.gmra.mrb[0].mxu0 %v1053
      %v1187 = vpop.f32.mrb[0].mxu0
      %v1188 = vadd.f32 %v896, %v1187
      %v1189 = vpop.f32.mrb[0].mxu0
      %v1190 = vpop.f32.mrb[0].mxu0
      %v1191 = vadd.f32 %v899, %v1190
      %v1192 = vpop.f32.mrb[0].mxu0
      %1193 = vmatprep.mubr.bf16.mxu0 0
      %1194 = vmatmul.mubr.bf16.gmra.mrb[0].mxu0 %v1056
      %v1195 = vpop.f32.mrb[0].mxu0
      %v1196 = vadd.f32 %v904, %v1195
      %v1197 = vpop.f32.mrb[0].mxu0
      %v1198 = vpop.f32.mrb[0].mxu0
      %v1199 = vadd.f32 %v907, %v1198
      %v1200 = vpop.f32.mrb[0].mxu0
      %1201 = vmatprep.mubr.bf16.mxu0 0
      %1202 = vmatmul.mubr.bf16.gmra.mrb[0].mxu0 %v1059
      %v1203 = vpop.f32.mrb[0].mxu0
      %v1204 = vadd.f32 %v912, %v1203
      %v1205 = vpop.f32.mrb[0].mxu0
      %v1206 = vpop.f32.mrb[0].mxu0
      %v1207 = vadd.f32 %v915, %v1206
      %v1208 = vpop.f32.mrb[0].mxu0
      %1209 = vmatprep.mubr.bf16.mxu0 0
      %1210 = vmatmul.mubr.bf16.gmra.mrb[0].mxu0 %v1062
      %v1211 = vpop.f32.mrb[0].mxu0
      %v1212 = vadd.f32 %v920, %v1211
      %v1213 = vpop.f32.mrb[0].mxu0
      %v1214 = vpop.f32.mrb[0].mxu0
      %v1215 = vadd.f32 %v923, %v1214
      %v1216 = vpop.f32.mrb[0].mxu0
      %1217 = vmatprep.mubr.bf16.mxu0 0
      %1218 = vmatmul.mubr.bf16.gmra.mrb[0].mxu0 %v1065
      %v1219 = vpop.f32.mrb[0].mxu0
      %v1220 = vadd.f32 %v928, %v1219
      %v1221 = vpop.f32.mrb[0].mxu0
      %v1222 = vpop.f32.mrb[0].mxu0
      %v1223 = vadd.f32 %v931, %v1222
      %v1224 = vpop.f32.mrb[0].mxu0
      %1225 = vmatprep.mubr.bf16.mxu0 0
      %1226 = vmatmul.mubr.bf16.gmra.mrb[0].mxu0 %v1068
      %v1227 = vpop.f32.mrb[0].mxu0
      %v1228 = vadd.f32 %v936, %v1227
      %v1229 = vpop.f32.mrb[0].mxu0
      %v1230 = vpop.f32.mrb[0].mxu0
      %v1231 = vadd.f32 %v939, %v1230
      %v1232 = vpop.f32.mrb[0].mxu0
      %1233 = vdwg.mxu0
      %vm1250 = vcmask 1042432
      %vm1251 = vcmask 1046532
      %vm1252 = vmor %vm1250, %vm1251
      %v1253 = vrot.slane %v230, 5
      %v1254 = vrot.slane %v1253, 4
      %v1255 = vrot.slane %v231, 5
      %v1256 = vsel %vm1252, %v1254, %v1255
      %v1257 = vrot.slane %v1255, 4
      %v1258 = vrot.slane %v232, 5
      %v1259 = vsel %vm1252, %v1257, %v1258
      %v1260 = vrot.slane %v233, 5
      %v1261 = vrot.slane %v1260, 4
      %v1262 = vrot.slane %v234, 5
      %v1263 = vsel %vm1252, %v1261, %v1262
      %v1264 = vrot.slane %v1262, 4
      %v1265 = vrot.slane %v235, 5
      %v1266 = vsel %vm1252, %v1264, %v1265
      %v1267 = vrot.slane %v236, 5
      %v1268 = vrot.slane %v1267, 4
      %v1269 = vrot.slane %v237, 5
      %v1270 = vsel %vm1252, %v1268, %v1269
      %v1271 = vrot.slane %v1269, 4
      %v1272 = vrot.slane %v238, 5
      %v1273 = vsel %vm1252, %v1271, %v1272
      %v1274 = vrot.slane %v239, 5
      %v1275 = vrot.slane %v1274, 4
      %v1276 = vrot.slane %v240, 5
      %v1277 = vsel %vm1252, %v1275, %v1276
      %v1278 = vrot.slane %v1276, 4
      %v1279 = vrot.slane %v241, 5
      %v1280 = vsel %vm1252, %v1278, %v1279
      %v1281 = vrot.slane %v242, 5
      %v1282 = vrot.slane %v1281, 4
      %v1283 = vrot.slane %v243, 5
      %v1284 = vsel %vm1252, %v1282, %v1283
      %v1285 = vrot.slane %v1283, 4
      %v1286 = vrot.slane %v244, 5
      %v1287 = vsel %vm1252, %v1285, %v1286
      %v1288 = vrot.slane %v245, 5
      %v1289 = vrot.slane %v1288, 4
      %v1290 = vrot.slane %v246, 5
      %v1291 = vsel %vm1252, %v1289, %v1290
      %v1292 = vrot.slane %v1290, 4
      %v1293 = vrot.slane %v247, 5
      %v1294 = vsel %vm1252, %v1292, %v1293
      %v1295 = vrot.slane %v248, 5
      %v1296 = vrot.slane %v1295, 4
      %v1297 = vrot.slane %v249, 5
      %v1298 = vsel %vm1252, %v1296, %v1297
      %v1299 = vrot.slane %v1297, 4
      %v1300 = vrot.slane %v250, 5
      %v1301 = vsel %vm1252, %v1299, %v1300
      %v1302 = vrot.slane %v251, 5
      %v1303 = vrot.slane %v1302, 4
      %v1304 = vrot.slane %v252, 5
      %v1305 = vsel %vm1252, %v1303, %v1304
      %v1306 = vrot.slane %v1304, 4
      %v1307 = vrot.slane %v253, 5
      %v1308 = vsel %vm1252, %v1306, %v1307
      %v1309 = vrot.slane %v254, 5
      %v1310 = vrot.slane %v1309, 4
      %v1311 = vrot.slane %v255, 5
      %v1312 = vsel %vm1252, %v1310, %v1311
      %v1313 = vrot.slane %v1311, 4
      %v1314 = vrot.slane %v256, 5
      %v1315 = vsel %vm1252, %v1313, %v1314
      %v1316 = vrot.slane %v257, 5
      %v1317 = vrot.slane %v1316, 4
      %v1318 = vrot.slane %v258, 5
      %v1319 = vsel %vm1252, %v1317, %v1318
      %v1320 = vrot.slane %v1318, 4
      %v1321 = vrot.slane %v259, 5
      %v1322 = vsel %vm1252, %v1320, %v1321
      %v1323 = vrot.slane %v260, 5
      %v1324 = vrot.slane %v1323, 4
      %v1325 = vrot.slane %v261, 5
      %v1326 = vsel %vm1252, %v1324, %v1325
      %v1327 = vrot.slane %v1325, 4
      %v1328 = vrot.slane %v262, 5
      %v1329 = vsel %vm1252, %v1327, %v1328
      %v1330 = vrot.slane %v263, 5
      %v1331 = vrot.slane %v1330, 4
      %v1332 = vrot.slane %v264, 5
      %v1333 = vsel %vm1252, %v1331, %v1332
      %v1334 = vrot.slane %v1332, 4
      %v1335 = vrot.slane %v265, 5
      %v1336 = vsel %vm1252, %v1334, %v1335
      %v1337 = vrot.slane %v266, 5
      %v1338 = vrot.slane %v1337, 4
      %v1339 = vrot.slane %v267, 5
      %v1340 = vsel %vm1252, %v1338, %v1339
      %v1341 = vrot.slane %v1339, 4
      %v1342 = vrot.slane %v268, 5
      %v1343 = vsel %vm1252, %v1341, %v1342
      %v1344 = vrot.slane %v269, 5
      %v1345 = vrot.slane %v1344, 4
      %v1346 = vrot.slane %v270, 5
      %v1347 = vsel %vm1252, %v1345, %v1346
      %v1348 = vrot.slane %v1346, 4
      %v1349 = vrot.slane %v271, 5
      %v1350 = vsel %vm1252, %v1348, %v1349
      %v1351 = vrot.slane %v272, 5
      %v1352 = vrot.slane %v1351, 4
      %v1353 = vrot.slane %v273, 5
      %v1354 = vsel %vm1252, %v1352, %v1353
      %v1355 = vrot.slane %v1353, 4
      %v1356 = vrot.slane %v274, 5
      %v1357 = vsel %vm1252, %v1355, %v1356
      %v1358 = vrot.slane %v275, 5
      %v1359 = vrot.slane %v1358, 4
      %v1360 = vrot.slane %v276, 5
      %v1361 = vsel %vm1252, %v1359, %v1360
      %v1362 = vrot.slane %v1360, 4
      %v1363 = vrot.slane %v277, 5
      %v1364 = vsel %vm1252, %v1362, %v1363
      %v1365 = vunpack.c.l.b16 %v1256
      %v1366 = vunpack.c.l.b16 %v1259
      %v1367 = vunpack.c.l.b16 %v1263
      %v1368 = vunpack.c.l.b16 %v1266
      %v1369 = vunpack.c.l.b16 %v1270
      %v1370 = vunpack.c.l.b16 %v1273
      %v1371 = vunpack.c.l.b16 %v1277
      %v1372 = vunpack.c.l.b16 %v1280
      %v1373 = vunpack.c.l.b16 %v1284
      %v1374 = vunpack.c.l.b16 %v1287
      %v1375 = vunpack.c.l.b16 %v1291
      %v1376 = vunpack.c.l.b16 %v1294
      %v1377 = vunpack.c.l.b16 %v1298
      %v1378 = vunpack.c.l.b16 %v1301
      %v1379 = vunpack.c.l.b16 %v1305
      %v1380 = vunpack.c.l.b16 %v1308
      %v1381 = vunpack.c.l.b16 %v1312
      %v1382 = vunpack.c.l.b16 %v1315
      %v1383 = vunpack.c.l.b16 %v1319
      %v1384 = vunpack.c.l.b16 %v1322
      %v1385 = vunpack.c.l.b16 %v1326
      %v1386 = vunpack.c.l.b16 %v1329
      %v1387 = vunpack.c.l.b16 %v1333
      %v1388 = vunpack.c.l.b16 %v1336
      %v1389 = vunpack.c.l.b16 %v1340
      %v1390 = vunpack.c.l.b16 %v1343
      %v1391 = vunpack.c.l.b16 %v1347
      %v1392 = vunpack.c.l.b16 %v1350
      %v1393 = vunpack.c.l.b16 %v1354
      %v1394 = vunpack.c.l.b16 %v1357
      %v1395 = vunpack.c.l.b16 %v1361
      %v1396 = vunpack.c.l.b16 %v1364
      %v1397 = vpack.c.b16 %v1366, %v1365
      %v1398 = vpack.c.b16 %v1368, %v1367
      %v1399 = vpack.c.b16 %v1370, %v1369
      %v1400 = vpack.c.b16 %v1372, %v1371
      %v1401 = vpack.c.b16 %v1374, %v1373
      %v1402 = vpack.c.b16 %v1376, %v1375
      %v1403 = vpack.c.b16 %v1378, %v1377
      %v1404 = vpack.c.b16 %v1380, %v1379
      %v1405 = vpack.c.b16 %v1382, %v1381
      %v1406 = vpack.c.b16 %v1384, %v1383
      %v1407 = vpack.c.b16 %v1386, %v1385
      %v1408 = vpack.c.b16 %v1388, %v1387
      %v1409 = vpack.c.b16 %v1390, %v1389
      %v1410 = vpack.c.b16 %v1392, %v1391
      %v1411 = vpack.c.b16 %v1394, %v1393
      %v1412 = vpack.c.b16 %v1396, %v1395
      %v1414 = vsel %vm728, %v1397, 0
      %v1417 = vsel %vm728, %v1398, 0
      %v1420 = vsel %vm728, %v1399, 0
      %v1423 = vsel %vm728, %v1400, 0
      %v1426 = vsel %vm728, %v1401, 0
      %v1429 = vsel %vm728, %v1402, 0
      %v1432 = vsel %vm728, %v1403, 0
      %v1435 = vsel %vm728, %v1404, 0
      %v1438 = vsel %vm728, %v1405, 0
      %v1441 = vsel %vm728, %v1406, 0
      %v1444 = vsel %vm728, %v1407, 0
      %v1447 = vsel %vm728, %v1408, 0
      %v1450 = vsel %vm728, %v1409, 0
      %v1453 = vsel %vm728, %v1410, 0
      %v1456 = vsel %vm728, %v1411, 0
      %v1459 = vsel %vm728, %v1412, 0
      %v1462 = vsel %vm777, %v286, 0
      %1464 = vmatprep.subr.bf16.mxu0 0
      %1465 = vmatpush1.bf16.msra.mxu0 %v1462
      %1466 = vmatprep.subr.bf16.mxu0 0
      %1467 = vmatpush1.bf16.msra.mxu0 0
      %1468 = vmatprep.subr.bf16.mxu0 0
      %1469 = vmatpush1.bf16.msra.mxu0 0
      %1470 = vmatprep.subr.bf16.mxu0 0
      %1471 = vmatpush1.bf16.msra.mxu0 0
      %1472 = vmatprep.subr.bf16.mxu0 0
      %1473 = vmatpush1.bf16.msra.mxu0 0
      %1474 = vmatprep.subr.bf16.mxu0 0
      %1475 = vmatpush1.bf16.msra.mxu0 0
      %1476 = vmatprep.subr.bf16.mxu0 0
      %1477 = vmatpush1.bf16.msra.mxu0 0
      %1478 = vmatprep.subr.bf16.mxu0 0
      %1479 = vmatpush1.bf16.msra.mxu0 0
      %1480 = vmatprep.subr.bf16.mxu0 0
      %1481 = vmatpush1.bf16.msra.mxu0 0
      %1482 = vmatprep.subr.bf16.mxu0 0
      %1483 = vmatpush1.bf16.msra.mxu0 0
      %1484 = vmatprep.subr.bf16.mxu0 0
      %1485 = vmatpush1.bf16.msra.mxu0 0
      %1486 = vmatprep.subr.bf16.mxu0 0
      %1487 = vmatpush1.bf16.msra.mxu0 0
      %1488 = vmatprep.subr.bf16.mxu0 0
      %1489 = vmatpush1.bf16.msra.mxu0 0
      %1490 = vmatprep.subr.bf16.mxu0 0
      %1491 = vmatpush1.bf16.msra.mxu0 0
      %1492 = vmatprep.subr.bf16.mxu0 0
      %1493 = vmatpush1.bf16.msra.mxu0 0
      %1494 = vmatprep.subr.bf16.mxu0 0
      %1495 = vmatpush1.bf16.msra.mxu0 0
      %1496 = vmatprep.mubr.bf16.mxu0 0
      %1497 = vmatmul.mubr.bf16.gmra.mrb[0].mxu0 %v1414
      %v1498 = vpop.f32.mrb[0].mxu0
      %v1499 = vadd.f32 0.0, %v1498
      %v1500 = vpop.f32.mrb[0].mxu0
      %v1501 = vpop.f32.mrb[0].mxu0
      %v1502 = vadd.f32 0.0, %v1501
      %v1503 = vpop.f32.mrb[0].mxu0
      %1504 = vmatprep.mubr.bf16.mxu0 0
      %1505 = vmatmul.mubr.bf16.gmra.mrb[0].mxu0 %v1417
      %v1506 = vpop.f32.mrb[0].mxu0
      %v1507 = vadd.f32 0.0, %v1506
      %v1508 = vpop.f32.mrb[0].mxu0
      %v1509 = vpop.f32.mrb[0].mxu0
      %v1510 = vadd.f32 0.0, %v1509
      %v1511 = vpop.f32.mrb[0].mxu0
      %1512 = vmatprep.mubr.bf16.mxu0 0
      %1513 = vmatmul.mubr.bf16.gmra.mrb[0].mxu0 %v1420
      %v1514 = vpop.f32.mrb[0].mxu0
      %v1515 = vadd.f32 0.0, %v1514
      %v1516 = vpop.f32.mrb[0].mxu0
      %v1517 = vpop.f32.mrb[0].mxu0
      %v1518 = vadd.f32 0.0, %v1517
      %v1519 = vpop.f32.mrb[0].mxu0
      %1520 = vmatprep.mubr.bf16.mxu0 0
      %1521 = vmatmul.mubr.bf16.gmra.mrb[0].mxu0 %v1423
      %v1522 = vpop.f32.mrb[0].mxu0
      %v1523 = vadd.f32 0.0, %v1522
      %v1524 = vpop.f32.mrb[0].mxu0
      %v1525 = vpop.f32.mrb[0].mxu0
      %v1526 = vadd.f32 0.0, %v1525
      %v1527 = vpop.f32.mrb[0].mxu0
      %1528 = vmatprep.mubr.bf16.mxu0 0
      %1529 = vmatmul.mubr.bf16.gmra.mrb[0].mxu0 %v1426
      %v1530 = vpop.f32.mrb[0].mxu0
      %v1531 = vadd.f32 0.0, %v1530
      %v1532 = vpop.f32.mrb[0].mxu0
      %v1533 = vpop.f32.mrb[0].mxu0
      %v1534 = vadd.f32 0.0, %v1533
      %v1535 = vpop.f32.mrb[0].mxu0
      %1536 = vmatprep.mubr.bf16.mxu0 0
      %1537 = vmatmul.mubr.bf16.gmra.mrb[0].mxu0 %v1429
      %v1538 = vpop.f32.mrb[0].mxu0
      %v1539 = vadd.f32 0.0, %v1538
      %v1540 = vpop.f32.mrb[0].mxu0
      %v1541 = vpop.f32.mrb[0].mxu0
      %v1542 = vadd.f32 0.0, %v1541
      %v1543 = vpop.f32.mrb[0].mxu0
      %1544 = vmatprep.mubr.bf16.mxu0 0
      %1545 = vmatmul.mubr.bf16.gmra.mrb[0].mxu0 %v1432
      %v1546 = vpop.f32.mrb[0].mxu0
      %v1547 = vadd.f32 0.0, %v1546
      %v1548 = vpop.f32.mrb[0].mxu0
      %v1549 = vpop.f32.mrb[0].mxu0
      %v1550 = vadd.f32 0.0, %v1549
      %v1551 = vpop.f32.mrb[0].mxu0
      %1552 = vmatprep.mubr.bf16.mxu0 0
      %1553 = vmatmul.mubr.bf16.gmra.mrb[0].mxu0 %v1435
      %v1554 = vpop.f32.mrb[0].mxu0
      %v1555 = vadd.f32 0.0, %v1554
      %v1556 = vpop.f32.mrb[0].mxu0
      %v1557 = vpop.f32.mrb[0].mxu0
      %v1558 = vadd.f32 0.0, %v1557
      %v1559 = vpop.f32.mrb[0].mxu0
      %1560 = vmatprep.mubr.bf16.mxu0 0
      %1561 = vmatmul.mubr.bf16.gmra.mrb[0].mxu0 %v1438
      %v1562 = vpop.f32.mrb[0].mxu0
      %v1563 = vadd.f32 0.0, %v1562
      %v1564 = vpop.f32.mrb[0].mxu0
      %v1565 = vpop.f32.mrb[0].mxu0
      %v1566 = vadd.f32 0.0, %v1565
      %v1567 = vpop.f32.mrb[0].mxu0
      %1568 = vmatprep.mubr.bf16.mxu0 0
      %1569 = vmatmul.mubr.bf16.gmra.mrb[0].mxu0 %v1441
      %v1570 = vpop.f32.mrb[0].mxu0
      %v1571 = vadd.f32 0.0, %v1570
      %v1572 = vpop.f32.mrb[0].mxu0
      %v1573 = vpop.f32.mrb[0].mxu0
      %v1574 = vadd.f32 0.0, %v1573
      %v1575 = vpop.f32.mrb[0].mxu0
      %1576 = vmatprep.mubr.bf16.mxu0 0
      %1577 = vmatmul.mubr.bf16.gmra.mrb[0].mxu0 %v1444
      %v1578 = vpop.f32.mrb[0].mxu0
      %v1579 = vadd.f32 0.0, %v1578
      %v1580 = vpop.f32.mrb[0].mxu0
      %v1581 = vpop.f32.mrb[0].mxu0
      %v1582 = vadd.f32 0.0, %v1581
      %v1583 = vpop.f32.mrb[0].mxu0
      %1584 = vmatprep.mubr.bf16.mxu0 0
      %1585 = vmatmul.mubr.bf16.gmra.mrb[0].mxu0 %v1447
      %v1586 = vpop.f32.mrb[0].mxu0
      %v1587 = vadd.f32 0.0, %v1586
      %v1588 = vpop.f32.mrb[0].mxu0
      %v1589 = vpop.f32.mrb[0].mxu0
      %v1590 = vadd.f32 0.0, %v1589
      %v1591 = vpop.f32.mrb[0].mxu0
      %1592 = vmatprep.mubr.bf16.mxu0 0
      %1593 = vmatmul.mubr.bf16.gmra.mrb[0].mxu0 %v1450
      %v1594 = vpop.f32.mrb[0].mxu0
      %v1595 = vadd.f32 0.0, %v1594
      %v1596 = vpop.f32.mrb[0].mxu0
      %v1597 = vpop.f32.mrb[0].mxu0
      %v1598 = vadd.f32 0.0, %v1597
      %v1599 = vpop.f32.mrb[0].mxu0
      %1600 = vmatprep.mubr.bf16.mxu0 0
      %1601 = vmatmul.mubr.bf16.gmra.mrb[0].mxu0 %v1453
      %v1602 = vpop.f32.mrb[0].mxu0
      %v1603 = vadd.f32 0.0, %v1602
      %v1604 = vpop.f32.mrb[0].mxu0
      %v1605 = vpop.f32.mrb[0].mxu0
      %v1606 = vadd.f32 0.0, %v1605
      %v1607 = vpop.f32.mrb[0].mxu0
      %1608 = vmatprep.mubr.bf16.mxu0 0
      %1609 = vmatmul.mubr.bf16.gmra.mrb[0].mxu0 %v1456
      %v1610 = vpop.f32.mrb[0].mxu0
      %v1611 = vadd.f32 0.0, %v1610
      %v1612 = vpop.f32.mrb[0].mxu0
      %v1613 = vpop.f32.mrb[0].mxu0
      %v1614 = vadd.f32 0.0, %v1613
      %v1615 = vpop.f32.mrb[0].mxu0
      %1616 = vmatprep.mubr.bf16.mxu0 0
      %1617 = vmatmul.mubr.bf16.gmra.mrb[0].mxu0 %v1459
      %v1618 = vpop.f32.mrb[0].mxu0
      %v1619 = vadd.f32 0.0, %v1618
      %v1620 = vpop.f32.mrb[0].mxu0
      %v1621 = vpop.f32.mrb[0].mxu0
      %v1622 = vadd.f32 0.0, %v1621
      %v1623 = vpop.f32.mrb[0].mxu0
      %1624 = vdwg.mxu0
      %v1625 = vadd.f32 %v1108, %v1499
      %v1626 = vadd.f32 %v1111, %v1502
      %v1627 = vadd.f32 %v1116, %v1507
      %v1628 = vadd.f32 %v1119, %v1510
      %v1629 = vadd.f32 %v1124, %v1515
      %v1630 = vadd.f32 %v1127, %v1518
      %v1631 = vadd.f32 %v1132, %v1523
      %v1632 = vadd.f32 %v1135, %v1526
      %v1633 = vadd.f32 %v1140, %v1531
      %v1634 = vadd.f32 %v1143, %v1534
      %v1635 = vadd.f32 %v1148, %v1539
      %v1636 = vadd.f32 %v1151, %v1542
      %v1637 = vadd.f32 %v1156, %v1547
      %v1638 = vadd.f32 %v1159, %v1550
      %v1639 = vadd.f32 %v1164, %v1555
      %v1640 = vadd.f32 %v1167, %v1558
      %v1641 = vadd.f32 %v1172, %v1563
      %v1642 = vadd.f32 %v1175, %v1566
      %v1643 = vadd.f32 %v1180, %v1571
      %v1644 = vadd.f32 %v1183, %v1574
      %v1645 = vadd.f32 %v1188, %v1579
      %v1646 = vadd.f32 %v1191, %v1582
      %v1647 = vadd.f32 %v1196, %v1587
      %v1648 = vadd.f32 %v1199, %v1590
      %v1649 = vadd.f32 %v1204, %v1595
      %v1650 = vadd.f32 %v1207, %v1598
      %v1651 = vadd.f32 %v1212, %v1603
      %v1652 = vadd.f32 %v1215, %v1606
      %v1653 = vadd.f32 %v1220, %v1611
      %v1654 = vadd.f32 %v1223, %v1614
      %v1655 = vadd.f32 %v1228, %v1619
      %v1656 = vadd.f32 %v1231, %v1622
      %v1659 = vunpack.c.l.b16 %v278
      %v1660 = vunpack.c.l.b16 %v279
      %v1661 = vpack.c.b16 %v1660, %v1659
      %v1663 = vsel %vm728, %v1661, 0
      %v1666 = vsel %vm777, %v287, 0
      %1668 = vmatprep.subr.bf16.mxu0 0
      %1669 = vmatpush1.bf16.msra.mxu0 %v1666
      %1670 = vmatprep.subr.bf16.mxu0 0
      %1671 = vmatpush1.bf16.msra.mxu0 0
      %1672 = vmatprep.subr.bf16.mxu0 0
      %1673 = vmatpush1.bf16.msra.mxu0 0
      %1674 = vmatprep.subr.bf16.mxu0 0
      %1675 = vmatpush1.bf16.msra.mxu0 0
      %1676 = vmatprep.subr.bf16.mxu0 0
      %1677 = vmatpush1.bf16.msra.mxu0 0
      %1678 = vmatprep.subr.bf16.mxu0 0
      %1679 = vmatpush1.bf16.msra.mxu0 0
      %1680 = vmatprep.subr.bf16.mxu0 0
      %1681 = vmatpush1.bf16.msra.mxu0 0
      %1682 = vmatprep.subr.bf16.mxu0 0
      %1683 = vmatpush1.bf16.msra.mxu0 0
      %1684 = vmatprep.subr.bf16.mxu0 0
      %1685 = vmatpush1.bf16.msra.mxu0 0
      %1686 = vmatprep.subr.bf16.mxu0 0
      %1687 = vmatpush1.bf16.msra.mxu0 0
      %1688 = vmatprep.subr.bf16.mxu0 0
      %1689 = vmatpush1.bf16.msra.mxu0 0
      %1690 = vmatprep.subr.bf16.mxu0 0
      %1691 = vmatpush1.bf16.msra.mxu0 0
      %1692 = vmatprep.subr.bf16.mxu0 0
      %1693 = vmatpush1.bf16.msra.mxu0 0
      %1694 = vmatprep.subr.bf16.mxu0 0
      %1695 = vmatpush1.bf16.msra.mxu0 0
      %1696 = vmatprep.subr.bf16.mxu0 0
      %1697 = vmatpush1.bf16.msra.mxu0 0
      %1698 = vmatprep.subr.bf16.mxu0 0
      %1699 = vmatpush1.bf16.msra.mxu0 0
      %1700 = vmatprep.mubr.bf16.mxu0 0
      %1701 = vmatmul.mubr.bf16.gmra.mrb[0].mxu0 %v1026
      %v1702 = vpop.f32.mrb[0].mxu0
      %v1703 = vadd.f32 0.0, %v1702
      %v1704 = vpop.f32.mrb[0].mxu0
      %v1705 = vpop.f32.mrb[0].mxu0
      %v1706 = vadd.f32 0.0, %v1705
      %v1707 = vpop.f32.mrb[0].mxu0
      %1708 = vmatprep.mubr.bf16.mxu0 0
      %1709 = vmatmul.mubr.bf16.gmra.mrb[0].mxu0 %v1029
      %v1710 = vpop.f32.mrb[0].mxu0
      %v1711 = vadd.f32 0.0, %v1710
      %v1712 = vpop.f32.mrb[0].mxu0
      %v1713 = vpop.f32.mrb[0].mxu0
      %v1714 = vadd.f32 0.0, %v1713
      %v1715 = vpop.f32.mrb[0].mxu0
      %1716 = vmatprep.mubr.bf16.mxu0 0
      %1717 = vmatmul.mubr.bf16.gmra.mrb[0].mxu0 %v1032
      %v1718 = vpop.f32.mrb[0].mxu0
      %v1719 = vadd.f32 0.0, %v1718
      %v1720 = vpop.f32.mrb[0].mxu0
      %v1721 = vpop.f32.mrb[0].mxu0
      %v1722 = vadd.f32 0.0, %v1721
      %v1723 = vpop.f32.mrb[0].mxu0
      %1724 = vmatprep.mubr.bf16.mxu0 0
      %1725 = vmatmul.mubr.bf16.gmra.mrb[0].mxu0 %v1035
      %v1726 = vpop.f32.mrb[0].mxu0
      %v1727 = vadd.f32 0.0, %v1726
      %v1728 = vpop.f32.mrb[0].mxu0
      %v1729 = vpop.f32.mrb[0].mxu0
      %v1730 = vadd.f32 0.0, %v1729
      %v1731 = vpop.f32.mrb[0].mxu0
      %1732 = vmatprep.mubr.bf16.mxu0 0
      %1733 = vmatmul.mubr.bf16.gmra.mrb[0].mxu0 %v1038
      %v1734 = vpop.f32.mrb[0].mxu0
      %v1735 = vadd.f32 0.0, %v1734
      %v1736 = vpop.f32.mrb[0].mxu0
      %v1737 = vpop.f32.mrb[0].mxu0
      %v1738 = vadd.f32 0.0, %v1737
      %v1739 = vpop.f32.mrb[0].mxu0
      %1740 = vmatprep.mubr.bf16.mxu0 0
      %1741 = vmatmul.mubr.bf16.gmra.mrb[0].mxu0 %v1041
      %v1742 = vpop.f32.mrb[0].mxu0
      %v1743 = vadd.f32 0.0, %v1742
      %v1744 = vpop.f32.mrb[0].mxu0
      %v1745 = vpop.f32.mrb[0].mxu0
      %v1746 = vadd.f32 0.0, %v1745
      %v1747 = vpop.f32.mrb[0].mxu0
      %1748 = vmatprep.mubr.bf16.mxu0 0
      %1749 = vmatmul.mubr.bf16.gmra.mrb[0].mxu0 %v1044
      %v1750 = vpop.f32.mrb[0].mxu0
      %v1751 = vadd.f32 0.0, %v1750
      %v1752 = vpop.f32.mrb[0].mxu0
      %v1753 = vpop.f32.mrb[0].mxu0
      %v1754 = vadd.f32 0.0, %v1753
      %v1755 = vpop.f32.mrb[0].mxu0
      %1756 = vmatprep.mubr.bf16.mxu0 0
      %1757 = vmatmul.mubr.bf16.gmra.mrb[0].mxu0 %v1047
      %v1758 = vpop.f32.mrb[0].mxu0
      %v1759 = vadd.f32 0.0, %v1758
      %v1760 = vpop.f32.mrb[0].mxu0
      %v1761 = vpop.f32.mrb[0].mxu0
      %v1762 = vadd.f32 0.0, %v1761
      %v1763 = vpop.f32.mrb[0].mxu0
      %1764 = vmatprep.mubr.bf16.mxu0 0
      %1765 = vmatmul.mubr.bf16.gmra.mrb[0].mxu0 %v1050
      %v1766 = vpop.f32.mrb[0].mxu0
      %v1767 = vadd.f32 0.0, %v1766
      %v1768 = vpop.f32.mrb[0].mxu0
      %v1769 = vpop.f32.mrb[0].mxu0
      %v1770 = vadd.f32 0.0, %v1769
      %v1771 = vpop.f32.mrb[0].mxu0
      %1772 = vmatprep.mubr.bf16.mxu0 0
      %1773 = vmatmul.mubr.bf16.gmra.mrb[0].mxu0 %v1053
      %v1774 = vpop.f32.mrb[0].mxu0
      %v1775 = vadd.f32 0.0, %v1774
      %v1776 = vpop.f32.mrb[0].mxu0
      %v1777 = vpop.f32.mrb[0].mxu0
      %v1778 = vadd.f32 0.0, %v1777
      %v1779 = vpop.f32.mrb[0].mxu0
      %1780 = vmatprep.mubr.bf16.mxu0 0
      %1781 = vmatmul.mubr.bf16.gmra.mrb[0].mxu0 %v1056
      %v1782 = vpop.f32.mrb[0].mxu0
      %v1783 = vadd.f32 0.0, %v1782
      %v1784 = vpop.f32.mrb[0].mxu0
      %v1785 = vpop.f32.mrb[0].mxu0
      %v1786 = vadd.f32 0.0, %v1785
      %v1787 = vpop.f32.mrb[0].mxu0
      %1788 = vmatprep.mubr.bf16.mxu0 0
      %1789 = vmatmul.mubr.bf16.gmra.mrb[0].mxu0 %v1059
      %v1790 = vpop.f32.mrb[0].mxu0
      %v1791 = vadd.f32 0.0, %v1790
      %v1792 = vpop.f32.mrb[0].mxu0
      %v1793 = vpop.f32.mrb[0].mxu0
      %v1794 = vadd.f32 0.0, %v1793
      %v1795 = vpop.f32.mrb[0].mxu0
      %1796 = vmatprep.mubr.bf16.mxu0 0
      %1797 = vmatmul.mubr.bf16.gmra.mrb[0].mxu0 %v1062
      %v1798 = vpop.f32.mrb[0].mxu0
      %v1799 = vadd.f32 0.0, %v1798
      %v1800 = vpop.f32.mrb[0].mxu0
      %v1801 = vpop.f32.mrb[0].mxu0
      %v1802 = vadd.f32 0.0, %v1801
      %v1803 = vpop.f32.mrb[0].mxu0
      %1804 = vmatprep.mubr.bf16.mxu0 0
      %1805 = vmatmul.mubr.bf16.gmra.mrb[0].mxu0 %v1065
      %v1806 = vpop.f32.mrb[0].mxu0
      %v1807 = vadd.f32 0.0, %v1806
      %v1808 = vpop.f32.mrb[0].mxu0
      %v1809 = vpop.f32.mrb[0].mxu0
      %v1810 = vadd.f32 0.0, %v1809
      %v1811 = vpop.f32.mrb[0].mxu0
      %1812 = vmatprep.mubr.bf16.mxu0 0
      %1813 = vmatmul.mubr.bf16.gmra.mrb[0].mxu0 %v1068
      %v1814 = vpop.f32.mrb[0].mxu0
      %v1815 = vadd.f32 0.0, %v1814
      %v1816 = vpop.f32.mrb[0].mxu0
      %v1817 = vpop.f32.mrb[0].mxu0
      %v1818 = vadd.f32 0.0, %v1817
      %v1819 = vpop.f32.mrb[0].mxu0
      %1820 = vmatprep.mubr.bf16.mxu0 0
      %1821 = vmatmul.mubr.bf16.gmra.mrb[0].mxu0 %v1663
      %v1822 = vpop.f32.mrb[0].mxu0
      %v1823 = vadd.f32 0.0, %v1822
      %v1824 = vpop.f32.mrb[0].mxu0
      %v1825 = vpop.f32.mrb[0].mxu0
      %v1826 = vadd.f32 0.0, %v1825
      %v1827 = vpop.f32.mrb[0].mxu0
      %1828 = vdwg.mxu0
      %v1829 = vadd.f32 %v1625, %v1703
      %v1830 = vadd.f32 %v1626, %v1706
      %v1831 = vadd.f32 %v1627, %v1711
      %v1832 = vadd.f32 %v1628, %v1714
      %v1833 = vadd.f32 %v1629, %v1719
      %v1834 = vadd.f32 %v1630, %v1722
      %v1835 = vadd.f32 %v1631, %v1727
      %v1836 = vadd.f32 %v1632, %v1730
      %v1837 = vadd.f32 %v1633, %v1735
      %v1838 = vadd.f32 %v1634, %v1738
      %v1839 = vadd.f32 %v1635, %v1743
      %v1840 = vadd.f32 %v1636, %v1746
      %v1841 = vadd.f32 %v1637, %v1751
      %v1842 = vadd.f32 %v1638, %v1754
      %v1843 = vadd.f32 %v1639, %v1759
      %v1844 = vadd.f32 %v1640, %v1762
      %v1845 = vadd.f32 %v1641, %v1767
      %v1846 = vadd.f32 %v1642, %v1770
      %v1847 = vadd.f32 %v1643, %v1775
      %v1848 = vadd.f32 %v1644, %v1778
      %v1849 = vadd.f32 %v1645, %v1783
      %v1850 = vadd.f32 %v1646, %v1786
      %v1851 = vadd.f32 %v1647, %v1791
      %v1852 = vadd.f32 %v1648, %v1794
      %v1853 = vadd.f32 %v1649, %v1799
      %v1854 = vadd.f32 %v1650, %v1802
      %v1855 = vadd.f32 %v1651, %v1807
      %v1856 = vadd.f32 %v1652, %v1810
      %v1857 = vadd.f32 %v1653, %v1815
      %v1858 = vadd.f32 %v1654, %v1818
      %v1859 = vadd.f32 %v1655, %v1823
      %v1860 = vadd.f32 %v1656, %v1826
      %v1862 = vshrl.u32 %v278, 16
      %v1864 = vrot.slane %v1862, 4
      %v1865 = vshll.u32 %v278, 16
      %v1867 = vrot.slane %v1865, 5
      %v1868 = vor.u32 %v1864, %v1867
      %v1869 = vrot.slane %v1868, 4
      %v1871 = vshll.u32 %v279, 16
      %v1873 = vrot.slane %v1871, 5
      %v1874 = vsel %vm295, %v1869, %v1873
      %v1875 = vshrl.u32 %v279, 16
      %v1877 = vrot.slane %v1875, 4
      %v1878 = vor.u32 %v1877, %v1873
      %v1879 = vrot.slane %v1878, 4
      %v1881 = vshll.u32 %v280, 16
      %v1883 = vrot.slane %v1881, 5
      %v1884 = vsel %vm295, %v1879, %v1883
      %v1885 = vunpack.c.l.b16 %v1874
      %v1886 = vunpack.c.l.b16 %v1884
      %v1887 = vpack.c.b16 %v1886, %v1885
      %v1889 = vsel %vm728, %v1887, 0
      %v1892 = vsel %vm777, %v288, 0
      %1894 = vmatprep.subr.bf16.mxu0 0
      %1895 = vmatpush1.bf16.msra.mxu0 %v1892
      %1896 = vmatprep.subr.bf16.mxu0 0
      %1897 = vmatpush1.bf16.msra.mxu0 0
      %1898 = vmatprep.subr.bf16.mxu0 0
      %1899 = vmatpush1.bf16.msra.mxu0 0
      %1900 = vmatprep.subr.bf16.mxu0 0
      %1901 = vmatpush1.bf16.msra.mxu0 0
      %1902 = vmatprep.subr.bf16.mxu0 0
      %1903 = vmatpush1.bf16.msra.mxu0 0
      %1904 = vmatprep.subr.bf16.mxu0 0
      %1905 = vmatpush1.bf16.msra.mxu0 0
      %1906 = vmatprep.subr.bf16.mxu0 0
      %1907 = vmatpush1.bf16.msra.mxu0 0
      %1908 = vmatprep.subr.bf16.mxu0 0
      %1909 = vmatpush1.bf16.msra.mxu0 0
      %1910 = vmatprep.subr.bf16.mxu0 0
      %1911 = vmatpush1.bf16.msra.mxu0 0
      %1912 = vmatprep.subr.bf16.mxu0 0
      %1913 = vmatpush1.bf16.msra.mxu0 0
      %1914 = vmatprep.subr.bf16.mxu0 0
      %1915 = vmatpush1.bf16.msra.mxu0 0
      %1916 = vmatprep.subr.bf16.mxu0 0
      %1917 = vmatpush1.bf16.msra.mxu0 0
      %1918 = vmatprep.subr.bf16.mxu0 0
      %1919 = vmatpush1.bf16.msra.mxu0 0
      %1920 = vmatprep.subr.bf16.mxu0 0
      %1921 = vmatpush1.bf16.msra.mxu0 0
      %1922 = vmatprep.subr.bf16.mxu0 0
      %1923 = vmatpush1.bf16.msra.mxu0 0
      %1924 = vmatprep.subr.bf16.mxu0 0
      %1925 = vmatpush1.bf16.msra.mxu0 0
      %1926 = vmatprep.mubr.bf16.mxu0 0
      %1927 = vmatmul.mubr.bf16.gmra.mrb[0].mxu0 %v733
      %v1928 = vpop.f32.mrb[0].mxu0
      %v1929 = vadd.f32 0.0, %v1928
      %v1930 = vpop.f32.mrb[0].mxu0
      %v1931 = vpop.f32.mrb[0].mxu0
      %v1932 = vadd.f32 0.0, %v1931
      %v1933 = vpop.f32.mrb[0].mxu0
      %1934 = vmatprep.mubr.bf16.mxu0 0
      %1935 = vmatmul.mubr.bf16.gmra.mrb[0].mxu0 %v736
      %v1936 = vpop.f32.mrb[0].mxu0
      %v1937 = vadd.f32 0.0, %v1936
      %v1938 = vpop.f32.mrb[0].mxu0
      %v1939 = vpop.f32.mrb[0].mxu0
      %v1940 = vadd.f32 0.0, %v1939
      %v1941 = vpop.f32.mrb[0].mxu0
      %1942 = vmatprep.mubr.bf16.mxu0 0
      %1943 = vmatmul.mubr.bf16.gmra.mrb[0].mxu0 %v739
      %v1944 = vpop.f32.mrb[0].mxu0
      %v1945 = vadd.f32 0.0, %v1944
      %v1946 = vpop.f32.mrb[0].mxu0
      %v1947 = vpop.f32.mrb[0].mxu0
      %v1948 = vadd.f32 0.0, %v1947
      %v1949 = vpop.f32.mrb[0].mxu0
      %1950 = vmatprep.mubr.bf16.mxu0 0
      %1951 = vmatmul.mubr.bf16.gmra.mrb[0].mxu0 %v742
      %v1952 = vpop.f32.mrb[0].mxu0
      %v1953 = vadd.f32 0.0, %v1952
      %v1954 = vpop.f32.mrb[0].mxu0
      %v1955 = vpop.f32.mrb[0].mxu0
      %v1956 = vadd.f32 0.0, %v1955
      %v1957 = vpop.f32.mrb[0].mxu0
      %1958 = vmatprep.mubr.bf16.mxu0 0
      %1959 = vmatmul.mubr.bf16.gmra.mrb[0].mxu0 %v745
      %v1960 = vpop.f32.mrb[0].mxu0
      %v1961 = vadd.f32 0.0, %v1960
      %v1962 = vpop.f32.mrb[0].mxu0
      %v1963 = vpop.f32.mrb[0].mxu0
      %v1964 = vadd.f32 0.0, %v1963
      %v1965 = vpop.f32.mrb[0].mxu0
      %1966 = vmatprep.mubr.bf16.mxu0 0
      %1967 = vmatmul.mubr.bf16.gmra.mrb[0].mxu0 %v748
      %v1968 = vpop.f32.mrb[0].mxu0
      %v1969 = vadd.f32 0.0, %v1968
      %v1970 = vpop.f32.mrb[0].mxu0
      %v1971 = vpop.f32.mrb[0].mxu0
      %v1972 = vadd.f32 0.0, %v1971
      %v1973 = vpop.f32.mrb[0].mxu0
      %1974 = vmatprep.mubr.bf16.mxu0 0
      %1975 = vmatmul.mubr.bf16.gmra.mrb[0].mxu0 %v751
      %v1976 = vpop.f32.mrb[0].mxu0
      %v1977 = vadd.f32 0.0, %v1976
      %v1978 = vpop.f32.mrb[0].mxu0
      %v1979 = vpop.f32.mrb[0].mxu0
      %v1980 = vadd.f32 0.0, %v1979
      %v1981 = vpop.f32.mrb[0].mxu0
      %1982 = vmatprep.mubr.bf16.mxu0 0
      %1983 = vmatmul.mubr.bf16.gmra.mrb[0].mxu0 %v754
      %v1984 = vpop.f32.mrb[0].mxu0
      %v1985 = vadd.f32 0.0, %v1984
      %v1986 = vpop.f32.mrb[0].mxu0
      %v1987 = vpop.f32.mrb[0].mxu0
      %v1988 = vadd.f32 0.0, %v1987
      %v1989 = vpop.f32.mrb[0].mxu0
      %1990 = vmatprep.mubr.bf16.mxu0 0
      %1991 = vmatmul.mubr.bf16.gmra.mrb[0].mxu0 %v757
      %v1992 = vpop.f32.mrb[0].mxu0
      %v1993 = vadd.f32 0.0, %v1992
      %v1994 = vpop.f32.mrb[0].mxu0
      %v1995 = vpop.f32.mrb[0].mxu0
      %v1996 = vadd.f32 0.0, %v1995
      %v1997 = vpop.f32.mrb[0].mxu0
      %1998 = vmatprep.mubr.bf16.mxu0 0
      %1999 = vmatmul.mubr.bf16.gmra.mrb[0].mxu0 %v760
      %v2000 = vpop.f32.mrb[0].mxu0
      %v2001 = vadd.f32 0.0, %v2000
      %v2002 = vpop.f32.mrb[0].mxu0
      %v2003 = vpop.f32.mrb[0].mxu0
      %v2004 = vadd.f32 0.0, %v2003
      %v2005 = vpop.f32.mrb[0].mxu0
      %2006 = vmatprep.mubr.bf16.mxu0 0
      %2007 = vmatmul.mubr.bf16.gmra.mrb[0].mxu0 %v763
      %v2008 = vpop.f32.mrb[0].mxu0
      %v2009 = vadd.f32 0.0, %v2008
      %v2010 = vpop.f32.mrb[0].mxu0
      %v2011 = vpop.f32.mrb[0].mxu0
      %v2012 = vadd.f32 0.0, %v2011
      %v2013 = vpop.f32.mrb[0].mxu0
      %2014 = vmatprep.mubr.bf16.mxu0 0
      %2015 = vmatmul.mubr.bf16.gmra.mrb[0].mxu0 %v766
      %v2016 = vpop.f32.mrb[0].mxu0
      %v2017 = vadd.f32 0.0, %v2016
      %v2018 = vpop.f32.mrb[0].mxu0
      %v2019 = vpop.f32.mrb[0].mxu0
      %v2020 = vadd.f32 0.0, %v2019
      %v2021 = vpop.f32.mrb[0].mxu0
      %2022 = vmatprep.mubr.bf16.mxu0 0
      %2023 = vmatmul.mubr.bf16.gmra.mrb[0].mxu0 %v769
      %v2024 = vpop.f32.mrb[0].mxu0
      %v2025 = vadd.f32 0.0, %v2024
      %v2026 = vpop.f32.mrb[0].mxu0
      %v2027 = vpop.f32.mrb[0].mxu0
      %v2028 = vadd.f32 0.0, %v2027
      %v2029 = vpop.f32.mrb[0].mxu0
      %2030 = vmatprep.mubr.bf16.mxu0 0
      %2031 = vmatmul.mubr.bf16.gmra.mrb[0].mxu0 %v772
      %v2032 = vpop.f32.mrb[0].mxu0
      %v2033 = vadd.f32 0.0, %v2032
      %v2034 = vpop.f32.mrb[0].mxu0
      %v2035 = vpop.f32.mrb[0].mxu0
      %v2036 = vadd.f32 0.0, %v2035
      %v2037 = vpop.f32.mrb[0].mxu0
      %2038 = vmatprep.mubr.bf16.mxu0 0
      %2039 = vmatmul.mubr.bf16.gmra.mrb[0].mxu0 %v775
      %v2040 = vpop.f32.mrb[0].mxu0
      %v2041 = vadd.f32 0.0, %v2040
      %v2042 = vpop.f32.mrb[0].mxu0
      %v2043 = vpop.f32.mrb[0].mxu0
      %v2044 = vadd.f32 0.0, %v2043
      %v2045 = vpop.f32.mrb[0].mxu0
      %2046 = vmatprep.mubr.bf16.mxu0 0
      %2047 = vmatmul.mubr.bf16.gmra.mrb[0].mxu0 %v1889
      %v2048 = vpop.f32.mrb[0].mxu0
      %v2049 = vadd.f32 0.0, %v2048
      %v2050 = vpop.f32.mrb[0].mxu0
      %v2051 = vpop.f32.mrb[0].mxu0
      %v2052 = vadd.f32 0.0, %v2051
      %v2053 = vpop.f32.mrb[0].mxu0
      %2054 = vdwg.mxu0
      %v2055 = vadd.f32 %v1829, %v1929
      %v2056 = vadd.f32 %v1830, %v1932
      %v2057 = vadd.f32 %v1831, %v1937
      %v2058 = vadd.f32 %v1832, %v1940
      %v2059 = vadd.f32 %v1833, %v1945
      %v2060 = vadd.f32 %v1834, %v1948
      %v2061 = vadd.f32 %v1835, %v1953
      %v2062 = vadd.f32 %v1836, %v1956
      %v2063 = vadd.f32 %v1837, %v1961
      %v2064 = vadd.f32 %v1838, %v1964
      %v2065 = vadd.f32 %v1839, %v1969
      %v2066 = vadd.f32 %v1840, %v1972
      %v2067 = vadd.f32 %v1841, %v1977
      %v2068 = vadd.f32 %v1842, %v1980
      %v2069 = vadd.f32 %v1843, %v1985
      %v2070 = vadd.f32 %v1844, %v1988
      %v2071 = vadd.f32 %v1845, %v1993
      %v2072 = vadd.f32 %v1846, %v1996
      %v2073 = vadd.f32 %v1847, %v2001
      %v2074 = vadd.f32 %v1848, %v2004
      %v2075 = vadd.f32 %v1849, %v2009
      %v2076 = vadd.f32 %v1850, %v2012
      %v2077 = vadd.f32 %v1851, %v2017
      %v2078 = vadd.f32 %v1852, %v2020
      %v2079 = vadd.f32 %v1853, %v2025
      %v2080 = vadd.f32 %v1854, %v2028
      %v2081 = vadd.f32 %v1855, %v2033
      %v2082 = vadd.f32 %v1856, %v2036
      %v2083 = vadd.f32 %v1857, %v2041
      %v2084 = vadd.f32 %v1858, %v2044
      %v2085 = vadd.f32 %v1859, %v2049
      %v2086 = vadd.f32 %v1860, %v2052
      %v2088 = vrot.slane %v278, 5
      %v2089 = vrot.slane %v2088, 4
      %v2090 = vrot.slane %v279, 5
      %v2091 = vsel %vm1252, %v2089, %v2090
      %v2092 = vrot.slane %v2090, 4
      %v2093 = vrot.slane %v280, 5
      %v2094 = vsel %vm1252, %v2092, %v2093
      %v2095 = vunpack.c.l.b16 %v2091
      %v2096 = vunpack.c.l.b16 %v2094
      %v2097 = vpack.c.b16 %v2096, %v2095
      %v2099 = vsel %vm728, %v2097, 0
      %v2102 = vsel %vm777, %v289, 0
      %2104 = vmatprep.subr.bf16.mxu0 0
      %2105 = vmatpush1.bf16.msra.mxu0 %v2102
      %2106 = vmatprep.subr.bf16.mxu0 0
      %2107 = vmatpush1.bf16.msra.mxu0 0
      %2108 = vmatprep.subr.bf16.mxu0 0
      %2109 = vmatpush1.bf16.msra.mxu0 0
      %2110 = vmatprep.subr.bf16.mxu0 0
      %2111 = vmatpush1.bf16.msra.mxu0 0
      %2112 = vmatprep.subr.bf16.mxu0 0
      %2113 = vmatpush1.bf16.msra.mxu0 0
      %2114 = vmatprep.subr.bf16.mxu0 0
      %2115 = vmatpush1.bf16.msra.mxu0 0
      %2116 = vmatprep.subr.bf16.mxu0 0
      %2117 = vmatpush1.bf16.msra.mxu0 0
      %2118 = vmatprep.subr.bf16.mxu0 0
      %2119 = vmatpush1.bf16.msra.mxu0 0
      %2120 = vmatprep.subr.bf16.mxu0 0
      %2121 = vmatpush1.bf16.msra.mxu0 0
      %2122 = vmatprep.subr.bf16.mxu0 0
      %2123 = vmatpush1.bf16.msra.mxu0 0
      %2124 = vmatprep.subr.bf16.mxu0 0
      %2125 = vmatpush1.bf16.msra.mxu0 0
      %2126 = vmatprep.subr.bf16.mxu0 0
      %2127 = vmatpush1.bf16.msra.mxu0 0
      %2128 = vmatprep.subr.bf16.mxu0 0
      %2129 = vmatpush1.bf16.msra.mxu0 0
      %2130 = vmatprep.subr.bf16.mxu0 0
      %2131 = vmatpush1.bf16.msra.mxu0 0
      %2132 = vmatprep.subr.bf16.mxu0 0
      %2133 = vmatpush1.bf16.msra.mxu0 0
      %2134 = vmatprep.subr.bf16.mxu0 0
      %2135 = vmatpush1.bf16.msra.mxu0 0
      %2136 = vmatprep.mubr.bf16.mxu0 0
      %2137 = vmatmul.mubr.bf16.gmra.mrb[0].mxu0 %v1417
      %v2138 = vpop.f32.mrb[0].mxu0
      %v2139 = vadd.f32 0.0, %v2138
      %v2140 = vpop.f32.mrb[0].mxu0
      %v2141 = vpop.f32.mrb[0].mxu0
      %v2142 = vadd.f32 0.0, %v2141
      %v2143 = vpop.f32.mrb[0].mxu0
      %2144 = vmatprep.mubr.bf16.mxu0 0
      %2145 = vmatmul.mubr.bf16.gmra.mrb[0].mxu0 %v1420
      %v2146 = vpop.f32.mrb[0].mxu0
      %v2147 = vadd.f32 0.0, %v2146
      %v2148 = vpop.f32.mrb[0].mxu0
      %v2149 = vpop.f32.mrb[0].mxu0
      %v2150 = vadd.f32 0.0, %v2149
      %v2151 = vpop.f32.mrb[0].mxu0
      %2152 = vmatprep.mubr.bf16.mxu0 0
      %2153 = vmatmul.mubr.bf16.gmra.mrb[0].mxu0 %v1423
      %v2154 = vpop.f32.mrb[0].mxu0
      %v2155 = vadd.f32 0.0, %v2154
      %v2156 = vpop.f32.mrb[0].mxu0
      %v2157 = vpop.f32.mrb[0].mxu0
      %v2158 = vadd.f32 0.0, %v2157
      %v2159 = vpop.f32.mrb[0].mxu0
      %2160 = vmatprep.mubr.bf16.mxu0 0
      %2161 = vmatmul.mubr.bf16.gmra.mrb[0].mxu0 %v1426
      %v2162 = vpop.f32.mrb[0].mxu0
      %v2163 = vadd.f32 0.0, %v2162
      %v2164 = vpop.f32.mrb[0].mxu0
      %v2165 = vpop.f32.mrb[0].mxu0
      %v2166 = vadd.f32 0.0, %v2165
      %v2167 = vpop.f32.mrb[0].mxu0
      %2168 = vmatprep.mubr.bf16.mxu0 0
      %2169 = vmatmul.mubr.bf16.gmra.mrb[0].mxu0 %v1429
      %v2170 = vpop.f32.mrb[0].mxu0
      %v2171 = vadd.f32 0.0, %v2170
      %v2172 = vpop.f32.mrb[0].mxu0
      %v2173 = vpop.f32.mrb[0].mxu0
      %v2174 = vadd.f32 0.0, %v2173
      %v2175 = vpop.f32.mrb[0].mxu0
      %2176 = vmatprep.mubr.bf16.mxu0 0
      %2177 = vmatmul.mubr.bf16.gmra.mrb[0].mxu0 %v1432
      %v2178 = vpop.f32.mrb[0].mxu0
      %v2179 = vadd.f32 0.0, %v2178
      %v2180 = vpop.f32.mrb[0].mxu0
      %v2181 = vpop.f32.mrb[0].mxu0
      %v2182 = vadd.f32 0.0, %v2181
      %v2183 = vpop.f32.mrb[0].mxu0
      %2184 = vmatprep.mubr.bf16.mxu0 0
      %2185 = vmatmul.mubr.bf16.gmra.mrb[0].mxu0 %v1435
      %v2186 = vpop.f32.mrb[0].mxu0
      %v2187 = vadd.f32 0.0, %v2186
      %v2188 = vpop.f32.mrb[0].mxu0
      %v2189 = vpop.f32.mrb[0].mxu0
      %v2190 = vadd.f32 0.0, %v2189
      %v2191 = vpop.f32.mrb[0].mxu0
      %2192 = vmatprep.mubr.bf16.mxu0 0
      %2193 = vmatmul.mubr.bf16.gmra.mrb[0].mxu0 %v1438
      %v2194 = vpop.f32.mrb[0].mxu0
      %v2195 = vadd.f32 0.0, %v2194
      %v2196 = vpop.f32.mrb[0].mxu0
      %v2197 = vpop.f32.mrb[0].mxu0
      %v2198 = vadd.f32 0.0, %v2197
      %v2199 = vpop.f32.mrb[0].mxu0
      %2200 = vmatprep.mubr.bf16.mxu0 0
      %2201 = vmatmul.mubr.bf16.gmra.mrb[0].mxu0 %v1441
      %v2202 = vpop.f32.mrb[0].mxu0
      %v2203 = vadd.f32 0.0, %v2202
      %v2204 = vpop.f32.mrb[0].mxu0
      %v2205 = vpop.f32.mrb[0].mxu0
      %v2206 = vadd.f32 0.0, %v2205
      %v2207 = vpop.f32.mrb[0].mxu0
      %2208 = vmatprep.mubr.bf16.mxu0 0
      %2209 = vmatmul.mubr.bf16.gmra.mrb[0].mxu0 %v1444
      %v2210 = vpop.f32.mrb[0].mxu0
      %v2211 = vadd.f32 0.0, %v2210
      %v2212 = vpop.f32.mrb[0].mxu0
      %v2213 = vpop.f32.mrb[0].mxu0
      %v2214 = vadd.f32 0.0, %v2213
      %v2215 = vpop.f32.mrb[0].mxu0
      %2216 = vmatprep.mubr.bf16.mxu0 0
      %2217 = vmatmul.mubr.bf16.gmra.mrb[0].mxu0 %v1447
      %v2218 = vpop.f32.mrb[0].mxu0
      %v2219 = vadd.f32 0.0, %v2218
      %v2220 = vpop.f32.mrb[0].mxu0
      %v2221 = vpop.f32.mrb[0].mxu0
      %v2222 = vadd.f32 0.0, %v2221
      %v2223 = vpop.f32.mrb[0].mxu0
      %2224 = vmatprep.mubr.bf16.mxu0 0
      %2225 = vmatmul.mubr.bf16.gmra.mrb[0].mxu0 %v1450
      %v2226 = vpop.f32.mrb[0].mxu0
      %v2227 = vadd.f32 0.0, %v2226
      %v2228 = vpop.f32.mrb[0].mxu0
      %v2229 = vpop.f32.mrb[0].mxu0
      %v2230 = vadd.f32 0.0, %v2229
      %v2231 = vpop.f32.mrb[0].mxu0
      %2232 = vmatprep.mubr.bf16.mxu0 0
      %2233 = vmatmul.mubr.bf16.gmra.mrb[0].mxu0 %v1453
      %v2234 = vpop.f32.mrb[0].mxu0
      %v2235 = vadd.f32 0.0, %v2234
      %v2236 = vpop.f32.mrb[0].mxu0
      %v2237 = vpop.f32.mrb[0].mxu0
      %v2238 = vadd.f32 0.0, %v2237
      %v2239 = vpop.f32.mrb[0].mxu0
      %2240 = vmatprep.mubr.bf16.mxu0 0
      %2241 = vmatmul.mubr.bf16.gmra.mrb[0].mxu0 %v1456
      %v2242 = vpop.f32.mrb[0].mxu0
      %v2243 = vadd.f32 0.0, %v2242
      %v2244 = vpop.f32.mrb[0].mxu0
      %v2245 = vpop.f32.mrb[0].mxu0
      %v2246 = vadd.f32 0.0, %v2245
      %v2247 = vpop.f32.mrb[0].mxu0
      %2248 = vmatprep.mubr.bf16.mxu0 0
      %2249 = vmatmul.mubr.bf16.gmra.mrb[0].mxu0 %v1459
      %v2250 = vpop.f32.mrb[0].mxu0
      %v2251 = vadd.f32 0.0, %v2250
      %v2252 = vpop.f32.mrb[0].mxu0
      %v2253 = vpop.f32.mrb[0].mxu0
      %v2254 = vadd.f32 0.0, %v2253
      %v2255 = vpop.f32.mrb[0].mxu0
      %2256 = vmatprep.mubr.bf16.mxu0 0
      %2257 = vmatmul.mubr.bf16.gmra.mrb[0].mxu0 %v2099
      %v2258 = vpop.f32.mrb[0].mxu0
      %v2259 = vadd.f32 0.0, %v2258
      %v2260 = vpop.f32.mrb[0].mxu0
      %v2261 = vpop.f32.mrb[0].mxu0
      %v2262 = vadd.f32 0.0, %v2261
      %v2263 = vpop.f32.mrb[0].mxu0
      %2264 = vdwg.mxu0
      %v2265 = vadd.f32 %v2055, %v2139
      %v2266 = vadd.f32 %v2056, %v2142
      %v2267 = vadd.f32 %v2057, %v2147
      %v2268 = vadd.f32 %v2058, %v2150
      %v2269 = vadd.f32 %v2059, %v2155
      %v2270 = vadd.f32 %v2060, %v2158
      %v2271 = vadd.f32 %v2061, %v2163
      %v2272 = vadd.f32 %v2062, %v2166
      %v2273 = vadd.f32 %v2063, %v2171
      %v2274 = vadd.f32 %v2064, %v2174
      %v2275 = vadd.f32 %v2065, %v2179
      %v2276 = vadd.f32 %v2066, %v2182
      %v2277 = vadd.f32 %v2067, %v2187
      %v2278 = vadd.f32 %v2068, %v2190
      %v2279 = vadd.f32 %v2069, %v2195
      %v2280 = vadd.f32 %v2070, %v2198
      %v2281 = vadd.f32 %v2071, %v2203
      %v2282 = vadd.f32 %v2072, %v2206
      %v2283 = vadd.f32 %v2073, %v2211
      %v2284 = vadd.f32 %v2074, %v2214
      %v2285 = vadd.f32 %v2075, %v2219
      %v2286 = vadd.f32 %v2076, %v2222
      %v2287 = vadd.f32 %v2077, %v2227
      %v2288 = vadd.f32 %v2078, %v2230
      %v2289 = vadd.f32 %v2079, %v2235
      %v2290 = vadd.f32 %v2080, %v2238
      %v2291 = vadd.f32 %v2081, %v2243
      %v2292 = vadd.f32 %v2082, %v2246
      %v2293 = vadd.f32 %v2083, %v2251
      %v2294 = vadd.f32 %v2084, %v2254
      %v2295 = vadd.f32 %v2085, %v2259
      %v2296 = vadd.f32 %v2086, %v2262
      %v2299 = vunpack.c.l.b16 %v281
      %v2300 = vunpack.c.l.b16 %v282
      %v2301 = vpack.c.b16 %v2300, %v2299
      %v2303 = vsel %vm728, %v2301, 0
      %v2306 = vsel %vm777, %v290, 0
      %2308 = vmatprep.subr.bf16.mxu0 0
      %2309 = vmatpush1.bf16.msra.mxu0 %v2306
      %2310 = vmatprep.subr.bf16.mxu0 0
      %2311 = vmatpush1.bf16.msra.mxu0 0
      %2312 = vmatprep.subr.bf16.mxu0 0
      %2313 = vmatpush1.bf16.msra.mxu0 0
      %2314 = vmatprep.subr.bf16.mxu0 0
      %2315 = vmatpush1.bf16.msra.mxu0 0
      %2316 = vmatprep.subr.bf16.mxu0 0
      %2317 = vmatpush1.bf16.msra.mxu0 0
      %2318 = vmatprep.subr.bf16.mxu0 0
      %2319 = vmatpush1.bf16.msra.mxu0 0
      %2320 = vmatprep.subr.bf16.mxu0 0
      %2321 = vmatpush1.bf16.msra.mxu0 0
      %2322 = vmatprep.subr.bf16.mxu0 0
      %2323 = vmatpush1.bf16.msra.mxu0 0
      %2324 = vmatprep.subr.bf16.mxu0 0
      %2325 = vmatpush1.bf16.msra.mxu0 0
      %2326 = vmatprep.subr.bf16.mxu0 0
      %2327 = vmatpush1.bf16.msra.mxu0 0
      %2328 = vmatprep.subr.bf16.mxu0 0
      %2329 = vmatpush1.bf16.msra.mxu0 0
      %2330 = vmatprep.subr.bf16.mxu0 0
      %2331 = vmatpush1.bf16.msra.mxu0 0
      %2332 = vmatprep.subr.bf16.mxu0 0
      %2333 = vmatpush1.bf16.msra.mxu0 0
      %2334 = vmatprep.subr.bf16.mxu0 0
      %2335 = vmatpush1.bf16.msra.mxu0 0
      %2336 = vmatprep.subr.bf16.mxu0 0
      %2337 = vmatpush1.bf16.msra.mxu0 0
      %2338 = vmatprep.subr.bf16.mxu0 0
      %2339 = vmatpush1.bf16.msra.mxu0 0
      %2340 = vmatprep.mubr.bf16.mxu0 0
      %2341 = vmatmul.mubr.bf16.gmra.mrb[0].mxu0 %v1029
      %v2342 = vpop.f32.mrb[0].mxu0
      %v2343 = vadd.f32 0.0, %v2342
      %v2344 = vpop.f32.mrb[0].mxu0
      %v2345 = vpop.f32.mrb[0].mxu0
      %v2346 = vadd.f32 0.0, %v2345
      %v2347 = vpop.f32.mrb[0].mxu0
      %2348 = vmatprep.mubr.bf16.mxu0 0
      %2349 = vmatmul.mubr.bf16.gmra.mrb[0].mxu0 %v1032
      %v2350 = vpop.f32.mrb[0].mxu0
      %v2351 = vadd.f32 0.0, %v2350
      %v2352 = vpop.f32.mrb[0].mxu0
      %v2353 = vpop.f32.mrb[0].mxu0
      %v2354 = vadd.f32 0.0, %v2353
      %v2355 = vpop.f32.mrb[0].mxu0
      %2356 = vmatprep.mubr.bf16.mxu0 0
      %2357 = vmatmul.mubr.bf16.gmra.mrb[0].mxu0 %v1035
      %v2358 = vpop.f32.mrb[0].mxu0
      %v2359 = vadd.f32 0.0, %v2358
      %v2360 = vpop.f32.mrb[0].mxu0
      %v2361 = vpop.f32.mrb[0].mxu0
      %v2362 = vadd.f32 0.0, %v2361
      %v2363 = vpop.f32.mrb[0].mxu0
      %2364 = vmatprep.mubr.bf16.mxu0 0
      %2365 = vmatmul.mubr.bf16.gmra.mrb[0].mxu0 %v1038
      %v2366 = vpop.f32.mrb[0].mxu0
      %v2367 = vadd.f32 0.0, %v2366
      %v2368 = vpop.f32.mrb[0].mxu0
      %v2369 = vpop.f32.mrb[0].mxu0
      %v2370 = vadd.f32 0.0, %v2369
      %v2371 = vpop.f32.mrb[0].mxu0
      %2372 = vmatprep.mubr.bf16.mxu0 0
      %2373 = vmatmul.mubr.bf16.gmra.mrb[0].mxu0 %v1041
      %v2374 = vpop.f32.mrb[0].mxu0
      %v2375 = vadd.f32 0.0, %v2374
      %v2376 = vpop.f32.mrb[0].mxu0
      %v2377 = vpop.f32.mrb[0].mxu0
      %v2378 = vadd.f32 0.0, %v2377
      %v2379 = vpop.f32.mrb[0].mxu0
      %2380 = vmatprep.mubr.bf16.mxu0 0
      %2381 = vmatmul.mubr.bf16.gmra.mrb[0].mxu0 %v1044
      %v2382 = vpop.f32.mrb[0].mxu0
      %v2383 = vadd.f32 0.0, %v2382
      %v2384 = vpop.f32.mrb[0].mxu0
      %v2385 = vpop.f32.mrb[0].mxu0
      %v2386 = vadd.f32 0.0, %v2385
      %v2387 = vpop.f32.mrb[0].mxu0
      %2388 = vmatprep.mubr.bf16.mxu0 0
      %2389 = vmatmul.mubr.bf16.gmra.mrb[0].mxu0 %v1047
      %v2390 = vpop.f32.mrb[0].mxu0
      %v2391 = vadd.f32 0.0, %v2390
      %v2392 = vpop.f32.mrb[0].mxu0
      %v2393 = vpop.f32.mrb[0].mxu0
      %v2394 = vadd.f32 0.0, %v2393
      %v2395 = vpop.f32.mrb[0].mxu0
      %2396 = vmatprep.mubr.bf16.mxu0 0
      %2397 = vmatmul.mubr.bf16.gmra.mrb[0].mxu0 %v1050
      %v2398 = vpop.f32.mrb[0].mxu0
      %v2399 = vadd.f32 0.0, %v2398
      %v2400 = vpop.f32.mrb[0].mxu0
      %v2401 = vpop.f32.mrb[0].mxu0
      %v2402 = vadd.f32 0.0, %v2401
      %v2403 = vpop.f32.mrb[0].mxu0
      %2404 = vmatprep.mubr.bf16.mxu0 0
      %2405 = vmatmul.mubr.bf16.gmra.mrb[0].mxu0 %v1053
      %v2406 = vpop.f32.mrb[0].mxu0
      %v2407 = vadd.f32 0.0, %v2406
      %v2408 = vpop.f32.mrb[0].mxu0
      %v2409 = vpop.f32.mrb[0].mxu0
      %v2410 = vadd.f32 0.0, %v2409
      %v2411 = vpop.f32.mrb[0].mxu0
      %2412 = vmatprep.mubr.bf16.mxu0 0
      %2413 = vmatmul.mubr.bf16.gmra.mrb[0].mxu0 %v1056
      %v2414 = vpop.f32.mrb[0].mxu0
      %v2415 = vadd.f32 0.0, %v2414
      %v2416 = vpop.f32.mrb[0].mxu0
      %v2417 = vpop.f32.mrb[0].mxu0
      %v2418 = vadd.f32 0.0, %v2417
      %v2419 = vpop.f32.mrb[0].mxu0
      %2420 = vmatprep.mubr.bf16.mxu0 0
      %2421 = vmatmul.mubr.bf16.gmra.mrb[0].mxu0 %v1059
      %v2422 = vpop.f32.mrb[0].mxu0
      %v2423 = vadd.f32 0.0, %v2422
      %v2424 = vpop.f32.mrb[0].mxu0
      %v2425 = vpop.f32.mrb[0].mxu0
      %v2426 = vadd.f32 0.0, %v2425
      %v2427 = vpop.f32.mrb[0].mxu0
      %2428 = vmatprep.mubr.bf16.mxu0 0
      %2429 = vmatmul.mubr.bf16.gmra.mrb[0].mxu0 %v1062
      %v2430 = vpop.f32.mrb[0].mxu0
      %v2431 = vadd.f32 0.0, %v2430
      %v2432 = vpop.f32.mrb[0].mxu0
      %v2433 = vpop.f32.mrb[0].mxu0
      %v2434 = vadd.f32 0.0, %v2433
      %v2435 = vpop.f32.mrb[0].mxu0
      %2436 = vmatprep.mubr.bf16.mxu0 0
      %2437 = vmatmul.mubr.bf16.gmra.mrb[0].mxu0 %v1065
      %v2438 = vpop.f32.mrb[0].mxu0
      %v2439 = vadd.f32 0.0, %v2438
      %v2440 = vpop.f32.mrb[0].mxu0
      %v2441 = vpop.f32.mrb[0].mxu0
      %v2442 = vadd.f32 0.0, %v2441
      %v2443 = vpop.f32.mrb[0].mxu0
      %2444 = vmatprep.mubr.bf16.mxu0 0
      %2445 = vmatmul.mubr.bf16.gmra.mrb[0].mxu0 %v1068
      %v2446 = vpop.f32.mrb[0].mxu0
      %v2447 = vadd.f32 0.0, %v2446
      %v2448 = vpop.f32.mrb[0].mxu0
      %v2449 = vpop.f32.mrb[0].mxu0
      %v2450 = vadd.f32 0.0, %v2449
      %v2451 = vpop.f32.mrb[0].mxu0
      %2452 = vmatprep.mubr.bf16.mxu0 0
      %2453 = vmatmul.mubr.bf16.gmra.mrb[0].mxu0 %v1663
      %v2454 = vpop.f32.mrb[0].mxu0
      %v2455 = vadd.f32 0.0, %v2454
      %v2456 = vpop.f32.mrb[0].mxu0
      %v2457 = vpop.f32.mrb[0].mxu0
      %v2458 = vadd.f32 0.0, %v2457
      %v2459 = vpop.f32.mrb[0].mxu0
      %2460 = vmatprep.mubr.bf16.mxu0 0
      %2461 = vmatmul.mubr.bf16.gmra.mrb[0].mxu0 %v2303
      %v2462 = vpop.f32.mrb[0].mxu0
      %v2463 = vadd.f32 0.0, %v2462
      %v2464 = vpop.f32.mrb[0].mxu0
      %v2465 = vpop.f32.mrb[0].mxu0
      %v2466 = vadd.f32 0.0, %v2465
      %v2467 = vpop.f32.mrb[0].mxu0
      %2468 = vdwg.mxu0
      %v2469 = vadd.f32 %v2265, %v2343
      %v2470 = vadd.f32 %v2266, %v2346
      %v2471 = vadd.f32 %v2267, %v2351
      %v2472 = vadd.f32 %v2268, %v2354
      %v2473 = vadd.f32 %v2269, %v2359
      %v2474 = vadd.f32 %v2270, %v2362
      %v2475 = vadd.f32 %v2271, %v2367
      %v2476 = vadd.f32 %v2272, %v2370
      %v2477 = vadd.f32 %v2273, %v2375
      %v2478 = vadd.f32 %v2274, %v2378
      %v2479 = vadd.f32 %v2275, %v2383
      %v2480 = vadd.f32 %v2276, %v2386
      %v2481 = vadd.f32 %v2277, %v2391
      %v2482 = vadd.f32 %v2278, %v2394
      %v2483 = vadd.f32 %v2279, %v2399
      %v2484 = vadd.f32 %v2280, %v2402
      %v2485 = vadd.f32 %v2281, %v2407
      %v2486 = vadd.f32 %v2282, %v2410
      %v2487 = vadd.f32 %v2283, %v2415
      %v2488 = vadd.f32 %v2284, %v2418
      %v2489 = vadd.f32 %v2285, %v2423
      %v2490 = vadd.f32 %v2286, %v2426
      %v2491 = vadd.f32 %v2287, %v2431
      %v2492 = vadd.f32 %v2288, %v2434
      %v2493 = vadd.f32 %v2289, %v2439
      %v2494 = vadd.f32 %v2290, %v2442
      %v2495 = vadd.f32 %v2291, %v2447
      %v2496 = vadd.f32 %v2292, %v2450
      %v2497 = vadd.f32 %v2293, %v2455
      %v2498 = vadd.f32 %v2294, %v2458
      %v2499 = vadd.f32 %v2295, %v2463
      %v2500 = vadd.f32 %v2296, %v2466
      %v2502 = vshrl.u32 %v281, 16
      %v2504 = vrot.slane %v2502, 4
      %v2505 = vshll.u32 %v281, 16
      %v2507 = vrot.slane %v2505, 5
      %v2508 = vor.u32 %v2504, %v2507
      %v2509 = vrot.slane %v2508, 4
      %v2511 = vshll.u32 %v282, 16
      %v2513 = vrot.slane %v2511, 5
      %v2514 = vsel %vm295, %v2509, %v2513
      %v2515 = vshrl.u32 %v282, 16
      %v2517 = vrot.slane %v2515, 4
      %v2518 = vor.u32 %v2517, %v2513
      %v2519 = vrot.slane %v2518, 4
      %v2521 = vshll.u32 %v283, 16
      %v2523 = vrot.slane %v2521, 5
      %v2524 = vsel %vm295, %v2519, %v2523
      %v2525 = vunpack.c.l.b16 %v2514
      %v2526 = vunpack.c.l.b16 %v2524
      %v2527 = vpack.c.b16 %v2526, %v2525
      %v2529 = vsel %vm728, %v2527, 0
      %v2532 = vsel %vm777, %v291, 0
      %2534 = vmatprep.subr.bf16.mxu0 0
      %2535 = vmatpush1.bf16.msra.mxu0 %v2532
      %2536 = vmatprep.subr.bf16.mxu0 0
      %2537 = vmatpush1.bf16.msra.mxu0 0
      %2538 = vmatprep.subr.bf16.mxu0 0
      %2539 = vmatpush1.bf16.msra.mxu0 0
      %2540 = vmatprep.subr.bf16.mxu0 0
      %2541 = vmatpush1.bf16.msra.mxu0 0
      %2542 = vmatprep.subr.bf16.mxu0 0
      %2543 = vmatpush1.bf16.msra.mxu0 0
      %2544 = vmatprep.subr.bf16.mxu0 0
      %2545 = vmatpush1.bf16.msra.mxu0 0
      %2546 = vmatprep.subr.bf16.mxu0 0
      %2547 = vmatpush1.bf16.msra.mxu0 0
      %2548 = vmatprep.subr.bf16.mxu0 0
      %2549 = vmatpush1.bf16.msra.mxu0 0
      %2550 = vmatprep.subr.bf16.mxu0 0
      %2551 = vmatpush1.bf16.msra.mxu0 0
      %2552 = vmatprep.subr.bf16.mxu0 0
      %2553 = vmatpush1.bf16.msra.mxu0 0
      %2554 = vmatprep.subr.bf16.mxu0 0
      %2555 = vmatpush1.bf16.msra.mxu0 0
      %2556 = vmatprep.subr.bf16.mxu0 0
      %2557 = vmatpush1.bf16.msra.mxu0 0
      %2558 = vmatprep.subr.bf16.mxu0 0
      %2559 = vmatpush1.bf16.msra.mxu0 0
      %2560 = vmatprep.subr.bf16.mxu0 0
      %2561 = vmatpush1.bf16.msra.mxu0 0
      %2562 = vmatprep.subr.bf16.mxu0 0
      %2563 = vmatpush1.bf16.msra.mxu0 0
      %2564 = vmatprep.subr.bf16.mxu0 0
      %2565 = vmatpush1.bf16.msra.mxu0 0
      %2566 = vmatprep.mubr.bf16.mxu0 0
      %2567 = vmatmul.mubr.bf16.gmra.mrb[0].mxu0 %v736
      %v2568 = vpop.f32.mrb[0].mxu0
      %v2569 = vadd.f32 0.0, %v2568
      %v2570 = vpop.f32.mrb[0].mxu0
      %v2571 = vpop.f32.mrb[0].mxu0
      %v2572 = vadd.f32 0.0, %v2571
      %v2573 = vpop.f32.mrb[0].mxu0
      %2574 = vmatprep.mubr.bf16.mxu0 0
      %2575 = vmatmul.mubr.bf16.gmra.mrb[0].mxu0 %v739
      %v2576 = vpop.f32.mrb[0].mxu0
      %v2577 = vadd.f32 0.0, %v2576
      %v2578 = vpop.f32.mrb[0].mxu0
      %v2579 = vpop.f32.mrb[0].mxu0
      %v2580 = vadd.f32 0.0, %v2579
      %v2581 = vpop.f32.mrb[0].mxu0
      %2582 = vmatprep.mubr.bf16.mxu0 0
      %2583 = vmatmul.mubr.bf16.gmra.mrb[0].mxu0 %v742
      %v2584 = vpop.f32.mrb[0].mxu0
      %v2585 = vadd.f32 0.0, %v2584
      %v2586 = vpop.f32.mrb[0].mxu0
      %v2587 = vpop.f32.mrb[0].mxu0
      %v2588 = vadd.f32 0.0, %v2587
      %v2589 = vpop.f32.mrb[0].mxu0
      %2590 = vmatprep.mubr.bf16.mxu0 0
      %2591 = vmatmul.mubr.bf16.gmra.mrb[0].mxu0 %v745
      %v2592 = vpop.f32.mrb[0].mxu0
      %v2593 = vadd.f32 0.0, %v2592
      %v2594 = vpop.f32.mrb[0].mxu0
      %v2595 = vpop.f32.mrb[0].mxu0
      %v2596 = vadd.f32 0.0, %v2595
      %v2597 = vpop.f32.mrb[0].mxu0
      %2598 = vmatprep.mubr.bf16.mxu0 0
      %2599 = vmatmul.mubr.bf16.gmra.mrb[0].mxu0 %v748
      %v2600 = vpop.f32.mrb[0].mxu0
      %v2601 = vadd.f32 0.0, %v2600
      %v2602 = vpop.f32.mrb[0].mxu0
      %v2603 = vpop.f32.mrb[0].mxu0
      %v2604 = vadd.f32 0.0, %v2603
      %v2605 = vpop.f32.mrb[0].mxu0
      %2606 = vmatprep.mubr.bf16.mxu0 0
      %2607 = vmatmul.mubr.bf16.gmra.mrb[0].mxu0 %v751
      %v2608 = vpop.f32.mrb[0].mxu0
      %v2609 = vadd.f32 0.0, %v2608
      %v2610 = vpop.f32.mrb[0].mxu0
      %v2611 = vpop.f32.mrb[0].mxu0
      %v2612 = vadd.f32 0.0, %v2611
      %v2613 = vpop.f32.mrb[0].mxu0
      %2614 = vmatprep.mubr.bf16.mxu0 0
      %2615 = vmatmul.mubr.bf16.gmra.mrb[0].mxu0 %v754
      %v2616 = vpop.f32.mrb[0].mxu0
      %v2617 = vadd.f32 0.0, %v2616
      %v2618 = vpop.f32.mrb[0].mxu0
      %v2619 = vpop.f32.mrb[0].mxu0
      %v2620 = vadd.f32 0.0, %v2619
      %v2621 = vpop.f32.mrb[0].mxu0
      %2622 = vmatprep.mubr.bf16.mxu0 0
      %2623 = vmatmul.mubr.bf16.gmra.mrb[0].mxu0 %v757
      %v2624 = vpop.f32.mrb[0].mxu0
      %v2625 = vadd.f32 0.0, %v2624
      %v2626 = vpop.f32.mrb[0].mxu0
      %v2627 = vpop.f32.mrb[0].mxu0
      %v2628 = vadd.f32 0.0, %v2627
      %v2629 = vpop.f32.mrb[0].mxu0
      %2630 = vmatprep.mubr.bf16.mxu0 0
      %2631 = vmatmul.mubr.bf16.gmra.mrb[0].mxu0 %v760
      %v2632 = vpop.f32.mrb[0].mxu0
      %v2633 = vadd.f32 0.0, %v2632
      %v2634 = vpop.f32.mrb[0].mxu0
      %v2635 = vpop.f32.mrb[0].mxu0
      %v2636 = vadd.f32 0.0, %v2635
      %v2637 = vpop.f32.mrb[0].mxu0
      %2638 = vmatprep.mubr.bf16.mxu0 0
      %2639 = vmatmul.mubr.bf16.gmra.mrb[0].mxu0 %v763
      %v2640 = vpop.f32.mrb[0].mxu0
      %v2641 = vadd.f32 0.0, %v2640
      %v2642 = vpop.f32.mrb[0].mxu0
      %v2643 = vpop.f32.mrb[0].mxu0
      %v2644 = vadd.f32 0.0, %v2643
      %v2645 = vpop.f32.mrb[0].mxu0
      %2646 = vmatprep.mubr.bf16.mxu0 0
      %2647 = vmatmul.mubr.bf16.gmra.mrb[0].mxu0 %v766
      %v2648 = vpop.f32.mrb[0].mxu0
      %v2649 = vadd.f32 0.0, %v2648
      %v2650 = vpop.f32.mrb[0].mxu0
      %v2651 = vpop.f32.mrb[0].mxu0
      %v2652 = vadd.f32 0.0, %v2651
      %v2653 = vpop.f32.mrb[0].mxu0
      %2654 = vmatprep.mubr.bf16.mxu0 0
      %2655 = vmatmul.mubr.bf16.gmra.mrb[0].mxu0 %v769
      %v2656 = vpop.f32.mrb[0].mxu0
      %v2657 = vadd.f32 0.0, %v2656
      %v2658 = vpop.f32.mrb[0].mxu0
      %v2659 = vpop.f32.mrb[0].mxu0
      %v2660 = vadd.f32 0.0, %v2659
      %v2661 = vpop.f32.mrb[0].mxu0
      %2662 = vmatprep.mubr.bf16.mxu0 0
      %2663 = vmatmul.mubr.bf16.gmra.mrb[0].mxu0 %v772
      %v2664 = vpop.f32.mrb[0].mxu0
      %v2665 = vadd.f32 0.0, %v2664
      %v2666 = vpop.f32.mrb[0].mxu0
      %v2667 = vpop.f32.mrb[0].mxu0
      %v2668 = vadd.f32 0.0, %v2667
      %v2669 = vpop.f32.mrb[0].mxu0
      %2670 = vmatprep.mubr.bf16.mxu0 0
      %2671 = vmatmul.mubr.bf16.gmra.mrb[0].mxu0 %v775
      %v2672 = vpop.f32.mrb[0].mxu0
      %v2673 = vadd.f32 0.0, %v2672
      %v2674 = vpop.f32.mrb[0].mxu0
      %v2675 = vpop.f32.mrb[0].mxu0
      %v2676 = vadd.f32 0.0, %v2675
      %v2677 = vpop.f32.mrb[0].mxu0
      %2678 = vmatprep.mubr.bf16.mxu0 0
      %2679 = vmatmul.mubr.bf16.gmra.mrb[0].mxu0 %v1889
      %v2680 = vpop.f32.mrb[0].mxu0
      %v2681 = vadd.f32 0.0, %v2680
      %v2682 = vpop.f32.mrb[0].mxu0
      %v2683 = vpop.f32.mrb[0].mxu0
      %v2684 = vadd.f32 0.0, %v2683
      %v2685 = vpop.f32.mrb[0].mxu0
      %2686 = vmatprep.mubr.bf16.mxu0 0
      %2687 = vmatmul.mubr.bf16.gmra.mrb[0].mxu0 %v2529
      %v2688 = vpop.f32.mrb[0].mxu0
      %v2689 = vadd.f32 0.0, %v2688
      %v2690 = vpop.f32.mrb[0].mxu0
      %v2691 = vpop.f32.mrb[0].mxu0
      %v2692 = vadd.f32 0.0, %v2691
      %v2693 = vpop.f32.mrb[0].mxu0
      %2694 = vdwg.mxu0
      %v2695 = vadd.f32 %v2469, %v2569
      %v2696 = vadd.f32 %v2470, %v2572
      %v2697 = vadd.f32 %v2471, %v2577
      %v2698 = vadd.f32 %v2472, %v2580
      %v2699 = vadd.f32 %v2473, %v2585
      %v2700 = vadd.f32 %v2474, %v2588
      %v2701 = vadd.f32 %v2475, %v2593
      %v2702 = vadd.f32 %v2476, %v2596
      %v2703 = vadd.f32 %v2477, %v2601
      %v2704 = vadd.f32 %v2478, %v2604
      %v2705 = vadd.f32 %v2479, %v2609
      %v2706 = vadd.f32 %v2480, %v2612
      %v2707 = vadd.f32 %v2481, %v2617
      %v2708 = vadd.f32 %v2482, %v2620
      %v2709 = vadd.f32 %v2483, %v2625
      %v2710 = vadd.f32 %v2484, %v2628
      %v2711 = vadd.f32 %v2485, %v2633
      %v2712 = vadd.f32 %v2486, %v2636
      %v2713 = vadd.f32 %v2487, %v2641
      %v2714 = vadd.f32 %v2488, %v2644
      %v2715 = vadd.f32 %v2489, %v2649
      %v2716 = vadd.f32 %v2490, %v2652
      %v2717 = vadd.f32 %v2491, %v2657
      %v2718 = vadd.f32 %v2492, %v2660
      %v2719 = vadd.f32 %v2493, %v2665
      %v2720 = vadd.f32 %v2494, %v2668
      %v2721 = vadd.f32 %v2495, %v2673
      %v2722 = vadd.f32 %v2496, %v2676
      %v2723 = vadd.f32 %v2497, %v2681
      %v2724 = vadd.f32 %v2498, %v2684
      %v2725 = vadd.f32 %v2499, %v2689
      %v2726 = vadd.f32 %v2500, %v2692
      %v2728 = vrot.slane %v281, 5
      %v2729 = vrot.slane %v2728, 4
      %v2730 = vrot.slane %v282, 5
      %v2731 = vsel %vm1252, %v2729, %v2730
      %v2732 = vrot.slane %v2730, 4
      %v2733 = vrot.slane %v283, 5
      %v2734 = vsel %vm1252, %v2732, %v2733
      %v2735 = vunpack.c.l.b16 %v2731
      %v2736 = vunpack.c.l.b16 %v2734
      %v2737 = vpack.c.b16 %v2736, %v2735
      %v2739 = vsel %vm728, %v2737, 0
      %v2742 = vsel %vm777, %v292, 0
      %2744 = vmatprep.subr.bf16.mxu0 0
      %2745 = vmatpush1.bf16.msra.mxu0 %v2742
      %2746 = vmatprep.subr.bf16.mxu0 0
      %2747 = vmatpush1.bf16.msra.mxu0 0
      %2748 = vmatprep.subr.bf16.mxu0 0
      %2749 = vmatpush1.bf16.msra.mxu0 0
      %2750 = vmatprep.subr.bf16.mxu0 0
      %2751 = vmatpush1.bf16.msra.mxu0 0
      %2752 = vmatprep.subr.bf16.mxu0 0
      %2753 = vmatpush1.bf16.msra.mxu0 0
      %2754 = vmatprep.subr.bf16.mxu0 0
      %2755 = vmatpush1.bf16.msra.mxu0 0
      %2756 = vmatprep.subr.bf16.mxu0 0
      %2757 = vmatpush1.bf16.msra.mxu0 0
      %2758 = vmatprep.subr.bf16.mxu0 0
      %2759 = vmatpush1.bf16.msra.mxu0 0
      %2760 = vmatprep.subr.bf16.mxu0 0
      %2761 = vmatpush1.bf16.msra.mxu0 0
      %2762 = vmatprep.subr.bf16.mxu0 0
      %2763 = vmatpush1.bf16.msra.mxu0 0
      %2764 = vmatprep.subr.bf16.mxu0 0
      %2765 = vmatpush1.bf16.msra.mxu0 0
      %2766 = vmatprep.subr.bf16.mxu0 0
      %2767 = vmatpush1.bf16.msra.mxu0 0
      %2768 = vmatprep.subr.bf16.mxu0 0
      %2769 = vmatpush1.bf16.msra.mxu0 0
      %2770 = vmatprep.subr.bf16.mxu0 0
      %2771 = vmatpush1.bf16.msra.mxu0 0
      %2772 = vmatprep.subr.bf16.mxu0 0
      %2773 = vmatpush1.bf16.msra.mxu0 0
      %2774 = vmatprep.subr.bf16.mxu0 0
      %2775 = vmatpush1.bf16.msra.mxu0 0
      %2776 = vmatprep.mubr.bf16.mxu0 0
      %2777 = vmatmul.mubr.bf16.gmra.mrb[0].mxu0 %v1420
      %v2778 = vpop.f32.mrb[0].mxu0
      %v2779 = vadd.f32 0.0, %v2778
      %v2780 = vpop.f32.mrb[0].mxu0
      %v2781 = vpop.f32.mrb[0].mxu0
      %v2782 = vadd.f32 0.0, %v2781
      %v2783 = vpop.f32.mrb[0].mxu0
      %2784 = vmatprep.mubr.bf16.mxu0 0
      %2785 = vmatmul.mubr.bf16.gmra.mrb[0].mxu0 %v1423
      %v2786 = vpop.f32.mrb[0].mxu0
      %v2787 = vadd.f32 0.0, %v2786
      %v2788 = vpop.f32.mrb[0].mxu0
      %v2789 = vpop.f32.mrb[0].mxu0
      %v2790 = vadd.f32 0.0, %v2789
      %v2791 = vpop.f32.mrb[0].mxu0
      %2792 = vmatprep.mubr.bf16.mxu0 0
      %2793 = vmatmul.mubr.bf16.gmra.mrb[0].mxu0 %v1426
      %v2794 = vpop.f32.mrb[0].mxu0
      %v2795 = vadd.f32 0.0, %v2794
      %v2796 = vpop.f32.mrb[0].mxu0
      %v2797 = vpop.f32.mrb[0].mxu0
      %v2798 = vadd.f32 0.0, %v2797
      %v2799 = vpop.f32.mrb[0].mxu0
      %2800 = vmatprep.mubr.bf16.mxu0 0
      %2801 = vmatmul.mubr.bf16.gmra.mrb[0].mxu0 %v1429
      %v2802 = vpop.f32.mrb[0].mxu0
      %v2803 = vadd.f32 0.0, %v2802
      %v2804 = vpop.f32.mrb[0].mxu0
      %v2805 = vpop.f32.mrb[0].mxu0
      %v2806 = vadd.f32 0.0, %v2805
      %v2807 = vpop.f32.mrb[0].mxu0
      %2808 = vmatprep.mubr.bf16.mxu0 0
      %2809 = vmatmul.mubr.bf16.gmra.mrb[0].mxu0 %v1432
      %v2810 = vpop.f32.mrb[0].mxu0
      %v2811 = vadd.f32 0.0, %v2810
      %v2812 = vpop.f32.mrb[0].mxu0
      %v2813 = vpop.f32.mrb[0].mxu0
      %v2814 = vadd.f32 0.0, %v2813
      %v2815 = vpop.f32.mrb[0].mxu0
      %2816 = vmatprep.mubr.bf16.mxu0 0
      %2817 = vmatmul.mubr.bf16.gmra.mrb[0].mxu0 %v1435
      %v2818 = vpop.f32.mrb[0].mxu0
      %v2819 = vadd.f32 0.0, %v2818
      %v2820 = vpop.f32.mrb[0].mxu0
      %v2821 = vpop.f32.mrb[0].mxu0
      %v2822 = vadd.f32 0.0, %v2821
      %v2823 = vpop.f32.mrb[0].mxu0
      %2824 = vmatprep.mubr.bf16.mxu0 0
      %2825 = vmatmul.mubr.bf16.gmra.mrb[0].mxu0 %v1438
      %v2826 = vpop.f32.mrb[0].mxu0
      %v2827 = vadd.f32 0.0, %v2826
      %v2828 = vpop.f32.mrb[0].mxu0
      %v2829 = vpop.f32.mrb[0].mxu0
      %v2830 = vadd.f32 0.0, %v2829
      %v2831 = vpop.f32.mrb[0].mxu0
      %2832 = vmatprep.mubr.bf16.mxu0 0
      %2833 = vmatmul.mubr.bf16.gmra.mrb[0].mxu0 %v1441
      %v2834 = vpop.f32.mrb[0].mxu0
      %v2835 = vadd.f32 0.0, %v2834
      %v2836 = vpop.f32.mrb[0].mxu0
      %v2837 = vpop.f32.mrb[0].mxu0
      %v2838 = vadd.f32 0.0, %v2837
      %v2839 = vpop.f32.mrb[0].mxu0
      %2840 = vmatprep.mubr.bf16.mxu0 0
      %2841 = vmatmul.mubr.bf16.gmra.mrb[0].mxu0 %v1444
      %v2842 = vpop.f32.mrb[0].mxu0
      %v2843 = vadd.f32 0.0, %v2842
      %v2844 = vpop.f32.mrb[0].mxu0
      %v2845 = vpop.f32.mrb[0].mxu0
      %v2846 = vadd.f32 0.0, %v2845
      %v2847 = vpop.f32.mrb[0].mxu0
      %2848 = vmatprep.mubr.bf16.mxu0 0
      %2849 = vmatmul.mubr.bf16.gmra.mrb[0].mxu0 %v1447
      %v2850 = vpop.f32.mrb[0].mxu0
      %v2851 = vadd.f32 0.0, %v2850
      %v2852 = vpop.f32.mrb[0].mxu0
      %v2853 = vpop.f32.mrb[0].mxu0
      %v2854 = vadd.f32 0.0, %v2853
      %v2855 = vpop.f32.mrb[0].mxu0
      %2856 = vmatprep.mubr.bf16.mxu0 0
      %2857 = vmatmul.mubr.bf16.gmra.mrb[0].mxu0 %v1450
      %v2858 = vpop.f32.mrb[0].mxu0
      %v2859 = vadd.f32 0.0, %v2858
      %v2860 = vpop.f32.mrb[0].mxu0
      %v2861 = vpop.f32.mrb[0].mxu0
      %v2862 = vadd.f32 0.0, %v2861
      %v2863 = vpop.f32.mrb[0].mxu0
      %2864 = vmatprep.mubr.bf16.mxu0 0
      %2865 = vmatmul.mubr.bf16.gmra.mrb[0].mxu0 %v1453
      %v2866 = vpop.f32.mrb[0].mxu0
      %v2867 = vadd.f32 0.0, %v2866
      %v2868 = vpop.f32.mrb[0].mxu0
      %v2869 = vpop.f32.mrb[0].mxu0
      %v2870 = vadd.f32 0.0, %v2869
      %v2871 = vpop.f32.mrb[0].mxu0
      %2872 = vmatprep.mubr.bf16.mxu0 0
      %2873 = vmatmul.mubr.bf16.gmra.mrb[0].mxu0 %v1456
      %v2874 = vpop.f32.mrb[0].mxu0
      %v2875 = vadd.f32 0.0, %v2874
      %v2876 = vpop.f32.mrb[0].mxu0
      %v2877 = vpop.f32.mrb[0].mxu0
      %v2878 = vadd.f32 0.0, %v2877
      %v2879 = vpop.f32.mrb[0].mxu0
      %2880 = vmatprep.mubr.bf16.mxu0 0
      %2881 = vmatmul.mubr.bf16.gmra.mrb[0].mxu0 %v1459
      %v2882 = vpop.f32.mrb[0].mxu0
      %v2883 = vadd.f32 0.0, %v2882
      %v2884 = vpop.f32.mrb[0].mxu0
      %v2885 = vpop.f32.mrb[0].mxu0
      %v2886 = vadd.f32 0.0, %v2885
      %v2887 = vpop.f32.mrb[0].mxu0
      %2888 = vmatprep.mubr.bf16.mxu0 0
      %2889 = vmatmul.mubr.bf16.gmra.mrb[0].mxu0 %v2099
      %v2890 = vpop.f32.mrb[0].mxu0
      %v2891 = vadd.f32 0.0, %v2890
      %v2892 = vpop.f32.mrb[0].mxu0
      %v2893 = vpop.f32.mrb[0].mxu0
      %v2894 = vadd.f32 0.0, %v2893
      %v2895 = vpop.f32.mrb[0].mxu0
      %2896 = vmatprep.mubr.bf16.mxu0 0
      %2897 = vmatmul.mubr.bf16.gmra.mrb[0].mxu0 %v2739
      %v2898 = vpop.f32.mrb[0].mxu0
      %v2899 = vadd.f32 0.0, %v2898
      %v2900 = vpop.f32.mrb[0].mxu0
      %v2901 = vpop.f32.mrb[0].mxu0
      %v2902 = vadd.f32 0.0, %v2901
      %v2903 = vpop.f32.mrb[0].mxu0
      %2904 = vdwg.mxu0
      %v2905 = vadd.f32 %v2695, %v2779
      %v2906 = vadd.f32 %v2696, %v2782
      %v2907 = vadd.f32 %v2697, %v2787
      %v2908 = vadd.f32 %v2698, %v2790
      %v2909 = vadd.f32 %v2699, %v2795
      %v2910 = vadd.f32 %v2700, %v2798
      %v2911 = vadd.f32 %v2701, %v2803
      %v2912 = vadd.f32 %v2702, %v2806
      %v2913 = vadd.f32 %v2703, %v2811
      %v2914 = vadd.f32 %v2704, %v2814
      %v2915 = vadd.f32 %v2705, %v2819
      %v2916 = vadd.f32 %v2706, %v2822
      %v2917 = vadd.f32 %v2707, %v2827
      %v2918 = vadd.f32 %v2708, %v2830
      %v2919 = vadd.f32 %v2709, %v2835
      %v2920 = vadd.f32 %v2710, %v2838
      %v2921 = vadd.f32 %v2711, %v2843
      %v2922 = vadd.f32 %v2712, %v2846
      %v2923 = vadd.f32 %v2713, %v2851
      %v2924 = vadd.f32 %v2714, %v2854
      %v2925 = vadd.f32 %v2715, %v2859
      %v2926 = vadd.f32 %v2716, %v2862
      %v2927 = vadd.f32 %v2717, %v2867
      %v2928 = vadd.f32 %v2718, %v2870
      %v2929 = vadd.f32 %v2719, %v2875
      %v2930 = vadd.f32 %v2720, %v2878
      %v2931 = vadd.f32 %v2721, %v2883
      %v2932 = vadd.f32 %v2722, %v2886
      %v2933 = vadd.f32 %v2723, %v2891
      %v2934 = vadd.f32 %v2724, %v2894
      %v2935 = vadd.f32 %v2725, %v2899
      %v2936 = vadd.f32 %v2726, %v2902
      %2937 = vst [vmem:[%s220] sm:$0xff] %v2905
      %2938 = vst [vmem:[%s220 + $0x8] sm:$0xff] %v2906
      %2939 = vst [vmem:[%s220 + $0x10] sm:$0xff] %v2907
      %2940 = vst [vmem:[%s220 + $0x18] sm:$0xff] %v2908
      %2941 = vst [vmem:[%s220 + $0x20] sm:$0xff] %v2909
      %2942 = vst [vmem:[%s220 + $0x28] sm:$0xff] %v2910
      %2943 = vst [vmem:[%s220 + $0x30] sm:$0xff] %v2911
      %2944 = vst [vmem:[%s220 + $0x38] sm:$0xff] %v2912
      %2945 = vst [vmem:[%s220 + $0x40] sm:$0xff] %v2913
      %2946 = vst [vmem:[%s220 + $0x48] sm:$0xff] %v2914
      %2947 = vst [vmem:[%s220 + $0x50] sm:$0xff] %v2915
      %2948 = vst [vmem:[%s220 + $0x58] sm:$0xff] %v2916
      %2949 = vst [vmem:[%s220 + $0x60] sm:$0xff] %v2917
      %2950 = vst [vmem:[%s220 + $0x68] sm:$0xff] %v2918
      %2951 = vst [vmem:[%s220 + $0x70] sm:$0xff] %v2919
      %2952 = vst [vmem:[%s220 + $0x78] sm:$0xff] %v2920
      %2953 = vst [vmem:[%s220 + $0x80] sm:$0xff] %v2921
      %2954 = vst [vmem:[%s220 + $0x88] sm:$0xff] %v2922
      %2955 = vst [vmem:[%s220 + $0x90] sm:$0xff] %v2923
      %2956 = vst [vmem:[%s220 + $0x98] sm:$0xff] %v2924
      %2957 = vst [vmem:[%s220 + $0xa0] sm:$0xff] %v2925
      %2958 = vst [vmem:[%s220 + $0xa8] sm:$0xff] %v2926
      %2959 = vst [vmem:[%s220 + $0xb0] sm:$0xff] %v2927
      %2960 = vst [vmem:[%s220 + $0xb8] sm:$0xff] %v2928
      %2961 = vst [vmem:[%s220 + $0xc0] sm:$0xff] %v2929
      %2962 = vst [vmem:[%s220 + $0xc8] sm:$0xff] %v2930
      %2963 = vst [vmem:[%s220 + $0xd0] sm:$0xff] %v2931
      %2964 = vst [vmem:[%s220 + $0xd8] sm:$0xff] %v2932
      %2965 = vst [vmem:[%s220 + $0xe0] sm:$0xff] %v2933
      %2966 = vst [vmem:[%s220 + $0xe8] sm:$0xff] %v2934
      %2967 = vst [vmem:[%s220 + $0xf0] sm:$0xff] %v2935
      %2968 = vst [vmem:[%s220 + $0xf8] sm:$0xff] %v2936
      %v2969 = vadd.f32 %v2905, %v2906
      %v2970 = vadd.f32 %v2969, %v2907
      %v2971 = vadd.f32 %v2970, %v2908
      %v2972 = vadd.f32 %v2971, %v2909
      %v2973 = vadd.f32 %v2972, %v2910
      %v2974 = vadd.f32 %v2973, %v2911
      %v2975 = vadd.f32 %v2974, %v2912
      %v2976 = vadd.f32 %v2975, %v2913
      %v2977 = vadd.f32 %v2976, %v2914
      %v2978 = vadd.f32 %v2977, %v2915
      %v2979 = vadd.f32 %v2978, %v2916
      %v2980 = vadd.f32 %v2979, %v2917
      %v2981 = vadd.f32 %v2980, %v2918
      %v2982 = vadd.f32 %v2981, %v2919
      %v2983 = vadd.f32 %v2982, %v2920
      %v2984 = vadd.f32 %v2983, %v2921
      %v2985 = vadd.f32 %v2984, %v2922
      %v2986 = vadd.f32 %v2985, %v2923
      %v2987 = vadd.f32 %v2986, %v2924
      %v2988 = vadd.f32 %v2987, %v2925
      %v2989 = vadd.f32 %v2988, %v2926
      %v2990 = vadd.f32 %v2989, %v2927
      %v2991 = vadd.f32 %v2990, %v2928
      %v2992 = vadd.f32 %v2991, %v2929
      %v2993 = vadd.f32 %v2992, %v2930
      %v2994 = vadd.f32 %v2993, %v2931
      %v2995 = vadd.f32 %v2994, %v2932
      %v2996 = vadd.f32 %v2995, %v2933
      %v2997 = vadd.f32 %v2996, %v2934
      %v2998 = vadd.f32 %v2997, %v2935
      %v2999 = vadd.f32 %v2998, %v2936
      %v3000 = vrot.slane %v2999, 4
      %v3001 = vadd.f32 %v2999, %v3000
      %v3002 = vrot.slane %v3001, 2
      %v3003 = vadd.f32 %v3001, %v3002
      %v3004 = vrot.slane %v3003, 1
      %v3005 = vadd.f32 %v3003, %v3004
      %v3006 = vmul.f32 %v2905, %v2905
      %v3007 = vmul.f32 %v2906, %v2906
      %v3008 = vmul.f32 %v2907, %v2907
      %v3009 = vmul.f32 %v2908, %v2908
      %v3010 = vmul.f32 %v2909, %v2909
      %v3011 = vmul.f32 %v2910, %v2910
      %v3012 = vmul.f32 %v2911, %v2911
      %v3013 = vmul.f32 %v2912, %v2912
      %v3014 = vmul.f32 %v2913, %v2913
      %v3015 = vmul.f32 %v2914, %v2914
      %v3016 = vmul.f32 %v2915, %v2915
      %v3017 = vmul.f32 %v2916, %v2916
      %v3018 = vmul.f32 %v2917, %v2917
      %v3019 = vmul.f32 %v2918, %v2918
      %v3020 = vmul.f32 %v2919, %v2919
      %v3021 = vmul.f32 %v2920, %v2920
      %v3022 = vmul.f32 %v2921, %v2921
      %v3023 = vmul.f32 %v2922, %v2922
      %v3024 = vmul.f32 %v2923, %v2923
      %v3025 = vmul.f32 %v2924, %v2924
      %v3026 = vmul.f32 %v2925, %v2925
      %v3027 = vmul.f32 %v2926, %v2926
      %v3028 = vmul.f32 %v2927, %v2927
      %v3029 = vmul.f32 %v2928, %v2928
      %v3030 = vmul.f32 %v2929, %v2929
      %v3031 = vmul.f32 %v2930, %v2930
      %v3032 = vmul.f32 %v2931, %v2931
      %v3033 = vmul.f32 %v2932, %v2932
      %v3034 = vmul.f32 %v2933, %v2933
      %v3035 = vmul.f32 %v2934, %v2934
      %v3036 = vmul.f32 %v2935, %v2935
      %v3037 = vmul.f32 %v2936, %v2936
      %v3038 = vadd.f32 %v3006, %v3007
      %v3039 = vadd.f32 %v3038, %v3008
      %v3040 = vadd.f32 %v3039, %v3009
      %v3041 = vadd.f32 %v3040, %v3010
      %v3042 = vadd.f32 %v3041, %v3011
      %v3043 = vadd.f32 %v3042, %v3012
      %v3044 = vadd.f32 %v3043, %v3013
      %v3045 = vadd.f32 %v3044, %v3014
      %v3046 = vadd.f32 %v3045, %v3015
      %v3047 = vadd.f32 %v3046, %v3016
      %v3048 = vadd.f32 %v3047, %v3017
      %v3049 = vadd.f32 %v3048, %v3018
      %v3050 = vadd.f32 %v3049, %v3019
      %v3051 = vadd.f32 %v3050, %v3020
      %v3052 = vadd.f32 %v3051, %v3021
      %v3053 = vadd.f32 %v3052, %v3022
      %v3054 = vadd.f32 %v3053, %v3023
      %v3055 = vadd.f32 %v3054, %v3024
      %v3056 = vadd.f32 %v3055, %v3025
      %v3057 = vadd.f32 %v3056, %v3026
      %v3058 = vadd.f32 %v3057, %v3027
      %v3059 = vadd.f32 %v3058, %v3028
      %v3060 = vadd.f32 %v3059, %v3029
      %v3061 = vadd.f32 %v3060, %v3030
      %v3062 = vadd.f32 %v3061, %v3031
      %v3063 = vadd.f32 %v3062, %v3032
      %v3064 = vadd.f32 %v3063, %v3033
      %v3065 = vadd.f32 %v3064, %v3034
      %v3066 = vadd.f32 %v3065, %v3035
      %v3067 = vadd.f32 %v3066, %v3036
      %v3068 = vadd.f32 %v3067, %v3037
      %v3069 = vrot.slane %v3068, 4
      %v3070 = vadd.f32 %v3068, %v3069
      %v3071 = vrot.slane %v3070, 2
      %v3072 = vadd.f32 %v3070, %v3071
      %v3073 = vrot.slane %v3072, 1
      %v3074 = vadd.f32 %v3072, %v3073
      %vm3075 = vcmask 1040384
      %v3076 = vsel %vm3075, %v3005, %v3074
      %3077 = vst [vmem:[%s228] sm:$0x3] %v3076
      %s3078 = smul.u32 16, %s20
      %p3079 = scmp.lt.s32.totalorder %s19, 1
      %s3080 = scalar_select %p3079, %s19, 1
      %p3081 = scmp.lt.s32.totalorder %s3078, 15
      %s3082 = scalar_select %p3081, %s3078, 15
      %s3083 = smul.addr %s3082, 2
      %s3084 = smul.addr %s3080, 32
      %s3085 = sadd.s32 %s3083, %s3084
      %s3086 = smul.addr %s3085, 8
      %s3087 = scalar_lea.vmem %s2, %s3086
      %p3088 = scmp.lt.s32.totalorder %s19, 1
      %s3089 = scalar_select %p3088, %s19, 1
      %p3090 = scmp.lt.s32.totalorder %s20, 0
      %s3091 = scalar_select %p3090, %s20, 0
      %s3092 = sadd.s32 %s3091, %s3089
      %s3093 = smul.addr %s3092, 2
      %s3094 = scalar_lea.vmem %s3, %s3093
      // Predicated region
      $region29: #{conv_batch_norm.2} parent=27 // pred_check
        %p3095 = pneg %p96
      $region30: #{conv_batch_norm.2} parent=27 // pred_check_branch
        %3097 = sbr.rel (%p3095) target = $region32
      $region31: #{conv_batch_norm.2} parent=27 // pred_region
        %s3098 = smul.u32 16, %s20
      $region32: #{conv_batch_norm.2} parent=27 // pred_fallthru
        _
      // Predicated region
      $region33: #{conv_batch_norm.2} parent=27 // pred_check
        %p3099 = pneg %p124
      $region34: #{conv_batch_norm.2} parent=27 // pred_check_branch
        %3101 = sbr.rel (%p3099) target = $region36
      $region35: #{conv_batch_norm.2} parent=27 // pred_region
        _
      $region36: #{conv_batch_norm.2} parent=27 // pred_fallthru
        _
    $region28: #{conv_batch_norm.2} parent=5 // pred_fallthru
      _
    %p3102 = scmp.le.s32.totalorder 2, %s10
    // Predicated region
    $region37: #{conv_batch_norm.2} parent=5 // pred_check
      %p3103 = pneg %p3102
    $region38: #{conv_batch_norm.2} parent=5 // pred_check_branch
      %3105 = sbr.rel (%p3103) target = $region40
    $region39: #{conv_batch_norm.2} parent=5 // pred_region
      %s3106 = ssub.s32 %s10, 2
      // Predicated region
      $region41: #{conv_batch_norm.2} parent=39 // pred_check
        %p3107 = pneg %p102
      $region42: #{conv_batch_norm.2} parent=39 // pred_check_branch
        %3109 = sbr.rel (%p3107) target = $region44
      $region43: #{conv_batch_norm.2} parent=39 // pred_region
        %s3110 = smul.u32 16, %s22
        %p3111 = scmp.lt.s32.totalorder %s21, 1
        %s3112 = scalar_select %p3111, %s21, 1
        %p3113 = scmp.lt.s32.totalorder %s3110, 15
        %s3114 = scalar_select %p3113, %s3110, 15
        %s3115 = smul.addr %s3114, 2
        %s3116 = smul.addr %s3112, 32
        %s3117 = sadd.s32 %s3115, %s3116
        %s3118 = smul.addr %s3117, 8
        %s3119 = scalar_lea.vmem %s2, %s3118
      $region44: #{conv_batch_norm.2} parent=39 // pred_fallthru
        _
      // Predicated region
      $region45: #{conv_batch_norm.2} parent=39 // pred_check
        %p3120 = pneg %p130
      $region46: #{conv_batch_norm.2} parent=39 // pred_check_branch
        %3122 = sbr.rel (%p3120) target = $region48
      $region47: #{conv_batch_norm.2} parent=39 // pred_region
        %p3123 = scmp.lt.s32.totalorder %s21, 1
        %s3124 = scalar_select %p3123, %s21, 1
        %p3125 = scmp.lt.s32.totalorder %s22, 0
        %s3126 = scalar_select %p3125, %s22, 0
        %s3127 = sadd.s32 %s3126, %s3124
        %s3128 = smul.addr %s3127, 2
        %s3129 = scalar_lea.vmem %s3, %s3128
      $region48: #{conv_batch_norm.2} parent=39 // pred_fallthru
        _
    $region40: #{conv_batch_norm.2} parent=5 // pred_fallthru
      _
  $region6: #{conv_batch_norm.2} parent=0 // loop_footer
    %s14 = sadd.s32 1, %s10
  $region7: #{conv_batch_norm.2} parent=0 // loop_footer_branch
    %9 = sbr.rel target = $region3
  $region8: #{conv_batch_norm.2} parent=0 // loop_exit
    _

</llo_original>
